<compile_context>
chip_gen: v5e
topology: v5e:2x2
jax: 0.10.0
libtpu: 0.0.40
codegen_flags: <defaults>
</compile_context>

<pallas_src>
import math
import numpy as np
import jax
import jax.numpy as jnp
from jax import lax
from jax.experimental import pallas as pl
from jax.experimental.pallas import tpu as pltpu

NUM_KERNELS = 2
LATENT_REAL = 100          # latent_dims=[100, 100] in the PyTorch module
LATENT_PAD = 128           # padded to a full lane group
_EPS = 1e-24
_NEG_BIG = -1e30


def _adaptive_avg_pool_matrix(H, W, Hp, Wp, Np):
    """(H*W, Np) matrix reproducing nn.AdaptiveAvgPool2d((Hp, Wp)) as x @ P.

    Columns >= Hp*Wp are zero padding (lane-dense output width Np)."""
    P = np.zeros((Hp * Wp, H * W), dtype=np.float32)
    for oh in range(Hp):
        h0 = (oh * H) // Hp
        h1 = -(-((oh + 1) * H) // Hp)
        for ow in range(Wp):
            w0 = (ow * W) // Wp
            w1 = -(-((ow + 1) * W) // Wp)
            area = float((h1 - h0) * (w1 - w0))
            for ih in range(h0, h1):
                for iw in range(w0, w1):
                    P[oh * Wp + ow, ih * W + iw] = 1.0 / area
    PT = np.zeros((H * W, Np), dtype=np.float32)
    PT[:, : Hp * Wp] = P.T
    return PT


def _channel_attention_kernel(x_ref, poolT_ref, wv_ref, bv_ref, wab_ref, bab_ref,
                              wu_ref, subu_ref, o_ref):
    f32 = jnp.float32
    D = LATENT_PAD
    K = NUM_KERNELS
    G, C, HW = x_ref.shape                                    # batch block, channels, H*W

    # Stack the batch block along M so every C-major matmul sees G*C rows.
    x = x_ref[...].reshape(G * C, HW)                         # layout-free (C % 8 == 0)

    # AdaptiveAvgPool2d as one MXU matmul with the pooling matrix (lanes padded to Np).
    feat = jnp.dot(x, poolT_ref[...], preferred_element_type=f32)          # (G*C, Np)

    # Down-projection (only the v2l branch is still needed explicitly: it feeds latT).
    v2l = jnp.dot(feat, wv_ref[...], preferred_element_type=f32) + bv_ref[...]   # (G*C, S)

    # psi projections for BOTH directions and BOTH kernels, with the down-projection
    # and all BN affines folded in on the host -> a single fused matmul.
    ab = jnp.dot(feat, wab_ref[...], preferred_element_type=f32) + bab_ref[...]
    ab = jnp.maximum(ab, 0.0)                                               # (G*C, 2*K*D)

    # Per-128-lane-block L2 normalisation over the latent axis (padded cols are exactly
    # zero by construction, so full-block sums equal sums over the 100 real dims).
    blocks = []
    for j in range(2 * K):
        blk = ab[:, j * D:(j + 1) * D]
        ss = jnp.sum(blk * blk, axis=-1, keepdims=True)
        blocks.append(blk * lax.rsqrt(ss + _EPS))
    abn = jnp.concatenate(blocks, axis=-1)                                  # (G*C, 2*K*D)
    a_n = abn[:, :K * D]
    b_n = abn[:, K * D:]

    lat_real_row = lax.broadcasted_iota(jnp.int32, (D, D), 0) < LATENT_REAL
    lat_real_col = lax.broadcasted_iota(jnp.int32, (D, D), 1) < LATENT_REAL
    subu = subu_ref[...]                                                    # (2, Np)

    cn = (((0,), (0,)), ((), ()))   # dot_general: contract dim 0 of both operands

    # Latent-graph steps are per sample: short unrolled loop over the batch block.
    for g in range(G):
        r0 = g * C
        v2l_g = v2l[r0:r0 + C]                                              # (C, S)
        a_g = a_n[r0:r0 + C]                                                # (C, K*D)
        b_g = b_n[r0:r0 + C]                                                # (C, K*D)

        # Step 1 (both kernels fused): visible (channels) -> latent, kept latent-on-lanes.
        # No explicit transpose: contract over the channel axis directly.
        latT = lax.dot_general(v2l_g, a_g, cn, preferred_element_type=f32)  # (S, K*D)
        ssq = jnp.sum(latT * latT, axis=0, keepdims=True)
        latn = latT * lax.rsqrt(ssq + _EPS)                                 # (S, K*D)

        z_blocks = []
        for k in range(K):
            sl = slice(k * D, (k + 1) * D)
            latT_k = latT[:, sl]                                            # (S, D)
            latn_k = latn[:, sl]

            # Step 2: latent affinity + softmax propagation. aff is symmetric, so
            # row_softmax(aff) @ latent == latT @ col_softmax(aff) (stays lane-dense).
            aff = lax.dot_general(latn_k, latn_k, cn, preferred_element_type=f32)  # (D, D)
            aff = jnp.where(lat_real_row, aff, _NEG_BIG)        # mask padded latent nodes
            m = jnp.max(aff, axis=0, keepdims=True)
            e = jnp.exp(aff - m)
            w = e * pl.reciprocal(jnp.sum(e, axis=0, keepdims=True), approx=True)
            w = jnp.where(lat_real_col, w, 0.0)                 # zero padded latent columns
            latp = jnp.dot(latT_k, w, preferred_element_type=f32)           # (S, D)

            # Step 3a: latent -> pooled-spatial via per-kernel up weights (no transpose).
            z_blocks.append(lax.dot_general(latp, wu_ref[k], cn,
                                            preferred_element_type=f32))    # (D, Np)

        # Step 3b, fused over kernels: up = sum_k b_n_k @ (latent_k @ wu_k) = b_g @ Z.
        z = jnp.concatenate(z_blocks, axis=0)                                # (K*D, Np)
        up = jnp.dot(b_g, z, preferred_element_type=f32)                     # (C, Np)

        # residual; gamma already folded into subu[0] (scale) / subu[1] (bias) on host.
        o_ref[g] = feat[r0:r0 + C] + up * subu[0:1] + subu[1:2]


def init_params(key, dim, Hp, Wp):
    """Logical (unpadded) parameters, mirroring the reconstructed LatentGNNV1_ch."""
    N = Hp * Wp
    S = int(Hp / 2 * math.ceil(Wp / 2))      # in_spatial, as in ChannelAttention_2
    D, K = LATENT_REAL, NUM_KERNELS
    ks = jax.random.split(key, 15)

    def w(k, shape, fan_in):
        return (1.0 / math.sqrt(fan_in)) * jax.random.normal(k, shape, jnp.float32)

    def bn_scale(k, shape):
        return 1.0 + 0.1 * jax.random.normal(k, shape, jnp.float32)

    def bn_bias(k, shape):
        return 0.1 * jax.random.normal(k, shape, jnp.float32)

    return {
        "wd_v2l": w(ks[0], (N, S), N), "sd_v2l": bn_scale(ks[1], (1, S)), "bd_v2l": bn_bias(ks[2], (1, S)),
        "wd_l2v": w(ks[3], (N, S), N), "sd_l2v": bn_scale(ks[4], (1, S)), "bd_l2v": bn_bias(ks[5], (1, S)),
        "wp_v2l": w(ks[6], (K, S, D), S), "sp_v2l": bn_scale(ks[7], (K, 1, D)), "bp_v2l": bn_bias(ks[8], (K, 1, D)),
        "wp_l2v": w(ks[9], (K, S, D), S), "sp_l2v": bn_scale(ks[10], (K, 1, D)), "bp_l2v": bn_bias(ks[11], (K, 1, D)),
        "wu": w(ks[12], (K, S, N), K * S), "su": bn_scale(ks[13], (1, N)), "bu": bn_bias(ks[14], (1, N)),
        # PyTorch inits gamma to 0; use 0.5 so the GNN branch contributes to the output.
        "gamma": jnp.full((1, 1), 0.5, jnp.float32),
    }


def _pad_last_to(a, target):
    pad = target - a.shape[-1]
    if pad <= 0:
        return a
    return jnp.pad(a, [(0, 0)] * (a.ndim - 1) + [(0, pad)])


def pack_params(params, H, W, Hp, Wp):
    """Host-side folding + padding.

    - latent dim padded 100 -> 128 (padded cols are exactly zero everywhere)
    - pooled-spatial dim N padded to a multiple of 128 (lane-dense feat / up / output)
    - down-projection conv + BN folded into the psi weights (a and b branches fused
      into one (Np, 2*K*128) matrix), gamma folded into the up scale/bias.
    """
    N = Hp * Wp
    Np = ((N + 127) // 128) * 128
    D, K = LATENT_PAD, NUM_KERNELS

    poolT = jnp.asarray(_adaptive_avg_pool_matrix(H, W, Hp, Wp, Np), jnp.float32)  # (HW, Np)

    wdv_s = params["wd_v2l"] * params["sd_v2l"]            # (N, S) scale folded into cols
    wdl_s = params["wd_l2v"] * params["sd_l2v"]

    def fold(w_down_scaled, b_down, wp, sp, bp):
        Wk, bk = [], []
        for k in range(K):
            wpk = _pad_last_to(wp[k], D)                   # (S, D)
            spk = _pad_last_to(sp[k], D)                   # (1, D), padded cols 0
            bpk = _pad_last_to(bp[k], D)                   # (1, D), padded cols 0
            Wk.append((w_down_scaled @ wpk) * spk)         # (N, D)
            bk.append((b_down @ wpk) * spk + bpk)          # (1, D)
        Wf = jnp.concatenate(Wk, axis=-1)                  # (N, K*D)
        bf = jnp.concatenate(bk, axis=-1)                  # (1, K*D)
        Wf = jnp.pad(Wf, ((0, Np - N), (0, 0)))            # (Np, K*D)
        return Wf, bf

    Wa, ba = fold(wdv_s, params["bd_v2l"], params["wp_v2l"], params["sp_v2l"], params["bp_v2l"])
    Wb, bb = fold(wdl_s, params["bd_l2v"], params["wp_l2v"], params["sp_l2v"], params["bp_l2v"])

    wab = jnp.concatenate([Wa, Wb], axis=-1)               # (Np, 2*K*D)
    bab = jnp.concatenate([ba, bb], axis=-1)               # (1, 2*K*D)

    wv = jnp.pad(wdv_s, ((0, Np - N), (0, 0)))             # (Np, S)
    bv = params["bd_v2l"]                                  # (1, S)

    wu = _pad_last_to(params["wu"], Np)                    # (K, S, Np)

    gamma = params["gamma"][0, 0]
    su_g = gamma * _pad_last_to(params["su"], Np)          # (1, Np)
    bu_g = gamma * _pad_last_to(params["bu"], Np)          # (1, Np)
    subu = jnp.concatenate([su_g, bu_g], axis=0)           # (2, Np)

    return dict(poolT=poolT, wv=wv, bv=bv, wab=wab, bab=bab, wu=wu, subu=subu)


def _pick_batch_block(B, C, target_rows=256, min_grid=2):
    """Largest divisor G of B with G*C <= target_rows, keeping >= min_grid grid steps
    when possible (dual TensorCores on v7x)."""
    candidates = [g for g in range(1, B + 1) if B % g == 0 and g * C <= target_rows]
    if not candidates:
        return 1
    good = [g for g in candidates if B // g >= min_grid]
    return max(good) if good else max(candidates)


def channel_attention_2(x, packed, Hp, Wp, batch_block=None):
    B, C, H, W = x.shape
    HW = H * W
    N = Hp * Wp
    Np = packed["poolT"].shape[1]

    G = batch_block if batch_block is not None else _pick_batch_block(B, C)
    assert B % G == 0

    x_flat = x.reshape(B, C, HW).astype(jnp.float32)

    weights = [packed[k] for k in ("poolT", "wv", "bv", "wab", "bab", "wu", "subu")]

    def full_spec(a):
        nd = a.ndim
        return pl.BlockSpec(a.shape, lambda b, nd=nd: (0,) * nd)   # grid-invariant

    in_specs = [pl.BlockSpec((G, C, HW), lambda b: (b, 0, 0))]
    in_specs += [full_spec(a) for a in weights]

    out = pl.pallas_call(
        _channel_attention_kernel,
        out_shape=jax.ShapeDtypeStruct((B, C, Np), jnp.float32),
        grid=(B // G,),
        in_specs=in_specs,
        out_specs=pl.BlockSpec((G, C, Np), lambda b: (b, 0, 0)),
        compiler_params=pltpu.CompilerParams(dimension_semantics=("parallel",)),
    )(x_flat, *weights)

    # drop the zero lane-padding and restore NCHW of the pooled map
    return out[:, :, :N].reshape(B, C, Hp, Wp)


if __name__ == "__main__":
    B, C, H, W = 4, 64, 16, 16
    Hp, Wp = 8, 8                                   # AdaptiveAvgPool2d output size

    key = jax.random.PRNGKey(0)
    kx, kp = jax.random.split(key)
    x = jax.random.normal(kx, (B, C, H, W), jnp.float32)
    params = init_params(kp, dim=C, Hp=Hp, Wp=Wp)
    packed = pack_params(params, H, W, Hp, Wp)

    out = channel_attention_2(x, packed, Hp, Wp)
    out = jax.block_until_ready(out)
    assert out.shape == (B, C, Hp, Wp), out.shape
    assert bool(jnp.all(jnp.isfinite(out)))
    print("KERNEL_OK")
</pallas_src>

<mosaic_0001>
module attributes {stable_mosaic.version = 11 : i64} {
  func.func @_channel_attention_kernel(%arg0: i32, %arg1: memref<2x64x256xf32, #tpu.memory_space<vmem>>, %arg2: memref<256x128xf32, #tpu.memory_space<vmem>>, %arg3: memref<128x16xf32, #tpu.memory_space<vmem>>, %arg4: memref<1x16xf32, #tpu.memory_space<vmem>>, %arg5: memref<128x512xf32, #tpu.memory_space<vmem>>, %arg6: memref<1x512xf32, #tpu.memory_space<vmem>>, %arg7: memref<2x16x128xf32, #tpu.memory_space<vmem>>, %arg8: memref<2x128xf32, #tpu.memory_space<vmem>>, %arg9: memref<2x64x128xf32, #tpu.memory_space<vmem>>) attributes {dimension_semantics = [#tpu.dimension_semantics<parallel>], iteration_bounds = array<i64: 2>, scalar_prefetch = 0 : i64, scratch_operands = 0 : i64, tpu.core_type = #tpu.core_type<tc>, window_params = [{transform_indices = @transform_0, window_bounds = array<i64: 2, 64, 256>}, {pipeline_mode = #tpu.pipeline_mode<synchronous>, transform_indices = @transform_1, window_bounds = array<i64: 256, 128>}, {pipeline_mode = #tpu.pipeline_mode<synchronous>, transform_indices = @transform_2, window_bounds = array<i64: 128, 16>}, {pipeline_mode = #tpu.pipeline_mode<synchronous>, transform_indices = @transform_3, window_bounds = array<i64: 1, 16>}, {pipeline_mode = #tpu.pipeline_mode<synchronous>, transform_indices = @transform_4, window_bounds = array<i64: 128, 512>}, {pipeline_mode = #tpu.pipeline_mode<synchronous>, transform_indices = @transform_5, window_bounds = array<i64: 1, 512>}, {pipeline_mode = #tpu.pipeline_mode<synchronous>, transform_indices = @transform_6, window_bounds = array<i64: 2, 16, 128>}, {pipeline_mode = #tpu.pipeline_mode<synchronous>, transform_indices = @transform_7, window_bounds = array<i64: 2, 128>}, {transform_indices = @transform_8, window_bounds = array<i64: 2, 64, 128>}]} {
    %c0 = arith.constant 0 : index
    %c0_0 = arith.constant 0 : index
    %c0_1 = arith.constant 0 : index
    %0 = vector.load %arg1[%c0, %c0_0, %c0_1] : memref<2x64x256xf32, #tpu.memory_space<vmem>>, vector<2x64x256xf32>
    %1 = vector.shape_cast %0 : vector<2x64x256xf32> to vector<128x256xf32>
    %c0_2 = arith.constant 0 : index
    %c0_3 = arith.constant 0 : index
    %2 = vector.load %arg2[%c0_2, %c0_3] : memref<256x128xf32, #tpu.memory_space<vmem>>, vector<256x128xf32>
    %cst = arith.constant dense<0.000000e+00> : vector<128x128xf32>
    %3 = tpu.matmul %1, %2, %cst {dimension_numbers = #tpu.dot_dimension_numbers<[1], [0], [0], [1], [0, 0, 1, 1], [], []>} : vector<128x256xf32>, vector<256x128xf32>, vector<128x128xf32> -> vector<128x128xf32>
    %c0_4 = arith.constant 0 : index
    %c0_5 = arith.constant 0 : index
    %4 = vector.load %arg3[%c0_4, %c0_5] : memref<128x16xf32, #tpu.memory_space<vmem>>, vector<128x16xf32>
    %cst_6 = arith.constant dense<0.000000e+00> : vector<128x16xf32>
    %5 = tpu.matmul %3, %4, %cst_6 {dimension_numbers = #tpu.dot_dimension_numbers<[1], [0], [0], [1], [0, 0, 1, 1], [], []>} : vector<128x128xf32>, vector<128x16xf32>, vector<128x16xf32> -> vector<128x16xf32>
    %c0_7 = arith.constant 0 : index
    %c0_8 = arith.constant 0 : index
    %6 = vector.load %arg4[%c0_7, %c0_8] : memref<1x16xf32, #tpu.memory_space<vmem>>, vector<1x16xf32>
    %7 = vector.broadcast %6 : vector<1x16xf32> to vector<128x16xf32>
    %8 = arith.addf %5, %7 : vector<128x16xf32>
    %c0_9 = arith.constant 0 : index
    %c0_10 = arith.constant 0 : index
    %9 = vector.load %arg5[%c0_9, %c0_10] : memref<128x512xf32, #tpu.memory_space<vmem>>, vector<128x512xf32>
    %cst_11 = arith.constant dense<0.000000e+00> : vector<128x512xf32>
    %10 = tpu.matmul %3, %9, %cst_11 {dimension_numbers = #tpu.dot_dimension_numbers<[1], [0], [0], [1], [0, 0, 1, 1], [], []>} : vector<128x128xf32>, vector<128x512xf32>, vector<128x512xf32> -> vector<128x512xf32>
    %c0_12 = arith.constant 0 : index
    %c0_13 = arith.constant 0 : index
    %11 = vector.load %arg6[%c0_12, %c0_13] : memref<1x512xf32, #tpu.memory_space<vmem>>, vector<1x512xf32>
    %12 = vector.broadcast %11 : vector<1x512xf32> to vector<128x512xf32>
    %13 = arith.addf %10, %12 : vector<128x512xf32>
    %cst_14 = arith.constant 0.000000e+00 : f32
    %14 = vector.broadcast %cst_14 : f32 to vector<128x512xf32>
    %15 = arith.maximumf %13, %14 : vector<128x512xf32>
    %16 = vector.extract_strided_slice %15 {offsets = [0, 0], sizes = [128, 128], strides = [1, 1]} : vector<128x512xf32> to vector<128x128xf32>
    %17 = arith.mulf %16, %16 : vector<128x128xf32>
    %cst_15 = arith.constant dense<0.000000e+00> : vector<128xf32>
    %18 = vector.multi_reduction <add>, %17, %cst_15 [1] : vector<128x128xf32> to vector<128xf32>
    %19 = vector.shape_cast %18 : vector<128xf32> to vector<128x1xf32>
    %cst_16 = arith.constant 1.000000e-24 : f32
    %20 = vector.broadcast %cst_16 : f32 to vector<128x1xf32>
    %21 = arith.addf %19, %20 : vector<128x1xf32>
    %22 = math.rsqrt %21 : vector<128x1xf32>
    %23 = vector.broadcast %22 : vector<128x1xf32> to vector<128x128xf32>
    %24 = arith.mulf %16, %23 : vector<128x128xf32>
    %25 = vector.extract_strided_slice %15 {offsets = [0, 128], sizes = [128, 128], strides = [1, 1]} : vector<128x512xf32> to vector<128x128xf32>
    %26 = arith.mulf %25, %25 : vector<128x128xf32>
    %cst_17 = arith.constant dense<0.000000e+00> : vector<128xf32>
    %27 = vector.multi_reduction <add>, %26, %cst_17 [1] : vector<128x128xf32> to vector<128xf32>
    %28 = vector.shape_cast %27 : vector<128xf32> to vector<128x1xf32>
    %cst_18 = arith.constant 1.000000e-24 : f32
    %29 = vector.broadcast %cst_18 : f32 to vector<128x1xf32>
    %30 = arith.addf %28, %29 : vector<128x1xf32>
    %31 = math.rsqrt %30 : vector<128x1xf32>
    %32 = vector.broadcast %31 : vector<128x1xf32> to vector<128x128xf32>
    %33 = arith.mulf %25, %32 : vector<128x128xf32>
    %34 = vector.extract_strided_slice %15 {offsets = [0, 256], sizes = [128, 128], strides = [1, 1]} : vector<128x512xf32> to vector<128x128xf32>
    %35 = arith.mulf %34, %34 : vector<128x128xf32>
    %cst_19 = arith.constant dense<0.000000e+00> : vector<128xf32>
    %36 = vector.multi_reduction <add>, %35, %cst_19 [1] : vector<128x128xf32> to vector<128xf32>
    %37 = vector.shape_cast %36 : vector<128xf32> to vector<128x1xf32>
    %cst_20 = arith.constant 1.000000e-24 : f32
    %38 = vector.broadcast %cst_20 : f32 to vector<128x1xf32>
    %39 = arith.addf %37, %38 : vector<128x1xf32>
    %40 = math.rsqrt %39 : vector<128x1xf32>
    %41 = vector.broadcast %40 : vector<128x1xf32> to vector<128x128xf32>
    %42 = arith.mulf %34, %41 : vector<128x128xf32>
    %43 = vector.extract_strided_slice %15 {offsets = [0, 384], sizes = [128, 128], strides = [1, 1]} : vector<128x512xf32> to vector<128x128xf32>
    %44 = arith.mulf %43, %43 : vector<128x128xf32>
    %cst_21 = arith.constant dense<0.000000e+00> : vector<128xf32>
    %45 = vector.multi_reduction <add>, %44, %cst_21 [1] : vector<128x128xf32> to vector<128xf32>
    %46 = vector.shape_cast %45 : vector<128xf32> to vector<128x1xf32>
    %cst_22 = arith.constant 1.000000e-24 : f32
    %47 = vector.broadcast %cst_22 : f32 to vector<128x1xf32>
    %48 = arith.addf %46, %47 : vector<128x1xf32>
    %49 = math.rsqrt %48 : vector<128x1xf32>
    %50 = vector.broadcast %49 : vector<128x1xf32> to vector<128x128xf32>
    %51 = arith.mulf %43, %50 : vector<128x128xf32>
    %52 = tpu.concatenate %24, %33, %42, %51 in 1 : vector<128x128xf32>, vector<128x128xf32>, vector<128x128xf32>, vector<128x128xf32> -> vector<128x512xf32>
    %53 = vector.extract_strided_slice %52 {offsets = [0, 0], sizes = [128, 256], strides = [1, 1]} : vector<128x512xf32> to vector<128x256xf32>
    %54 = vector.extract_strided_slice %52 {offsets = [0, 256], sizes = [128, 256], strides = [1, 1]} : vector<128x512xf32> to vector<128x256xf32>
    %55 = tpu.iota {dimensions = array<i32: 0>} : vector<128x128xi32>
    %c100_i32 = arith.constant 100 : i32
    %56 = vector.broadcast %c100_i32 : i32 to vector<128x128xi32>
    %57 = arith.cmpi slt, %55, %56 : vector<128x128xi32>
    %58 = tpu.iota {dimensions = array<i32: 1>} : vector<128x128xi32>
    %c100_i32_23 = arith.constant 100 : i32
    %59 = vector.broadcast %c100_i32_23 : i32 to vector<128x128xi32>
    %60 = arith.cmpi slt, %58, %59 : vector<128x128xi32>
    %c0_24 = arith.constant 0 : index
    %c0_25 = arith.constant 0 : index
    %61 = vector.load %arg8[%c0_24, %c0_25] : memref<2x128xf32, #tpu.memory_space<vmem>>, vector<2x128xf32>
    %62 = vector.extract_strided_slice %8 {offsets = [0, 0], sizes = [64, 16], strides = [1, 1]} : vector<128x16xf32> to vector<64x16xf32>
    %63 = vector.extract_strided_slice %53 {offsets = [0, 0], sizes = [64, 256], strides = [1, 1]} : vector<128x256xf32> to vector<64x256xf32>
    %64 = vector.extract_strided_slice %54 {offsets = [0, 0], sizes = [64, 256], strides = [1, 1]} : vector<128x256xf32> to vector<64x256xf32>
    %cst_26 = arith.constant dense<0.000000e+00> : vector<16x256xf32>
    %65 = tpu.matmul %62, %63, %cst_26 {dimension_numbers = #tpu.dot_dimension_numbers<[0], [0], [1], [1], [0, 1, 1, 1], [], []>} : vector<64x16xf32>, vector<64x256xf32>, vector<16x256xf32> -> vector<16x256xf32>
    %66 = arith.mulf %65, %65 : vector<16x256xf32>
    %cst_27 = arith.constant dense<0.000000e+00> : vector<256xf32>
    %67 = vector.multi_reduction <add>, %66, %cst_27 [0] : vector<16x256xf32> to vector<256xf32>
    %68 = vector.shape_cast %67 : vector<256xf32> to vector<1x256xf32>
    %cst_28 = arith.constant 1.000000e-24 : f32
    %69 = vector.broadcast %cst_28 : f32 to vector<1x256xf32>
    %70 = arith.addf %68, %69 : vector<1x256xf32>
    %71 = math.rsqrt %70 : vector<1x256xf32>
    %72 = vector.broadcast %71 : vector<1x256xf32> to vector<16x256xf32>
    %73 = arith.mulf %65, %72 : vector<16x256xf32>
    %74 = vector.extract_strided_slice %65 {offsets = [0, 0], sizes = [16, 128], strides = [1, 1]} : vector<16x256xf32> to vector<16x128xf32>
    %75 = vector.extract_strided_slice %73 {offsets = [0, 0], sizes = [16, 128], strides = [1, 1]} : vector<16x256xf32> to vector<16x128xf32>
    %cst_29 = arith.constant dense<0.000000e+00> : vector<128x128xf32>
    %76 = tpu.matmul %75, %75, %cst_29 {dimension_numbers = #tpu.dot_dimension_numbers<[0], [0], [1], [1], [0, 1, 1, 1], [], []>} : vector<16x128xf32>, vector<16x128xf32>, vector<128x128xf32> -> vector<128x128xf32>
    %cst_30 = arith.constant -1.000000e+30 : f32
    %77 = vector.broadcast %cst_30 : f32 to vector<128x128xf32>
    %78 = arith.select %57, %76, %77 : vector<128x128xi1>, vector<128x128xf32>
    %cst_31 = arith.constant dense<0xFF800000> : vector<128xf32>
    %79 = vector.multi_reduction <maximumf>, %78, %cst_31 [0] : vector<128x128xf32> to vector<128xf32>
    %80 = vector.shape_cast %79 : vector<128xf32> to vector<1x128xf32>
    %81 = vector.broadcast %80 : vector<1x128xf32> to vector<128x128xf32>
    %82 = arith.subf %78, %81 : vector<128x128xf32>
    %83 = math.exp %82 : vector<128x128xf32>
    %cst_32 = arith.constant dense<0.000000e+00> : vector<128xf32>
    %84 = vector.multi_reduction <add>, %83, %cst_32 [0] : vector<128x128xf32> to vector<128xf32>
    %85 = vector.shape_cast %84 : vector<128xf32> to vector<1x128xf32>
    %86 = tpu.reciprocal %85 {approx = true} : vector<1x128xf32> -> vector<1x128xf32>
    %87 = vector.broadcast %86 : vector<1x128xf32> to vector<128x128xf32>
    %88 = arith.mulf %83, %87 : vector<128x128xf32>
    %cst_33 = arith.constant 0.000000e+00 : f32
    %89 = vector.broadcast %cst_33 : f32 to vector<128x128xf32>
    %90 = arith.select %60, %88, %89 : vector<128x128xi1>, vector<128x128xf32>
    %cst_34 = arith.constant dense<0.000000e+00> : vector<16x128xf32>
    %91 = tpu.matmul %74, %90, %cst_34 {dimension_numbers = #tpu.dot_dimension_numbers<[1], [0], [0], [1], [0, 0, 1, 1], [], []>} : vector<16x128xf32>, vector<128x128xf32>, vector<16x128xf32> -> vector<16x128xf32>
    %c0_35 = arith.constant 0 : index
    %c0_36 = arith.constant 0 : index
    %c0_37 = arith.constant 0 : index
    %92 = vector.load %arg7[%c0_35, %c0_36, %c0_37] : memref<2x16x128xf32, #tpu.memory_space<vmem>>, vector<1x16x128xf32>
    %93 = vector.shape_cast %92 : vector<1x16x128xf32> to vector<16x128xf32>
    %cst_38 = arith.constant dense<0.000000e+00> : vector<128x128xf32>
    %94 = tpu.matmul %91, %93, %cst_38 {dimension_numbers = #tpu.dot_dimension_numbers<[0], [0], [1], [1], [0, 1, 1, 1], [], []>} : vector<16x128xf32>, vector<16x128xf32>, vector<128x128xf32> -> vector<128x128xf32>
    %95 = vector.extract_strided_slice %65 {offsets = [0, 128], sizes = [16, 128], strides = [1, 1]} : vector<16x256xf32> to vector<16x128xf32>
    %96 = vector.extract_strided_slice %73 {offsets = [0, 128], sizes = [16, 128], strides = [1, 1]} : vector<16x256xf32> to vector<16x128xf32>
    %cst_39 = arith.constant dense<0.000000e+00> : vector<128x128xf32>
    %97 = tpu.matmul %96, %96, %cst_39 {dimension_numbers = #tpu.dot_dimension_numbers<[0], [0], [1], [1], [0, 1, 1, 1], [], []>} : vector<16x128xf32>, vector<16x128xf32>, vector<128x128xf32> -> vector<128x128xf32>
    %cst_40 = arith.constant -1.000000e+30 : f32
    %98 = vector.broadcast %cst_40 : f32 to vector<128x128xf32>
    %99 = arith.select %57, %97, %98 : vector<128x128xi1>, vector<128x128xf32>
    %cst_41 = arith.constant dense<0xFF800000> : vector<128xf32>
    %100 = vector.multi_reduction <maximumf>, %99, %cst_41 [0] : vector<128x128xf32> to vector<128xf32>
    %101 = vector.shape_cast %100 : vector<128xf32> to vector<1x128xf32>
    %102 = vector.broadcast %101 : vector<1x128xf32> to vector<128x128xf32>
    %103 = arith.subf %99, %102 : vector<128x128xf32>
    %104 = math.exp %103 : vector<128x128xf32>
    %cst_42 = arith.constant dense<0.000000e+00> : vector<128xf32>
    %105 = vector.multi_reduction <add>, %104, %cst_42 [0] : vector<128x128xf32> to vector<128xf32>
    %106 = vector.shape_cast %105 : vector<128xf32> to vector<1x128xf32>
    %107 = tpu.reciprocal %106 {approx = true} : vector<1x128xf32> -> vector<1x128xf32>
    %108 = vector.broadcast %107 : vector<1x128xf32> to vector<128x128xf32>
    %109 = arith.mulf %104, %108 : vector<128x128xf32>
    %cst_43 = arith.constant 0.000000e+00 : f32
    %110 = vector.broadcast %cst_43 : f32 to vector<128x128xf32>
    %111 = arith.select %60, %109, %110 : vector<128x128xi1>, vector<128x128xf32>
    %cst_44 = arith.constant dense<0.000000e+00> : vector<16x128xf32>
    %112 = tpu.matmul %95, %111, %cst_44 {dimension_numbers = #tpu.dot_dimension_numbers<[1], [0], [0], [1], [0, 0, 1, 1], [], []>} : vector<16x128xf32>, vector<128x128xf32>, vector<16x128xf32> -> vector<16x128xf32>
    %c1 = arith.constant 1 : index
    %c0_45 = arith.constant 0 : index
    %c0_46 = arith.constant 0 : index
    %113 = vector.load %arg7[%c1, %c0_45, %c0_46] : memref<2x16x128xf32, #tpu.memory_space<vmem>>, vector<1x16x128xf32>
    %114 = vector.shape_cast %113 : vector<1x16x128xf32> to vector<16x128xf32>
    %cst_47 = arith.constant dense<0.000000e+00> : vector<128x128xf32>
    %115 = tpu.matmul %112, %114, %cst_47 {dimension_numbers = #tpu.dot_dimension_numbers<[0], [0], [1], [1], [0, 1, 1, 1], [], []>} : vector<16x128xf32>, vector<16x128xf32>, vector<128x128xf32> -> vector<128x128xf32>
    %116 = tpu.concatenate %94, %115 in 0 : vector<128x128xf32>, vector<128x128xf32> -> vector<256x128xf32>
    %cst_48 = arith.constant dense<0.000000e+00> : vector<64x128xf32>
    %117 = tpu.matmul %64, %116, %cst_48 {dimension_numbers = #tpu.dot_dimension_numbers<[1], [0], [0], [1], [0, 0, 1, 1], [], []>} : vector<64x256xf32>, vector<256x128xf32>, vector<64x128xf32> -> vector<64x128xf32>
    %118 = vector.extract_strided_slice %3 {offsets = [0, 0], sizes = [64, 128], strides = [1, 1]} : vector<128x128xf32> to vector<64x128xf32>
    %119 = vector.extract_strided_slice %61 {offsets = [0, 0], sizes = [1, 128], strides = [1, 1]} : vector<2x128xf32> to vector<1x128xf32>
    %120 = vector.broadcast %119 : vector<1x128xf32> to vector<64x128xf32>
    %121 = arith.mulf %117, %120 : vector<64x128xf32>
    %122 = arith.addf %118, %121 : vector<64x128xf32>
    %123 = vector.extract_strided_slice %61 {offsets = [1, 0], sizes = [1, 128], strides = [1, 1]} : vector<2x128xf32> to vector<1x128xf32>
    %124 = vector.broadcast %123 : vector<1x128xf32> to vector<64x128xf32>
    %125 = arith.addf %122, %124 : vector<64x128xf32>
    %c0_49 = arith.constant 0 : index
    %c0_50 = arith.constant 0 : index
    %c0_51 = arith.constant 0 : index
    %126 = vector.load %arg9[%c0_49, %c0_50, %c0_51] : memref<2x64x128xf32, #tpu.memory_space<vmem>>, vector<1x64x128xf32>
    %127 = vector.shape_cast %126 : vector<1x64x128xf32> to vector<64x128xf32>
    %128 = vector.shape_cast %125 : vector<64x128xf32> to vector<1x64x128xf32>
    tpu.vector_store %arg9[%c0_49, %c0_50, %c0_51], %128 {strides = array<i32>} : memref<2x64x128xf32, #tpu.memory_space<vmem>>, vector<1x64x128xf32>,
    %129 = vector.extract_strided_slice %8 {offsets = [64, 0], sizes = [64, 16], strides = [1, 1]} : vector<128x16xf32> to vector<64x16xf32>
    %130 = vector.extract_strided_slice %53 {offsets = [64, 0], sizes = [64, 256], strides = [1, 1]} : vector<128x256xf32> to vector<64x256xf32>
    %131 = vector.extract_strided_slice %54 {offsets = [64, 0], sizes = [64, 256], strides = [1, 1]} : vector<128x256xf32> to vector<64x256xf32>
    %cst_52 = arith.constant dense<0.000000e+00> : vector<16x256xf32>
    %132 = tpu.matmul %129, %130, %cst_52 {dimension_numbers = #tpu.dot_dimension_numbers<[0], [0], [1], [1], [0, 1, 1, 1], [], []>} : vector<64x16xf32>, vector<64x256xf32>, vector<16x256xf32> -> vector<16x256xf32>
    %133 = arith.mulf %132, %132 : vector<16x256xf32>
    %cst_53 = arith.constant dense<0.000000e+00> : vector<256xf32>
    %134 = vector.multi_reduction <add>, %133, %cst_53 [0] : vector<16x256xf32> to vector<256xf32>
    %135 = vector.shape_cast %134 : vector<256xf32> to vector<1x256xf32>
    %cst_54 = arith.constant 1.000000e-24 : f32
    %136 = vector.broadcast %cst_54 : f32 to vector<1x256xf32>
    %137 = arith.addf %135, %136 : vector<1x256xf32>
    %138 = math.rsqrt %137 : vector<1x256xf32>
    %139 = vector.broadcast %138 : vector<1x256xf32> to vector<16x256xf32>
    %140 = arith.mulf %132, %139 : vector<16x256xf32>
    %141 = vector.extract_strided_slice %132 {offsets = [0, 0], sizes = [16, 128], strides = [1, 1]} : vector<16x256xf32> to vector<16x128xf32>
    %142 = vector.extract_strided_slice %140 {offsets = [0, 0], sizes = [16, 128], strides = [1, 1]} : vector<16x256xf32> to vector<16x128xf32>
    %cst_55 = arith.constant dense<0.000000e+00> : vector<128x128xf32>
    %143 = tpu.matmul %142, %142, %cst_55 {dimension_numbers = #tpu.dot_dimension_numbers<[0], [0], [1], [1], [0, 1, 1, 1], [], []>} : vector<16x128xf32>, vector<16x128xf32>, vector<128x128xf32> -> vector<128x128xf32>
    %cst_56 = arith.constant -1.000000e+30 : f32
    %144 = vector.broadcast %cst_56 : f32 to vector<128x128xf32>
    %145 = arith.select %57, %143, %144 : vector<128x128xi1>, vector<128x128xf32>
    %cst_57 = arith.constant dense<0xFF800000> : vector<128xf32>
    %146 = vector.multi_reduction <maximumf>, %145, %cst_57 [0] : vector<128x128xf32> to vector<128xf32>
    %147 = vector.shape_cast %146 : vector<128xf32> to vector<1x128xf32>
    %148 = vector.broadcast %147 : vector<1x128xf32> to vector<128x128xf32>
    %149 = arith.subf %145, %148 : vector<128x128xf32>
    %150 = math.exp %149 : vector<128x128xf32>
    %cst_58 = arith.constant dense<0.000000e+00> : vector<128xf32>
    %151 = vector.multi_reduction <add>, %150, %cst_58 [0] : vector<128x128xf32> to vector<128xf32>
    %152 = vector.shape_cast %151 : vector<128xf32> to vector<1x128xf32>
    %153 = tpu.reciprocal %152 {approx = true} : vector<1x128xf32> -> vector<1x128xf32>
    %154 = vector.broadcast %153 : vector<1x128xf32> to vector<128x128xf32>
    %155 = arith.mulf %150, %154 : vector<128x128xf32>
    %cst_59 = arith.constant 0.000000e+00 : f32
    %156 = vector.broadcast %cst_59 : f32 to vector<128x128xf32>
    %157 = arith.select %60, %155, %156 : vector<128x128xi1>, vector<128x128xf32>
    %cst_60 = arith.constant dense<0.000000e+00> : vector<16x128xf32>
    %158 = tpu.matmul %141, %157, %cst_60 {dimension_numbers = #tpu.dot_dimension_numbers<[1], [0], [0], [1], [0, 0, 1, 1], [], []>} : vector<16x128xf32>, vector<128x128xf32>, vector<16x128xf32> -> vector<16x128xf32>
    %c0_61 = arith.constant 0 : index
    %c0_62 = arith.constant 0 : index
    %c0_63 = arith.constant 0 : index
    %159 = vector.load %arg7[%c0_61, %c0_62, %c0_63] : memref<2x16x128xf32, #tpu.memory_space<vmem>>, vector<1x16x128xf32>
    %160 = vector.shape_cast %159 : vector<1x16x128xf32> to vector<16x128xf32>
    %cst_64 = arith.constant dense<0.000000e+00> : vector<128x128xf32>
    %161 = tpu.matmul %158, %160, %cst_64 {dimension_numbers = #tpu.dot_dimension_numbers<[0], [0], [1], [1], [0, 1, 1, 1], [], []>} : vector<16x128xf32>, vector<16x128xf32>, vector<128x128xf32> -> vector<128x128xf32>
    %162 = vector.extract_strided_slice %132 {offsets = [0, 128], sizes = [16, 128], strides = [1, 1]} : vector<16x256xf32> to vector<16x128xf32>
    %163 = vector.extract_strided_slice %140 {offsets = [0, 128], sizes = [16, 128], strides = [1, 1]} : vector<16x256xf32> to vector<16x128xf32>
    %cst_65 = arith.constant dense<0.000000e+00> : vector<128x128xf32>
    %164 = tpu.matmul %163, %163, %cst_65 {dimension_numbers = #tpu.dot_dimension_numbers<[0], [0], [1], [1], [0, 1, 1, 1], [], []>} : vector<16x128xf32>, vector<16x128xf32>, vector<128x128xf32> -> vector<128x128xf32>
    %cst_66 = arith.constant -1.000000e+30 : f32
    %165 = vector.broadcast %cst_66 : f32 to vector<128x128xf32>
    %166 = arith.select %57, %164, %165 : vector<128x128xi1>, vector<128x128xf32>
    %cst_67 = arith.constant dense<0xFF800000> : vector<128xf32>
    %167 = vector.multi_reduction <maximumf>, %166, %cst_67 [0] : vector<128x128xf32> to vector<128xf32>
    %168 = vector.shape_cast %167 : vector<128xf32> to vector<1x128xf32>
    %169 = vector.broadcast %168 : vector<1x128xf32> to vector<128x128xf32>
    %170 = arith.subf %166, %169 : vector<128x128xf32>
    %171 = math.exp %170 : vector<128x128xf32>
    %cst_68 = arith.constant dense<0.000000e+00> : vector<128xf32>
    %172 = vector.multi_reduction <add>, %171, %cst_68 [0] : vector<128x128xf32> to vector<128xf32>
    %173 = vector.shape_cast %172 : vector<128xf32> to vector<1x128xf32>
    %174 = tpu.reciprocal %173 {approx = true} : vector<1x128xf32> -> vector<1x128xf32>
    %175 = vector.broadcast %174 : vector<1x128xf32> to vector<128x128xf32>
    %176 = arith.mulf %171, %175 : vector<128x128xf32>
    %cst_69 = arith.constant 0.000000e+00 : f32
    %177 = vector.broadcast %cst_69 : f32 to vector<128x128xf32>
    %178 = arith.select %60, %176, %177 : vector<128x128xi1>, vector<128x128xf32>
    %cst_70 = arith.constant dense<0.000000e+00> : vector<16x128xf32>
    %179 = tpu.matmul %162, %178, %cst_70 {dimension_numbers = #tpu.dot_dimension_numbers<[1], [0], [0], [1], [0, 0, 1, 1], [], []>} : vector<16x128xf32>, vector<128x128xf32>, vector<16x128xf32> -> vector<16x128xf32>
    %c1_71 = arith.constant 1 : index
    %c0_72 = arith.constant 0 : index
    %c0_73 = arith.constant 0 : index
    %180 = vector.load %arg7[%c1_71, %c0_72, %c0_73] : memref<2x16x128xf32, #tpu.memory_space<vmem>>, vector<1x16x128xf32>
    %181 = vector.shape_cast %180 : vector<1x16x128xf32> to vector<16x128xf32>
    %cst_74 = arith.constant dense<0.000000e+00> : vector<128x128xf32>
    %182 = tpu.matmul %179, %181, %cst_74 {dimension_numbers = #tpu.dot_dimension_numbers<[0], [0], [1], [1], [0, 1, 1, 1], [], []>} : vector<16x128xf32>, vector<16x128xf32>, vector<128x128xf32> -> vector<128x128xf32>
    %183 = tpu.concatenate %161, %182 in 0 : vector<128x128xf32>, vector<128x128xf32> -> vector<256x128xf32>
    %cst_75 = arith.constant dense<0.000000e+00> : vector<64x128xf32>
    %184 = tpu.matmul %131, %183, %cst_75 {dimension_numbers = #tpu.dot_dimension_numbers<[1], [0], [0], [1], [0, 0, 1, 1], [], []>} : vector<64x256xf32>, vector<256x128xf32>, vector<64x128xf32> -> vector<64x128xf32>
    %185 = vector.extract_strided_slice %3 {offsets = [64, 0], sizes = [64, 128], strides = [1, 1]} : vector<128x128xf32> to vector<64x128xf32>
    %186 = vector.extract_strided_slice %61 {offsets = [0, 0], sizes = [1, 128], strides = [1, 1]} : vector<2x128xf32> to vector<1x128xf32>
    %187 = vector.broadcast %186 : vector<1x128xf32> to vector<64x128xf32>
    %188 = arith.mulf %184, %187 : vector<64x128xf32>
    %189 = arith.addf %185, %188 : vector<64x128xf32>
    %190 = vector.extract_strided_slice %61 {offsets = [1, 0], sizes = [1, 128], strides = [1, 1]} : vector<2x128xf32> to vector<1x128xf32>
    %191 = vector.broadcast %190 : vector<1x128xf32> to vector<64x128xf32>
    %192 = arith.addf %189, %191 : vector<64x128xf32>
    %c1_76 = arith.constant 1 : index
    %c0_77 = arith.constant 0 : index
    %c0_78 = arith.constant 0 : index
    %193 = vector.load %arg9[%c1_76, %c0_77, %c0_78] : memref<2x64x128xf32, #tpu.memory_space<vmem>>, vector<1x64x128xf32>
    %194 = vector.shape_cast %193 : vector<1x64x128xf32> to vector<64x128xf32>
    %195 = vector.shape_cast %192 : vector<64x128xf32> to vector<1x64x128xf32>
    tpu.vector_store %arg9[%c1_76, %c0_77, %c0_78], %195 {strides = array<i32>} : memref<2x64x128xf32, #tpu.memory_space<vmem>>, vector<1x64x128xf32>,
    return
  }
  func.func @transform_0(%arg0: i32) -> (i32, i32, i32) {
    %c0_i32 = arith.constant 0 : i32
    %c0_i32_0 = arith.constant 0 : i32
    %c0_i32_1 = arith.constant 0 : i32
    return %arg0, %c0_i32, %c0_i32_0 : i32, i32, i32
  }
  func.func @transform_1(%arg0: i32) -> (i32, i32) {
    %c0_i32 = arith.constant 0 : i32
    %c0_i32_0 = arith.constant 0 : i32
    %c0_i32_1 = arith.constant 0 : i32
    return %c0_i32, %c0_i32_0 : i32, i32
  }
  func.func @transform_2(%arg0: i32) -> (i32, i32) {
    %c0_i32 = arith.constant 0 : i32
    %c0_i32_0 = arith.constant 0 : i32
    %c0_i32_1 = arith.constant 0 : i32
    return %c0_i32, %c0_i32_0 : i32, i32
  }
  func.func @transform_3(%arg0: i32) -> (i32, i32) {
    %c0_i32 = arith.constant 0 : i32
    %c0_i32_0 = arith.constant 0 : i32
    %c0_i32_1 = arith.constant 0 : i32
    return %c0_i32, %c0_i32_0 : i32, i32
  }
  func.func @transform_4(%arg0: i32) -> (i32, i32) {
    %c0_i32 = arith.constant 0 : i32
    %c0_i32_0 = arith.constant 0 : i32
    %c0_i32_1 = arith.constant 0 : i32
    return %c0_i32, %c0_i32_0 : i32, i32
  }
  func.func @transform_5(%arg0: i32) -> (i32, i32) {
    %c0_i32 = arith.constant 0 : i32
    %c0_i32_0 = arith.constant 0 : i32
    %c0_i32_1 = arith.constant 0 : i32
    return %c0_i32, %c0_i32_0 : i32, i32
  }
  func.func @transform_6(%arg0: i32) -> (i32, i32, i32) {
    %c0_i32 = arith.constant 0 : i32
    %c0_i32_0 = arith.constant 0 : i32
    %c0_i32_1 = arith.constant 0 : i32
    %c0_i32_2 = arith.constant 0 : i32
    return %c0_i32, %c0_i32_0, %c0_i32_1 : i32, i32, i32
  }
  func.func @transform_7(%arg0: i32) -> (i32, i32) {
    %c0_i32 = arith.constant 0 : i32
    %c0_i32_0 = arith.constant 0 : i32
    %c0_i32_1 = arith.constant 0 : i32
    return %c0_i32, %c0_i32_0 : i32, i32
  }
  func.func @transform_8(%arg0: i32) -> (i32, i32, i32) {
    %c0_i32 = arith.constant 0 : i32
    %c0_i32_0 = arith.constant 0 : i32
    %c0_i32_1 = arith.constant 0 : i32
    return %arg0, %c0_i32, %c0_i32_0 : i32, i32, i32
  }
}

</mosaic_0001>

<llo_original>
// kernel: tpu_custom_call.1
$region0: #{tpu_custom_call.1}
  #allocation0 [shape = 'u32[]', space=smem, size = 0x4, offset = 0x4, fixed_abs, tag = 'smem constant byte address 0x4 - core index']
  #allocation1 [shape = 'u32[72,128]{1,0:T(1,128)}', space=vmem, size = 0x9000, scoped, tag = 'internal scratch']
  %s0 = inlined_call_operand.hbm [shape: f32[4,64,256], index: 0, kind: input, shape index: {}]
  %s1 = inlined_call_operand.hbm [shape: f32[256,128], index: 1, kind: input, shape index: {}]
  %s2 = inlined_call_operand.vmem [shape: f32[128,16], index: 2, kind: input, shape index: {}]
  %s3 = inlined_call_operand.vmem [shape: f32[1,16], index: 3, kind: input, shape index: {}]
  %s4 = inlined_call_operand.hbm [shape: f32[128,512], index: 4, kind: input, shape index: {}]
  %s5 = inlined_call_operand.vmem [shape: f32[1,512], index: 5, kind: input, shape index: {}]
  %s6 = inlined_call_operand.vmem [shape: f32[2,16,128], index: 6, kind: input, shape index: {}]
  %s7 = inlined_call_operand.vmem [shape: f32[2,128], index: 7, kind: input, shape index: {}]
  %s8 = inlined_call_operand.hbm [shape: f32[4,64,128], index: 8, kind: output, shape index: {}]
  %s9 = sld [smem:[#allocation0]]
  $region77: #{tpu_custom_call.1} parent=0
    _
  %s11 = ssub.s32 1, %s9
  %s12 = scalar_select 0, %s11, %s9
  $region1: #{tpu_custom_call.1} parent=0
    #allocation2 [shape = 'u8[262144]{0}', space=vmem, size = 0x40000, scoped, tag = 'input window, operand 0']
    #allocation3 [shape = 's32[2]{0}', space=sflag, size = 0x8, scoped, tag = 'scoped memory for tpu_custom_call.1']
    #allocation4 [shape = 's32[2]{0}', space=sflag, size = 0x8, scoped, tag = 'scoped memory for tpu_custom_call.1']
    #allocation5 [shape = 'u8[131072]{0}', space=vmem, size = 0x20000, scoped, tag = 'input window, operand 1, single buffered']
    #allocation6 [shape = 's32[1]{0}', space=sflag, size = 0x4, scoped, tag = 'scoped memory for tpu_custom_call.1']
    #allocation7 [shape = 'u8[262144]{0}', space=vmem, size = 0x40000, scoped, tag = 'input window, operand 4, single buffered']
    #allocation8 [shape = 'u8[131072]{0}', space=vmem, size = 0x20000, scoped, tag = 'output window, operand 0']
    %13 = vsyncpa [#allocation3], 0
    %s14 = scalar_lea.sflag [#allocation3], 1
    %15 = vsyncpa %s14, 0
    %16 = vsyncpa [#allocation6], 0
    %17 = vsyncpa [#allocation4], 0
    %s18 = scalar_lea.sflag [#allocation4], 1
    %19 = vsyncpa %s18, 0
    loop: start=0, step=1, limit=4
    $region2: #{tpu_custom_call.1} parent=1 // loop_pre_header
      _
    $region3: #{tpu_custom_call.1} parent=1 // loop_header
      %s21 = sphi 0, %s25
      %p22 = scmp.ge.s32.totalorder %s21, 4
      %s31 = sphi 0, %s33
      %s34 = sphi 0, %s31
      %s35 = sphi 0, %s34
      %s51 = sphi 0, %s35
      %s55 = sphi 0, %s55
      %s57 = sphi 0, %s55
      %s58 = sphi 0, %s57
      %s72 = sphi 0, %s58
      %s76 = sphi 0, %s76
      %s78 = sphi 0, %s76
      %s79 = sphi 0, %s78
      %s93 = sphi 0, %s79
      %s97 = sphi 0, %s97
      %s99 = sphi 0, %s97
      %s100 = sphi 0, %s99
      %s114 = sphi 0, %s100
      %s118 = sphi 0, %s118
      %s120 = sphi 0, %s118
      %s121 = sphi 0, %s120
      %s135 = sphi 0, %s121
      %s139 = sphi 0, %s139
      %s141 = sphi 0, %s139
      %s142 = sphi 0, %s141
      %s156 = sphi 0, %s142
      %s160 = sphi 0, %s160
      %s162 = sphi 0, %s160
      %s163 = sphi 0, %s162
      %s177 = sphi 0, %s163
      %s181 = sphi 0, %s181
      %s183 = sphi 0, %s181
      %s184 = sphi 0, %s183
      %s198 = sphi 0, %s184
      %s204 = sphi 0, %s206
      %s207 = sphi 0, %s204
      %s208 = sphi 0, %s207
      %s224 = sphi 0, %s208
    $region4: #{tpu_custom_call.1} parent=1 // loop_header_branch
      %24 = sbr.rel (%p22) target = $region8
    $region5: #{tpu_custom_call.1} parent=1 // loop_body
      %s26 = ssub.s32 %s21, 1
      %s27 = ssub.s32 %s21, 2
      %s28 = sadd.s32 %s21, 1
      %s29 = ssub.s32 %s21, %s28
      %p30 = scmp.eq.s32.totalorder %s29, 0
      %s32 = sadd.s32 %s31, 1
      %s33 = scalar_select %p30, %s31, %s32
      %p36 = pneg %p30
      %p37 = scmp.eq.s32.totalorder %s21, 1
      %p38 = por %p36, %p37
      %p39 = scmp.ne.s32.totalorder %s31, %s34
      %p40 = scmp.eq.s32.totalorder %s21, 0
      %p41 = por %p39, %p40
      %p42 = scmp.ne.s32.totalorder %s31, %s34
      %p43 = scmp.eq.s32.totalorder %s26, 1
      %p44 = por %p42, %p43
      %p45 = scmp.ne.s32.totalorder %s34, %s35
      %p46 = scmp.eq.s32.totalorder %s26, 0
      %p47 = por %p45, %p46
      %p48 = scmp.ne.s32.totalorder %s34, %s35
      %p49 = scmp.eq.s32.totalorder %s27, 1
      %p50 = por %p48, %p49
      %p52 = scmp.ne.s32.totalorder %s35, %s51
      %p53 = scmp.eq.s32.totalorder %s27, 0
      %p54 = por %p52, %p53
      %s56 = sadd.s32 %s55, 1
      %p59 = scmp.eq.s32.totalorder %s21, 1
      %p60 = scmp.ne.s32.totalorder %s55, %s57
      %p61 = scmp.eq.s32.totalorder %s21, 0
      %p62 = por %p60, %p61
      %p63 = scmp.ne.s32.totalorder %s55, %s57
      %p64 = scmp.eq.s32.totalorder %s26, 1
      %p65 = por %p63, %p64
      %p66 = scmp.ne.s32.totalorder %s57, %s58
      %p67 = scmp.eq.s32.totalorder %s26, 0
      %p68 = por %p66, %p67
      %p69 = scmp.ne.s32.totalorder %s57, %s58
      %p70 = scmp.eq.s32.totalorder %s27, 1
      %p71 = por %p69, %p70
      %p73 = scmp.ne.s32.totalorder %s58, %s72
      %p74 = scmp.eq.s32.totalorder %s27, 0
      %p75 = por %p73, %p74
      %s77 = sadd.s32 %s76, 1
      %p80 = scmp.eq.s32.totalorder %s21, 1
      %p81 = scmp.ne.s32.totalorder %s76, %s78
      %p82 = scmp.eq.s32.totalorder %s21, 0
      %p83 = por %p81, %p82
      %p84 = scmp.ne.s32.totalorder %s76, %s78
      %p85 = scmp.eq.s32.totalorder %s26, 1
      %p86 = por %p84, %p85
      %p87 = scmp.ne.s32.totalorder %s78, %s79
      %p88 = scmp.eq.s32.totalorder %s26, 0
      %p89 = por %p87, %p88
      %p90 = scmp.ne.s32.totalorder %s78, %s79
      %p91 = scmp.eq.s32.totalorder %s27, 1
      %p92 = por %p90, %p91
      %p94 = scmp.ne.s32.totalorder %s79, %s93
      %p95 = scmp.eq.s32.totalorder %s27, 0
      %p96 = por %p94, %p95
      %s98 = sadd.s32 %s97, 1
      %p101 = scmp.eq.s32.totalorder %s21, 1
      %p102 = scmp.ne.s32.totalorder %s97, %s99
      %p103 = scmp.eq.s32.totalorder %s21, 0
      %p104 = por %p102, %p103
      %p105 = scmp.ne.s32.totalorder %s97, %s99
      %p106 = scmp.eq.s32.totalorder %s26, 1
      %p107 = por %p105, %p106
      %p108 = scmp.ne.s32.totalorder %s99, %s100
      %p109 = scmp.eq.s32.totalorder %s26, 0
      %p110 = por %p108, %p109
      %p111 = scmp.ne.s32.totalorder %s99, %s100
      %p112 = scmp.eq.s32.totalorder %s27, 1
      %p113 = por %p111, %p112
      %p115 = scmp.ne.s32.totalorder %s100, %s114
      %p116 = scmp.eq.s32.totalorder %s27, 0
      %p117 = por %p115, %p116
      %s119 = sadd.s32 %s118, 1
      %p122 = scmp.eq.s32.totalorder %s21, 1
      %p123 = scmp.ne.s32.totalorder %s118, %s120
      %p124 = scmp.eq.s32.totalorder %s21, 0
      %p125 = por %p123, %p124
      %p126 = scmp.ne.s32.totalorder %s118, %s120
      %p127 = scmp.eq.s32.totalorder %s26, 1
      %p128 = por %p126, %p127
      %p129 = scmp.ne.s32.totalorder %s120, %s121
      %p130 = scmp.eq.s32.totalorder %s26, 0
      %p131 = por %p129, %p130
      %p132 = scmp.ne.s32.totalorder %s120, %s121
      %p133 = scmp.eq.s32.totalorder %s27, 1
      %p134 = por %p132, %p133
      %p136 = scmp.ne.s32.totalorder %s121, %s135
      %p137 = scmp.eq.s32.totalorder %s27, 0
      %p138 = por %p136, %p137
      %s140 = sadd.s32 %s139, 1
      %p143 = scmp.eq.s32.totalorder %s21, 1
      %p144 = scmp.ne.s32.totalorder %s139, %s141
      %p145 = scmp.eq.s32.totalorder %s21, 0
      %p146 = por %p144, %p145
      %p147 = scmp.ne.s32.totalorder %s139, %s141
      %p148 = scmp.eq.s32.totalorder %s26, 1
      %p149 = por %p147, %p148
      %p150 = scmp.ne.s32.totalorder %s141, %s142
      %p151 = scmp.eq.s32.totalorder %s26, 0
      %p152 = por %p150, %p151
      %p153 = scmp.ne.s32.totalorder %s141, %s142
      %p154 = scmp.eq.s32.totalorder %s27, 1
      %p155 = por %p153, %p154
      %p157 = scmp.ne.s32.totalorder %s142, %s156
      %p158 = scmp.eq.s32.totalorder %s27, 0
      %p159 = por %p157, %p158
      %s161 = sadd.s32 %s160, 1
      %p164 = scmp.eq.s32.totalorder %s21, 1
      %p165 = scmp.ne.s32.totalorder %s160, %s162
      %p166 = scmp.eq.s32.totalorder %s21, 0
      %p167 = por %p165, %p166
      %p168 = scmp.ne.s32.totalorder %s160, %s162
      %p169 = scmp.eq.s32.totalorder %s26, 1
      %p170 = por %p168, %p169
      %p171 = scmp.ne.s32.totalorder %s162, %s163
      %p172 = scmp.eq.s32.totalorder %s26, 0
      %p173 = por %p171, %p172
      %p174 = scmp.ne.s32.totalorder %s162, %s163
      %p175 = scmp.eq.s32.totalorder %s27, 1
      %p176 = por %p174, %p175
      %p178 = scmp.ne.s32.totalorder %s163, %s177
      %p179 = scmp.eq.s32.totalorder %s27, 0
      %p180 = por %p178, %p179
      %s182 = sadd.s32 %s181, 1
      %p185 = scmp.eq.s32.totalorder %s21, 1
      %p186 = scmp.ne.s32.totalorder %s181, %s183
      %p187 = scmp.eq.s32.totalorder %s21, 0
      %p188 = por %p186, %p187
      %p189 = scmp.ne.s32.totalorder %s181, %s183
      %p190 = scmp.eq.s32.totalorder %s26, 1
      %p191 = por %p189, %p190
      %p192 = scmp.ne.s32.totalorder %s183, %s184
      %p193 = scmp.eq.s32.totalorder %s26, 0
      %p194 = por %p192, %p193
      %p195 = scmp.ne.s32.totalorder %s183, %s184
      %p196 = scmp.eq.s32.totalorder %s27, 1
      %p197 = por %p195, %p196
      %p199 = scmp.ne.s32.totalorder %s184, %s198
      %p200 = scmp.eq.s32.totalorder %s27, 0
      %p201 = por %p199, %p200
      %s202 = ssub.s32 %s21, %s28
      %p203 = scmp.eq.s32.totalorder %s202, 0
      %s205 = sadd.s32 %s204, 1
      %s206 = scalar_select %p203, %s204, %s205
      %p209 = pneg %p203
      %p210 = scmp.eq.s32.totalorder %s21, 1
      %p211 = por %p209, %p210
      %p212 = scmp.ne.s32.totalorder %s204, %s207
      %p213 = scmp.eq.s32.totalorder %s21, 0
      %p214 = por %p212, %p213
      %p215 = scmp.ne.s32.totalorder %s204, %s207
      %p216 = scmp.eq.s32.totalorder %s26, 1
      %p217 = por %p215, %p216
      %p218 = scmp.ne.s32.totalorder %s207, %s208
      %p219 = scmp.eq.s32.totalorder %s26, 0
      %p220 = por %p218, %p219
      %p221 = scmp.ne.s32.totalorder %s207, %s208
      %p222 = scmp.eq.s32.totalorder %s27, 1
      %p223 = por %p221, %p222
      %p225 = scmp.ne.s32.totalorder %s208, %s224
      %p226 = scmp.eq.s32.totalorder %s27, 0
      %p227 = por %p225, %p226
      %p228 = scmp.le.s32.totalorder 1, %s21
      %p229 = scmp.lt.s32.totalorder %s21, 3
      %p230 = pnand %p228, %p229
      %p231 = pneg %p230
      // Predicated region
      $region9: #{tpu_custom_call.1} parent=5 // pred_check
        _
      $region10: #{tpu_custom_call.1} parent=5 // pred_check_branch
        %233 = sbr.rel (%p230) target = $region12
      $region11: #{tpu_custom_call.1} parent=5 // pred_region
        %s234 = ssub.s32 %s21, 1
        // Predicated region
        $region13: #{tpu_custom_call.1} parent=11 // pred_check
          %p235 = pneg %p68
        $region14: #{tpu_custom_call.1} parent=11 // pred_check_branch
          %237 = sbr.rel (%p235) target = $region16
        $region15: #{tpu_custom_call.1} parent=11 // pred_region
          %239 = vsyncadd [#allocation6], 0
          %s240 = sshll.u32 %s1, 4
          %s241 = int_to_ptr.hbm [resolvable:$true] %s240
          %s242 = sshll.u32 [#allocation5], 4
          %s243 = int_to_ptr.vmem [resolvable:$true] %s242
          %248 = dma.hbm_to_vmem [thread:$0]  %s241, 4096, %s243, [#allocation6], 128, 128, 8
        $region16: #{tpu_custom_call.1} parent=11 // pred_fallthru
          _
        // Predicated region
        $region17: #{tpu_custom_call.1} parent=11 // pred_check
          %p249 = pneg %p89
        $region18: #{tpu_custom_call.1} parent=11 // pred_check_branch
          %251 = sbr.rel (%p249) target = $region20
        $region19: #{tpu_custom_call.1} parent=11 // pred_region
          _
        $region20: #{tpu_custom_call.1} parent=11 // pred_fallthru
          _
        // Predicated region
        $region21: #{tpu_custom_call.1} parent=11 // pred_check
          %p252 = pneg %p110
        $region22: #{tpu_custom_call.1} parent=11 // pred_check_branch
          %254 = sbr.rel (%p252) target = $region24
        $region23: #{tpu_custom_call.1} parent=11 // pred_region
          _
        $region24: #{tpu_custom_call.1} parent=11 // pred_fallthru
          _
        // Predicated region
        $region25: #{tpu_custom_call.1} parent=11 // pred_check
          %p255 = pneg %p131
        $region26: #{tpu_custom_call.1} parent=11 // pred_check_branch
          %257 = sbr.rel (%p255) target = $region28
        $region27: #{tpu_custom_call.1} parent=11 // pred_region
          %259 = vsyncadd [#allocation6], 0
          %s260 = sshll.u32 %s4, 4
          %s261 = int_to_ptr.hbm [resolvable:$true] %s260
          %s262 = sshll.u32 [#allocation7], 4
          %s263 = int_to_ptr.vmem [resolvable:$true] %s262
          %268 = dma.hbm_to_vmem [thread:$0]  %s261, 8192, %s263, [#allocation6], 512, 512, 32
        $region28: #{tpu_custom_call.1} parent=11 // pred_fallthru
          _
        // Predicated region
        $region29: #{tpu_custom_call.1} parent=11 // pred_check
          %p269 = pneg %p152
        $region30: #{tpu_custom_call.1} parent=11 // pred_check_branch
          %271 = sbr.rel (%p269) target = $region32
        $region31: #{tpu_custom_call.1} parent=11 // pred_region
          _
        $region32: #{tpu_custom_call.1} parent=11 // pred_fallthru
          _
        // Predicated region
        $region33: #{tpu_custom_call.1} parent=11 // pred_check
          %p272 = pneg %p173
        $region34: #{tpu_custom_call.1} parent=11 // pred_check_branch
          %274 = sbr.rel (%p272) target = $region36
        $region35: #{tpu_custom_call.1} parent=11 // pred_region
          _
        $region36: #{tpu_custom_call.1} parent=11 // pred_fallthru
          _
        // Predicated region
        $region37: #{tpu_custom_call.1} parent=11 // pred_check
          %p275 = pneg %p194
        $region38: #{tpu_custom_call.1} parent=11 // pred_check_branch
          %277 = sbr.rel (%p275) target = $region40
        $region39: #{tpu_custom_call.1} parent=11 // pred_region
          _
        $region40: #{tpu_custom_call.1} parent=11 // pred_fallthru
          _
      $region12: #{tpu_custom_call.1} parent=5 // pred_fallthru
        _
      %p278 = scmp.lt.s32.totalorder %s21, 2
      // Predicated region
      $region41: #{tpu_custom_call.1} parent=5 // pred_check
        %p279 = pneg %p278
      $region42: #{tpu_custom_call.1} parent=5 // pred_check_branch
        %281 = sbr.rel (%p279) target = $region44
      $region43: #{tpu_custom_call.1} parent=5 // pred_region
        // Predicated region
        $region45: #{tpu_custom_call.1} parent=43 // pred_check
          %p282 = pneg %p41
        $region46: #{tpu_custom_call.1} parent=43 // pred_check_branch
          %284 = sbr.rel (%p282) target = $region48
        $region47: #{tpu_custom_call.1} parent=43 // pred_region
          %s285 = sand.u32 %s31, 1
          %s286 = scalar_lea.sflag [#allocation3], %s285
          %s287 = sand.u32 %s31, 1
          %s288 = smul.addr %s287, 256
          %s289 = scalar_lea.vmem [#allocation2], %s288
          %s290 = smul.u32 2, %s21
          %292 = vsyncadd %s286, 0
          %s293 = smul.addr %s290, 16
          %s294 = smul.addr %s293, 8
          %s295 = scalar_lea.hbm %s0, %s294
          %s296 = sshll.u32 %s295, 4
          %s297 = int_to_ptr.hbm [resolvable:$true] %s296
          %s298 = sshll.u32 %s289, 4
          %s299 = int_to_ptr.vmem [resolvable:$true] %s298
          %304 = dma.hbm_to_vmem [thread:$0]  %s297, 4096, %s299, %s286, 256, 256, 16
        $region48: #{tpu_custom_call.1} parent=43 // pred_fallthru
          _
      $region44: #{tpu_custom_call.1} parent=5 // pred_fallthru
        _
      %p305 = scmp.le.s32.totalorder 1, %s21
      %p306 = scmp.lt.s32.totalorder %s21, 3
      %p307 = pnand %p305, %p306
      %p308 = pneg %p307
      // Predicated region
      $region49: #{tpu_custom_call.1} parent=5 // pred_check
        _
      $region50: #{tpu_custom_call.1} parent=5 // pred_check_branch
        %310 = sbr.rel (%p307) target = $region52
      $region51: #{tpu_custom_call.1} parent=5 // pred_region
        %s311 = ssub.s32 %s21, 1
        %s312 = sand.u32 %s34, 1
        %s313 = scalar_lea.sflag [#allocation3], %s312
        %s314 = sand.u32 %s34, 1
        %s315 = smul.addr %s314, 256
        %s316 = scalar_lea.vmem [#allocation2], %s315
        // Predicated region
        $region53: #{tpu_custom_call.1} parent=51 // pred_check
          %p317 = pneg %p47
        $region54: #{tpu_custom_call.1} parent=51 // pred_check_branch
          %319 = sbr.rel (%p317) target = $region56
        $region55: #{tpu_custom_call.1} parent=51 // pred_region
          %321 = dma.done %s313, 4096
        $region56: #{tpu_custom_call.1} parent=51 // pred_fallthru
          _
        // Predicated region
        $region57: #{tpu_custom_call.1} parent=51 // pred_check
          %p322 = pneg %p68
        $region58: #{tpu_custom_call.1} parent=51 // pred_check_branch
          %324 = sbr.rel (%p322) target = $region60
        $region59: #{tpu_custom_call.1} parent=51 // pred_region
          %326 = dma.done [#allocation6], 4096
        $region60: #{tpu_custom_call.1} parent=51 // pred_fallthru
          _
        // Predicated region
        $region61: #{tpu_custom_call.1} parent=51 // pred_check
          %p327 = pneg %p131
        $region62: #{tpu_custom_call.1} parent=51 // pred_check_branch
          %329 = sbr.rel (%p327) target = $region64
        $region63: #{tpu_custom_call.1} parent=51 // pred_region
          %331 = dma.done [#allocation6], 8192
        $region64: #{tpu_custom_call.1} parent=51 // pred_fallthru
          _
        %s332 = sand.u32 %s34, 1
        %s333 = scalar_lea.sflag [#allocation3], %s332
        %s334 = sand.u32 %s34, 1
        %s335 = smul.addr %s334, 256
        %s336 = scalar_lea.vmem [#allocation2], %s335
        %p337 = pneg %p47
        %p338 = pneg %p44
        %p339 = pneg %p68
        %p340 = pneg %p65
        %p341 = pneg %p89
        %p342 = pneg %p86
        %p343 = pneg %p110
        %p344 = pneg %p107
        %p345 = pneg %p131
        %p346 = pneg %p128
        %p347 = pneg %p152
        %p348 = pneg %p149
        %p349 = pneg %p173
        %p350 = pneg %p170
        %p351 = pneg %p194
        %p352 = pneg %p191
        %p353 = pneg %p220
        %p354 = pneg %p217
        %s355 = sand.u32 %s207, 1
        %s356 = scalar_lea.sflag [#allocation4], %s355
        %s357 = sand.u32 %s207, 1
        %s358 = smul.addr %s357, 128
        %s359 = scalar_lea.vmem [#allocation8], %s358
        %s360 = smul.u32 2, %s26
        %s361 = smul.u32 2, %s26
        %v362 = vld [vmem:[%s316] sm:$0xff]
        %v363 = vld [vmem:[%s316 + $0x8] sm:$0xff]
        %v364 = vld [vmem:[%s316 + $0x10] sm:$0xff]
        %v365 = vld [vmem:[%s316 + $0x18] sm:$0xff]
        %v366 = vld [vmem:[%s316 + $0x20] sm:$0xff]
        %v367 = vld [vmem:[%s316 + $0x28] sm:$0xff]
        %v368 = vld [vmem:[%s316 + $0x30] sm:$0xff]
        %v369 = vld [vmem:[%s316 + $0x38] sm:$0xff]
        %v370 = vld [vmem:[%s316 + $0x40] sm:$0xff]
        %v371 = vld [vmem:[%s316 + $0x48] sm:$0xff]
        %v372 = vld [vmem:[%s316 + $0x50] sm:$0xff]
        %v373 = vld [vmem:[%s316 + $0x58] sm:$0xff]
        %v374 = vld [vmem:[%s316 + $0x60] sm:$0xff]
        %v375 = vld [vmem:[%s316 + $0x68] sm:$0xff]
        %v376 = vld [vmem:[%s316 + $0x70] sm:$0xff]
        %v377 = vld [vmem:[%s316 + $0x78] sm:$0xff]
        %v378 = vld [vmem:[%s316 + $0x80] sm:$0xff]
        %v379 = vld [vmem:[%s316 + $0x88] sm:$0xff]
        %v380 = vld [vmem:[%s316 + $0x90] sm:$0xff]
        %v381 = vld [vmem:[%s316 + $0x98] sm:$0xff]
        %v382 = vld [vmem:[%s316 + $0xa0] sm:$0xff]
        %v383 = vld [vmem:[%s316 + $0xa8] sm:$0xff]
        %v384 = vld [vmem:[%s316 + $0xb0] sm:$0xff]
        %v385 = vld [vmem:[%s316 + $0xb8] sm:$0xff]
        %v386 = vld [vmem:[%s316 + $0xc0] sm:$0xff]
        %v387 = vld [vmem:[%s316 + $0xc8] sm:$0xff]
        %v388 = vld [vmem:[%s316 + $0xd0] sm:$0xff]
        %v389 = vld [vmem:[%s316 + $0xd8] sm:$0xff]
        %v390 = vld [vmem:[%s316 + $0xe0] sm:$0xff]
        %v391 = vld [vmem:[%s316 + $0xe8] sm:$0xff]
        %v392 = vld [vmem:[%s316 + $0xf0] sm:$0xff]
        %v393 = vld [vmem:[%s316 + $0xf8] sm:$0xff]
        %v394 = vld [vmem:[#allocation5] sm:$0xff]
        %v395 = vld [vmem:[#allocation5 + $0x8] sm:$0xff]
        %v396 = vld [vmem:[#allocation5 + $0x10] sm:$0xff]
        %v397 = vld [vmem:[#allocation5 + $0x18] sm:$0xff]
        %v398 = vld [vmem:[#allocation5 + $0x20] sm:$0xff]
        %v399 = vld [vmem:[#allocation5 + $0x28] sm:$0xff]
        %v400 = vld [vmem:[#allocation5 + $0x30] sm:$0xff]
        %v401 = vld [vmem:[#allocation5 + $0x38] sm:$0xff]
        %v402 = vld [vmem:[#allocation5 + $0x40] sm:$0xff]
        %v403 = vld [vmem:[#allocation5 + $0x48] sm:$0xff]
        %v404 = vld [vmem:[#allocation5 + $0x50] sm:$0xff]
        %v405 = vld [vmem:[#allocation5 + $0x58] sm:$0xff]
        %v406 = vld [vmem:[#allocation5 + $0x60] sm:$0xff]
        %v407 = vld [vmem:[#allocation5 + $0x68] sm:$0xff]
        %v408 = vld [vmem:[#allocation5 + $0x70] sm:$0xff]
        %v409 = vld [vmem:[#allocation5 + $0x78] sm:$0xff]
        %v410 = vld [vmem:[#allocation5 + $0x80] sm:$0xff]
        %v411 = vld [vmem:[#allocation5 + $0x88] sm:$0xff]
        %v412 = vld [vmem:[#allocation5 + $0x90] sm:$0xff]
        %v413 = vld [vmem:[#allocation5 + $0x98] sm:$0xff]
        %v414 = vld [vmem:[#allocation5 + $0xa0] sm:$0xff]
        %v415 = vld [vmem:[#allocation5 + $0xa8] sm:$0xff]
        %v416 = vld [vmem:[#allocation5 + $0xb0] sm:$0xff]
        %v417 = vld [vmem:[#allocation5 + $0xb8] sm:$0xff]
        %v418 = vld [vmem:[#allocation5 + $0xc0] sm:$0xff]
        %v419 = vld [vmem:[#allocation5 + $0xc8] sm:$0xff]
        %v420 = vld [vmem:[#allocation5 + $0xd0] sm:$0xff]
        %v421 = vld [vmem:[#allocation5 + $0xd8] sm:$0xff]
        %v422 = vld [vmem:[#allocation5 + $0xe0] sm:$0xff]
        %v423 = vld [vmem:[#allocation5 + $0xe8] sm:$0xff]
        %v424 = vld [vmem:[#allocation5 + $0xf0] sm:$0xff]
        %v425 = vld [vmem:[#allocation5 + $0xf8] sm:$0xff]
        %426 = vmatpush.msra.mxu0 %v409
        %427 = vmatpush.msra.mxu0 %v408
        %428 = vmatpush.msra.mxu0 %v407
        %429 = vmatpush.msra.mxu0 %v406
        %430 = vmatpush.msra.mxu0 %v405
        %431 = vmatpush.msra.mxu0 %v404
        %432 = vmatpush.msra.mxu0 %v403
        %433 = vmatpush.msra.mxu0 %v402
        %434 = vmatpush.msra.mxu0 %v401
        %435 = vmatpush.msra.mxu0 %v400
        %436 = vmatpush.msra.mxu0 %v399
        %437 = vmatpush.msra.mxu0 %v398
        %438 = vmatpush.msra.mxu0 %v397
        %439 = vmatpush.msra.mxu0 %v396
        %440 = vmatpush.msra.mxu0 %v395
        %441 = vmatpush.msra.mxu0 %v394
        %442 = vmatmul.f32.gmra.mxu0 %v362
        %v443 = vpop.f32.mrf.mxu0
        %v444 = vadd.f32 0.0, %v443
        %445 = vmatmul.f32.gmra.mxu0 %v364
        %v446 = vpop.f32.mrf.mxu0
        %v447 = vadd.f32 0.0, %v446
        %448 = vmatmul.f32.gmra.mxu0 %v366
        %v449 = vpop.f32.mrf.mxu0
        %v450 = vadd.f32 0.0, %v449
        %451 = vmatmul.f32.gmra.mxu0 %v368
        %v452 = vpop.f32.mrf.mxu0
        %v453 = vadd.f32 0.0, %v452
        %454 = vmatmul.f32.gmra.mxu0 %v370
        %v455 = vpop.f32.mrf.mxu0
        %v456 = vadd.f32 0.0, %v455
        %457 = vmatmul.f32.gmra.mxu0 %v372
        %v458 = vpop.f32.mrf.mxu0
        %v459 = vadd.f32 0.0, %v458
        %460 = vmatmul.f32.gmra.mxu0 %v374
        %v461 = vpop.f32.mrf.mxu0
        %v462 = vadd.f32 0.0, %v461
        %463 = vmatmul.f32.gmra.mxu0 %v376
        %v464 = vpop.f32.mrf.mxu0
        %v465 = vadd.f32 0.0, %v464
        %466 = vmatmul.f32.gmra.mxu0 %v378
        %v467 = vpop.f32.mrf.mxu0
        %v468 = vadd.f32 0.0, %v467
        %469 = vmatmul.f32.gmra.mxu0 %v380
        %v470 = vpop.f32.mrf.mxu0
        %v471 = vadd.f32 0.0, %v470
        %472 = vmatmul.f32.gmra.mxu0 %v382
        %v473 = vpop.f32.mrf.mxu0
        %v474 = vadd.f32 0.0, %v473
        %475 = vmatmul.f32.gmra.mxu0 %v384
        %v476 = vpop.f32.mrf.mxu0
        %v477 = vadd.f32 0.0, %v476
        %478 = vmatmul.f32.gmra.mxu0 %v386
        %v479 = vpop.f32.mrf.mxu0
        %v480 = vadd.f32 0.0, %v479
        %481 = vmatmul.f32.gmra.mxu0 %v388
        %v482 = vpop.f32.mrf.mxu0
        %v483 = vadd.f32 0.0, %v482
        %484 = vmatmul.f32.gmra.mxu0 %v390
        %v485 = vpop.f32.mrf.mxu0
        %v486 = vadd.f32 0.0, %v485
        %487 = vmatmul.f32.gmra.mxu0 %v392
        %v488 = vpop.f32.mrf.mxu0
        %v489 = vadd.f32 0.0, %v488
        %490 = vdwg.mxu0
        %491 = vmatpush.msra.mxu0 %v425
        %492 = vmatpush.msra.mxu0 %v424
        %493 = vmatpush.msra.mxu0 %v423
        %494 = vmatpush.msra.mxu0 %v422
        %495 = vmatpush.msra.mxu0 %v421
        %496 = vmatpush.msra.mxu0 %v420
        %497 = vmatpush.msra.mxu0 %v419
        %498 = vmatpush.msra.mxu0 %v418
        %499 = vmatpush.msra.mxu0 %v417
        %500 = vmatpush.msra.mxu0 %v416
        %501 = vmatpush.msra.mxu0 %v415
        %502 = vmatpush.msra.mxu0 %v414
        %503 = vmatpush.msra.mxu0 %v413
        %504 = vmatpush.msra.mxu0 %v412
        %505 = vmatpush.msra.mxu0 %v411
        %506 = vmatpush.msra.mxu0 %v410
        %507 = vmatmul.f32.gmra.mxu0 %v363
        %v508 = vpop.f32.mrf.mxu0
        %v509 = vadd.f32 %v444, %v508
        %510 = vmatmul.f32.gmra.mxu0 %v365
        %v511 = vpop.f32.mrf.mxu0
        %v512 = vadd.f32 %v447, %v511
        %513 = vmatmul.f32.gmra.mxu0 %v367
        %v514 = vpop.f32.mrf.mxu0
        %v515 = vadd.f32 %v450, %v514
        %516 = vmatmul.f32.gmra.mxu0 %v369
        %v517 = vpop.f32.mrf.mxu0
        %v518 = vadd.f32 %v453, %v517
        %519 = vmatmul.f32.gmra.mxu0 %v371
        %v520 = vpop.f32.mrf.mxu0
        %v521 = vadd.f32 %v456, %v520
        %522 = vmatmul.f32.gmra.mxu0 %v373
        %v523 = vpop.f32.mrf.mxu0
        %v524 = vadd.f32 %v459, %v523
        %525 = vmatmul.f32.gmra.mxu0 %v375
        %v526 = vpop.f32.mrf.mxu0
        %v527 = vadd.f32 %v462, %v526
        %528 = vmatmul.f32.gmra.mxu0 %v377
        %v529 = vpop.f32.mrf.mxu0
        %v530 = vadd.f32 %v465, %v529
        %531 = vmatmul.f32.gmra.mxu0 %v379
        %v532 = vpop.f32.mrf.mxu0
        %v533 = vadd.f32 %v468, %v532
        %534 = vmatmul.f32.gmra.mxu0 %v381
        %v535 = vpop.f32.mrf.mxu0
        %v536 = vadd.f32 %v471, %v535
        %537 = vmatmul.f32.gmra.mxu0 %v383
        %v538 = vpop.f32.mrf.mxu0
        %v539 = vadd.f32 %v474, %v538
        %540 = vmatmul.f32.gmra.mxu0 %v385
        %v541 = vpop.f32.mrf.mxu0
        %v542 = vadd.f32 %v477, %v541
        %543 = vmatmul.f32.gmra.mxu0 %v387
        %v544 = vpop.f32.mrf.mxu0
        %v545 = vadd.f32 %v480, %v544
        %546 = vmatmul.f32.gmra.mxu0 %v389
        %v547 = vpop.f32.mrf.mxu0
        %v548 = vadd.f32 %v483, %v547
        %549 = vmatmul.f32.gmra.mxu0 %v391
        %v550 = vpop.f32.mrf.mxu0
        %v551 = vadd.f32 %v486, %v550
        %552 = vmatmul.f32.gmra.mxu0 %v393
        %v553 = vpop.f32.mrf.mxu0
        %v554 = vadd.f32 %v489, %v553
        %555 = vdwg.mxu0
        %v556 = vld [vmem:[%s2] sm:$0xff]
        %v557 = vld [vmem:[%s2 + $0x8] sm:$0xff]
        %v558 = vld [vmem:[%s2 + $0x10] sm:$0xff]
        %v559 = vld [vmem:[%s2 + $0x18] sm:$0xff]
        %v560 = vld [vmem:[%s2 + $0x20] sm:$0xff]
        %v561 = vld [vmem:[%s2 + $0x28] sm:$0xff]
        %v562 = vld [vmem:[%s2 + $0x30] sm:$0xff]
        %v563 = vld [vmem:[%s2 + $0x38] sm:$0xff]
        %v564 = vld [vmem:[%s2 + $0x40] sm:$0xff]
        %v565 = vld [vmem:[%s2 + $0x48] sm:$0xff]
        %v566 = vld [vmem:[%s2 + $0x50] sm:$0xff]
        %v567 = vld [vmem:[%s2 + $0x58] sm:$0xff]
        %v568 = vld [vmem:[%s2 + $0x60] sm:$0xff]
        %v569 = vld [vmem:[%s2 + $0x68] sm:$0xff]
        %v570 = vld [vmem:[%s2 + $0x70] sm:$0xff]
        %v571 = vld [vmem:[%s2 + $0x78] sm:$0xff]
        %v572 = vld [vmem:[%s3] sm:$0x1]
        %v574 = vperm.slane %v572, 0
        %576 = vmatpush.msra.mxu0 %v571
        %577 = vmatpush.msra.mxu0 %v570
        %578 = vmatpush.msra.mxu0 %v569
        %579 = vmatpush.msra.mxu0 %v568
        %580 = vmatpush.msra.mxu0 %v567
        %581 = vmatpush.msra.mxu0 %v566
        %582 = vmatpush.msra.mxu0 %v565
        %583 = vmatpush.msra.mxu0 %v564
        %584 = vmatpush.msra.mxu0 %v563
        %585 = vmatpush.msra.mxu0 %v562
        %586 = vmatpush.msra.mxu0 %v561
        %587 = vmatpush.msra.mxu0 %v560
        %588 = vmatpush.msra.mxu0 %v559
        %589 = vmatpush.msra.mxu0 %v558
        %590 = vmatpush.msra.mxu0 %v557
        %591 = vmatpush.msra.mxu0 %v556
        %592 = vmatmul.f32.gmra.mxu0 %v509
        %v593 = vpop.f32.mrf.mxu0
        %v594 = vadd.f32 %v574, %v593
        %595 = vmatmul.f32.gmra.mxu0 %v512
        %v596 = vpop.f32.mrf.mxu0
        %v597 = vadd.f32 %v574, %v596
        %598 = vmatmul.f32.gmra.mxu0 %v515
        %v599 = vpop.f32.mrf.mxu0
        %v600 = vadd.f32 %v574, %v599
        %601 = vmatmul.f32.gmra.mxu0 %v518
        %v602 = vpop.f32.mrf.mxu0
        %v603 = vadd.f32 %v574, %v602
        %604 = vmatmul.f32.gmra.mxu0 %v521
        %v605 = vpop.f32.mrf.mxu0
        %v606 = vadd.f32 %v574, %v605
        %607 = vmatmul.f32.gmra.mxu0 %v524
        %v608 = vpop.f32.mrf.mxu0
        %v609 = vadd.f32 %v574, %v608
        %610 = vmatmul.f32.gmra.mxu0 %v527
        %v611 = vpop.f32.mrf.mxu0
        %v612 = vadd.f32 %v574, %v611
        %613 = vmatmul.f32.gmra.mxu0 %v530
        %v614 = vpop.f32.mrf.mxu0
        %v615 = vadd.f32 %v574, %v614
        %616 = vmatmul.f32.gmra.mxu0 %v533
        %v617 = vpop.f32.mrf.mxu0
        %v618 = vadd.f32 %v574, %v617
        %619 = vmatmul.f32.gmra.mxu0 %v536
        %v620 = vpop.f32.mrf.mxu0
        %v621 = vadd.f32 %v574, %v620
        %622 = vmatmul.f32.gmra.mxu0 %v539
        %v623 = vpop.f32.mrf.mxu0
        %v624 = vadd.f32 %v574, %v623
        %625 = vmatmul.f32.gmra.mxu0 %v542
        %v626 = vpop.f32.mrf.mxu0
        %v627 = vadd.f32 %v574, %v626
        %628 = vmatmul.f32.gmra.mxu0 %v545
        %v629 = vpop.f32.mrf.mxu0
        %v630 = vadd.f32 %v574, %v629
        %631 = vmatmul.f32.gmra.mxu0 %v548
        %v632 = vpop.f32.mrf.mxu0
        %v633 = vadd.f32 %v574, %v632
        %634 = vmatmul.f32.gmra.mxu0 %v551
        %v635 = vpop.f32.mrf.mxu0
        %v636 = vadd.f32 %v574, %v635
        %637 = vmatmul.f32.gmra.mxu0 %v554
        %v638 = vpop.f32.mrf.mxu0
        %v639 = vadd.f32 %v574, %v638
        %640 = vdwg.mxu0
        %v641 = vld [vmem:[#allocation7] sm:$0xff]
        %v642 = vld [vmem:[#allocation7 + $0x8] sm:$0xff]
        %v643 = vld [vmem:[#allocation7 + $0x10] sm:$0xff]
        %v644 = vld [vmem:[#allocation7 + $0x18] sm:$0xff]
        %v645 = vld [vmem:[#allocation7 + $0x20] sm:$0xff]
        %v646 = vld [vmem:[#allocation7 + $0x28] sm:$0xff]
        %v647 = vld [vmem:[#allocation7 + $0x30] sm:$0xff]
        %v648 = vld [vmem:[#allocation7 + $0x38] sm:$0xff]
        %v649 = vld [vmem:[#allocation7 + $0x40] sm:$0xff]
        %v650 = vld [vmem:[#allocation7 + $0x48] sm:$0xff]
        %v651 = vld [vmem:[#allocation7 + $0x50] sm:$0xff]
        %v652 = vld [vmem:[#allocation7 + $0x58] sm:$0xff]
        %v653 = vld [vmem:[#allocation7 + $0x60] sm:$0xff]
        %v654 = vld [vmem:[#allocation7 + $0x68] sm:$0xff]
        %v655 = vld [vmem:[#allocation7 + $0x70] sm:$0xff]
        %v656 = vld [vmem:[#allocation7 + $0x78] sm:$0xff]
        %v657 = vld [vmem:[#allocation7 + $0x80] sm:$0xff]
        %v658 = vld [vmem:[#allocation7 + $0x88] sm:$0xff]
        %v659 = vld [vmem:[#allocation7 + $0x90] sm:$0xff]
        %v660 = vld [vmem:[#allocation7 + $0x98] sm:$0xff]
        %v661 = vld [vmem:[#allocation7 + $0xa0] sm:$0xff]
        %v662 = vld [vmem:[#allocation7 + $0xa8] sm:$0xff]
        %v663 = vld [vmem:[#allocation7 + $0xb0] sm:$0xff]
        %v664 = vld [vmem:[#allocation7 + $0xb8] sm:$0xff]
        %v665 = vld [vmem:[#allocation7 + $0xc0] sm:$0xff]
        %v666 = vld [vmem:[#allocation7 + $0xc8] sm:$0xff]
        %v667 = vld [vmem:[#allocation7 + $0xd0] sm:$0xff]
        %v668 = vld [vmem:[#allocation7 + $0xd8] sm:$0xff]
        %v669 = vld [vmem:[#allocation7 + $0xe0] sm:$0xff]
        %v670 = vld [vmem:[#allocation7 + $0xe8] sm:$0xff]
        %v671 = vld [vmem:[#allocation7 + $0xf0] sm:$0xff]
        %v672 = vld [vmem:[#allocation7 + $0xf8] sm:$0xff]
        %v673 = vld [vmem:[#allocation7 + $0x100] sm:$0xff]
        %v674 = vld [vmem:[#allocation7 + $0x108] sm:$0xff]
        %v675 = vld [vmem:[#allocation7 + $0x110] sm:$0xff]
        %v676 = vld [vmem:[#allocation7 + $0x118] sm:$0xff]
        %v677 = vld [vmem:[#allocation7 + $0x120] sm:$0xff]
        %v678 = vld [vmem:[#allocation7 + $0x128] sm:$0xff]
        %v679 = vld [vmem:[#allocation7 + $0x130] sm:$0xff]
        %v680 = vld [vmem:[#allocation7 + $0x138] sm:$0xff]
        %v681 = vld [vmem:[#allocation7 + $0x140] sm:$0xff]
        %v682 = vld [vmem:[#allocation7 + $0x148] sm:$0xff]
        %v683 = vld [vmem:[#allocation7 + $0x150] sm:$0xff]
        %v684 = vld [vmem:[#allocation7 + $0x158] sm:$0xff]
        %v685 = vld [vmem:[#allocation7 + $0x160] sm:$0xff]
        %v686 = vld [vmem:[#allocation7 + $0x168] sm:$0xff]
        %v687 = vld [vmem:[#allocation7 + $0x170] sm:$0xff]
        %v688 = vld [vmem:[#allocation7 + $0x178] sm:$0xff]
        %v689 = vld [vmem:[#allocation7 + $0x180] sm:$0xff]
        %v690 = vld [vmem:[#allocation7 + $0x188] sm:$0xff]
        %v691 = vld [vmem:[#allocation7 + $0x190] sm:$0xff]
        %v692 = vld [vmem:[#allocation7 + $0x198] sm:$0xff]
        %v693 = vld [vmem:[#allocation7 + $0x1a0] sm:$0xff]
        %v694 = vld [vmem:[#allocation7 + $0x1a8] sm:$0xff]
        %v695 = vld [vmem:[#allocation7 + $0x1b0] sm:$0xff]
        %v696 = vld [vmem:[#allocation7 + $0x1b8] sm:$0xff]
        %v697 = vld [vmem:[#allocation7 + $0x1c0] sm:$0xff]
        %v698 = vld [vmem:[#allocation7 + $0x1c8] sm:$0xff]
        %v699 = vld [vmem:[#allocation7 + $0x1d0] sm:$0xff]
        %v700 = vld [vmem:[#allocation7 + $0x1d8] sm:$0xff]
        %v701 = vld [vmem:[#allocation7 + $0x1e0] sm:$0xff]
        %v702 = vld [vmem:[#allocation7 + $0x1e8] sm:$0xff]
        %v703 = vld [vmem:[#allocation7 + $0x1f0] sm:$0xff]
        %v704 = vld [vmem:[#allocation7 + $0x1f8] sm:$0xff]
        %v705 = vld [vmem:[%s5] sm:$0xf]
        %v707 = vperm.slane %v705, 0
        %v708 = vperm.slane %v705, 1
        %v709 = vperm.slane %v705, 2
        %v710 = vperm.slane %v705, 3
        %715 = vmatpush.msra.mxu0 %v701
        %716 = vmatpush.msra.mxu0 %v697
        %717 = vmatpush.msra.mxu0 %v693
        %718 = vmatpush.msra.mxu0 %v689
        %719 = vmatpush.msra.mxu0 %v685
        %720 = vmatpush.msra.mxu0 %v681
        %721 = vmatpush.msra.mxu0 %v677
        %722 = vmatpush.msra.mxu0 %v673
        %723 = vmatpush.msra.mxu0 %v669
        %724 = vmatpush.msra.mxu0 %v665
        %725 = vmatpush.msra.mxu0 %v661
        %726 = vmatpush.msra.mxu0 %v657
        %727 = vmatpush.msra.mxu0 %v653
        %728 = vmatpush.msra.mxu0 %v649
        %729 = vmatpush.msra.mxu0 %v645
        %730 = vmatpush.msra.mxu0 %v641
        %731 = vmatmul.f32.gmra.mxu0 %v509
        %v732 = vpop.f32.mrf.mxu0
        %v733 = vadd.f32 %v707, %v732
        %734 = vmatmul.f32.gmra.mxu0 %v512
        %v735 = vpop.f32.mrf.mxu0
        %v736 = vadd.f32 %v707, %v735
        %737 = vmatmul.f32.gmra.mxu0 %v515
        %v738 = vpop.f32.mrf.mxu0
        %v739 = vadd.f32 %v707, %v738
        %740 = vmatmul.f32.gmra.mxu0 %v518
        %v741 = vpop.f32.mrf.mxu0
        %v742 = vadd.f32 %v707, %v741
        %743 = vmatmul.f32.gmra.mxu0 %v521
        %v744 = vpop.f32.mrf.mxu0
        %v745 = vadd.f32 %v707, %v744
        %746 = vmatmul.f32.gmra.mxu0 %v524
        %v747 = vpop.f32.mrf.mxu0
        %v748 = vadd.f32 %v707, %v747
        %749 = vmatmul.f32.gmra.mxu0 %v527
        %v750 = vpop.f32.mrf.mxu0
        %v751 = vadd.f32 %v707, %v750
        %752 = vmatmul.f32.gmra.mxu0 %v530
        %v753 = vpop.f32.mrf.mxu0
        %v754 = vadd.f32 %v707, %v753
        %755 = vmatmul.f32.gmra.mxu0 %v533
        %v756 = vpop.f32.mrf.mxu0
        %v757 = vadd.f32 %v707, %v756
        %758 = vmatmul.f32.gmra.mxu0 %v536
        %v759 = vpop.f32.mrf.mxu0
        %v760 = vadd.f32 %v707, %v759
        %761 = vmatmul.f32.gmra.mxu0 %v539
        %v762 = vpop.f32.mrf.mxu0
        %v763 = vadd.f32 %v707, %v762
        %764 = vmatmul.f32.gmra.mxu0 %v542
        %v765 = vpop.f32.mrf.mxu0
        %v766 = vadd.f32 %v707, %v765
        %767 = vmatmul.f32.gmra.mxu0 %v545
        %v768 = vpop.f32.mrf.mxu0
        %v769 = vadd.f32 %v707, %v768
        %770 = vmatmul.f32.gmra.mxu0 %v548
        %v771 = vpop.f32.mrf.mxu0
        %v772 = vadd.f32 %v707, %v771
        %773 = vmatmul.f32.gmra.mxu0 %v551
        %v774 = vpop.f32.mrf.mxu0
        %v775 = vadd.f32 %v707, %v774
        %776 = vmatmul.f32.gmra.mxu0 %v554
        %v777 = vpop.f32.mrf.mxu0
        %v778 = vadd.f32 %v707, %v777
        %779 = vdwg.mxu0
        %780 = vmatpush.msra.mxu0 %v702
        %781 = vmatpush.msra.mxu0 %v698
        %782 = vmatpush.msra.mxu0 %v694
        %783 = vmatpush.msra.mxu0 %v690
        %784 = vmatpush.msra.mxu0 %v686
        %785 = vmatpush.msra.mxu0 %v682
        %786 = vmatpush.msra.mxu0 %v678
        %787 = vmatpush.msra.mxu0 %v674
        %788 = vmatpush.msra.mxu0 %v670
        %789 = vmatpush.msra.mxu0 %v666
        %790 = vmatpush.msra.mxu0 %v662
        %791 = vmatpush.msra.mxu0 %v658
        %792 = vmatpush.msra.mxu0 %v654
        %793 = vmatpush.msra.mxu0 %v650
        %794 = vmatpush.msra.mxu0 %v646
        %795 = vmatpush.msra.mxu0 %v642
        %796 = vmatmul.f32.gmra.mxu0 %v509
        %v797 = vpop.f32.mrf.mxu0
        %v798 = vadd.f32 %v708, %v797
        %799 = vmatmul.f32.gmra.mxu0 %v512
        %v800 = vpop.f32.mrf.mxu0
        %v801 = vadd.f32 %v708, %v800
        %802 = vmatmul.f32.gmra.mxu0 %v515
        %v803 = vpop.f32.mrf.mxu0
        %v804 = vadd.f32 %v708, %v803
        %805 = vmatmul.f32.gmra.mxu0 %v518
        %v806 = vpop.f32.mrf.mxu0
        %v807 = vadd.f32 %v708, %v806
        %808 = vmatmul.f32.gmra.mxu0 %v521
        %v809 = vpop.f32.mrf.mxu0
        %v810 = vadd.f32 %v708, %v809
        %811 = vmatmul.f32.gmra.mxu0 %v524
        %v812 = vpop.f32.mrf.mxu0
        %v813 = vadd.f32 %v708, %v812
        %814 = vmatmul.f32.gmra.mxu0 %v527
        %v815 = vpop.f32.mrf.mxu0
        %v816 = vadd.f32 %v708, %v815
        %817 = vmatmul.f32.gmra.mxu0 %v530
        %v818 = vpop.f32.mrf.mxu0
        %v819 = vadd.f32 %v708, %v818
        %820 = vmatmul.f32.gmra.mxu0 %v533
        %v821 = vpop.f32.mrf.mxu0
        %v822 = vadd.f32 %v708, %v821
        %823 = vmatmul.f32.gmra.mxu0 %v536
        %v824 = vpop.f32.mrf.mxu0
        %v825 = vadd.f32 %v708, %v824
        %826 = vmatmul.f32.gmra.mxu0 %v539
        %v827 = vpop.f32.mrf.mxu0
        %v828 = vadd.f32 %v708, %v827
        %829 = vmatmul.f32.gmra.mxu0 %v542
        %v830 = vpop.f32.mrf.mxu0
        %v831 = vadd.f32 %v708, %v830
        %832 = vmatmul.f32.gmra.mxu0 %v545
        %v833 = vpop.f32.mrf.mxu0
        %v834 = vadd.f32 %v708, %v833
        %835 = vmatmul.f32.gmra.mxu0 %v548
        %v836 = vpop.f32.mrf.mxu0
        %v837 = vadd.f32 %v708, %v836
        %838 = vmatmul.f32.gmra.mxu0 %v551
        %v839 = vpop.f32.mrf.mxu0
        %v840 = vadd.f32 %v708, %v839
        %841 = vmatmul.f32.gmra.mxu0 %v554
        %v842 = vpop.f32.mrf.mxu0
        %v843 = vadd.f32 %v708, %v842
        %844 = vdwg.mxu0
        %845 = vmatpush.msra.mxu0 %v703
        %846 = vmatpush.msra.mxu0 %v699
        %847 = vmatpush.msra.mxu0 %v695
        %848 = vmatpush.msra.mxu0 %v691
        %849 = vmatpush.msra.mxu0 %v687
        %850 = vmatpush.msra.mxu0 %v683
        %851 = vmatpush.msra.mxu0 %v679
        %852 = vmatpush.msra.mxu0 %v675
        %853 = vmatpush.msra.mxu0 %v671
        %854 = vmatpush.msra.mxu0 %v667
        %855 = vmatpush.msra.mxu0 %v663
        %856 = vmatpush.msra.mxu0 %v659
        %857 = vmatpush.msra.mxu0 %v655
        %858 = vmatpush.msra.mxu0 %v651
        %859 = vmatpush.msra.mxu0 %v647
        %860 = vmatpush.msra.mxu0 %v643
        %861 = vmatmul.f32.gmra.mxu0 %v509
        %v862 = vpop.f32.mrf.mxu0
        %v863 = vadd.f32 %v709, %v862
        %864 = vmatmul.f32.gmra.mxu0 %v512
        %v865 = vpop.f32.mrf.mxu0
        %v866 = vadd.f32 %v709, %v865
        %867 = vmatmul.f32.gmra.mxu0 %v515
        %v868 = vpop.f32.mrf.mxu0
        %v869 = vadd.f32 %v709, %v868
        %870 = vmatmul.f32.gmra.mxu0 %v518
        %v871 = vpop.f32.mrf.mxu0
        %v872 = vadd.f32 %v709, %v871
        %873 = vmatmul.f32.gmra.mxu0 %v521
        %v874 = vpop.f32.mrf.mxu0
        %v875 = vadd.f32 %v709, %v874
        %876 = vmatmul.f32.gmra.mxu0 %v524
        %v877 = vpop.f32.mrf.mxu0
        %v878 = vadd.f32 %v709, %v877
        %879 = vmatmul.f32.gmra.mxu0 %v527
        %v880 = vpop.f32.mrf.mxu0
        %v881 = vadd.f32 %v709, %v880
        %882 = vmatmul.f32.gmra.mxu0 %v530
        %v883 = vpop.f32.mrf.mxu0
        %v884 = vadd.f32 %v709, %v883
        %885 = vmatmul.f32.gmra.mxu0 %v533
        %v886 = vpop.f32.mrf.mxu0
        %v887 = vadd.f32 %v709, %v886
        %888 = vmatmul.f32.gmra.mxu0 %v536
        %v889 = vpop.f32.mrf.mxu0
        %v890 = vadd.f32 %v709, %v889
        %891 = vmatmul.f32.gmra.mxu0 %v539
        %v892 = vpop.f32.mrf.mxu0
        %v893 = vadd.f32 %v709, %v892
        %894 = vmatmul.f32.gmra.mxu0 %v542
        %v895 = vpop.f32.mrf.mxu0
        %v896 = vadd.f32 %v709, %v895
        %897 = vmatmul.f32.gmra.mxu0 %v545
        %v898 = vpop.f32.mrf.mxu0
        %v899 = vadd.f32 %v709, %v898
        %900 = vmatmul.f32.gmra.mxu0 %v548
        %v901 = vpop.f32.mrf.mxu0
        %v902 = vadd.f32 %v709, %v901
        %903 = vmatmul.f32.gmra.mxu0 %v551
        %v904 = vpop.f32.mrf.mxu0
        %v905 = vadd.f32 %v709, %v904
        %906 = vmatmul.f32.gmra.mxu0 %v554
        %v907 = vpop.f32.mrf.mxu0
        %v908 = vadd.f32 %v709, %v907
        %909 = vdwg.mxu0
        %910 = vmatpush.msra.mxu0 %v704
        %911 = vmatpush.msra.mxu0 %v700
        %912 = vmatpush.msra.mxu0 %v696
        %913 = vmatpush.msra.mxu0 %v692
        %914 = vmatpush.msra.mxu0 %v688
        %915 = vmatpush.msra.mxu0 %v684
        %916 = vmatpush.msra.mxu0 %v680
        %917 = vmatpush.msra.mxu0 %v676
        %918 = vmatpush.msra.mxu0 %v672
        %919 = vmatpush.msra.mxu0 %v668
        %920 = vmatpush.msra.mxu0 %v664
        %921 = vmatpush.msra.mxu0 %v660
        %922 = vmatpush.msra.mxu0 %v656
        %923 = vmatpush.msra.mxu0 %v652
        %924 = vmatpush.msra.mxu0 %v648
        %925 = vmatpush.msra.mxu0 %v644
        %926 = vmatmul.f32.gmra.mxu0 %v509
        %v927 = vpop.f32.mrf.mxu0
        %v928 = vadd.f32 %v710, %v927
        %929 = vmatmul.f32.gmra.mxu0 %v512
        %v930 = vpop.f32.mrf.mxu0
        %v931 = vadd.f32 %v710, %v930
        %932 = vmatmul.f32.gmra.mxu0 %v515
        %v933 = vpop.f32.mrf.mxu0
        %v934 = vadd.f32 %v710, %v933
        %935 = vmatmul.f32.gmra.mxu0 %v518
        %v936 = vpop.f32.mrf.mxu0
        %v937 = vadd.f32 %v710, %v936
        %938 = vmatmul.f32.gmra.mxu0 %v521
        %v939 = vpop.f32.mrf.mxu0
        %v940 = vadd.f32 %v710, %v939
        %941 = vmatmul.f32.gmra.mxu0 %v524
        %v942 = vpop.f32.mrf.mxu0
        %v943 = vadd.f32 %v710, %v942
        %944 = vmatmul.f32.gmra.mxu0 %v527
        %v945 = vpop.f32.mrf.mxu0
        %v946 = vadd.f32 %v710, %v945
        %947 = vmatmul.f32.gmra.mxu0 %v530
        %v948 = vpop.f32.mrf.mxu0
        %v949 = vadd.f32 %v710, %v948
        %950 = vmatmul.f32.gmra.mxu0 %v533
        %v951 = vpop.f32.mrf.mxu0
        %v952 = vadd.f32 %v710, %v951
        %953 = vmatmul.f32.gmra.mxu0 %v536
        %v954 = vpop.f32.mrf.mxu0
        %v955 = vadd.f32 %v710, %v954
        %956 = vmatmul.f32.gmra.mxu0 %v539
        %v957 = vpop.f32.mrf.mxu0
        %v958 = vadd.f32 %v710, %v957
        %959 = vmatmul.f32.gmra.mxu0 %v542
        %v960 = vpop.f32.mrf.mxu0
        %v961 = vadd.f32 %v710, %v960
        %962 = vmatmul.f32.gmra.mxu0 %v545
        %v963 = vpop.f32.mrf.mxu0
        %v964 = vadd.f32 %v710, %v963
        %965 = vmatmul.f32.gmra.mxu0 %v548
        %v966 = vpop.f32.mrf.mxu0
        %v967 = vadd.f32 %v710, %v966
        %968 = vmatmul.f32.gmra.mxu0 %v551
        %v969 = vpop.f32.mrf.mxu0
        %v970 = vadd.f32 %v710, %v969
        %971 = vmatmul.f32.gmra.mxu0 %v554
        %v972 = vpop.f32.mrf.mxu0
        %v973 = vadd.f32 %v710, %v972
        %974 = vdwg.mxu0
        %v975 = vmax.f32 %v733, 0.0
        %v976 = vmax.f32 %v798, 0.0
        %v977 = vmax.f32 %v863, 0.0
        %v978 = vmax.f32 %v928, 0.0
        %v979 = vmax.f32 %v736, 0.0
        %v980 = vmax.f32 %v801, 0.0
        %v981 = vmax.f32 %v866, 0.0
        %v982 = vmax.f32 %v931, 0.0
        %v983 = vmax.f32 %v739, 0.0
        %v984 = vmax.f32 %v804, 0.0
        %v985 = vmax.f32 %v869, 0.0
        %v986 = vmax.f32 %v934, 0.0
        %v987 = vmax.f32 %v742, 0.0
        %v988 = vmax.f32 %v807, 0.0
        %v989 = vmax.f32 %v872, 0.0
        %v990 = vmax.f32 %v937, 0.0
        %v991 = vmax.f32 %v745, 0.0
        %v992 = vmax.f32 %v810, 0.0
        %v993 = vmax.f32 %v875, 0.0
        %v994 = vmax.f32 %v940, 0.0
        %v995 = vmax.f32 %v748, 0.0
        %v996 = vmax.f32 %v813, 0.0
        %v997 = vmax.f32 %v878, 0.0
        %v998 = vmax.f32 %v943, 0.0
        %v999 = vmax.f32 %v751, 0.0
        %v1000 = vmax.f32 %v816, 0.0
        %v1001 = vmax.f32 %v881, 0.0
        %v1002 = vmax.f32 %v946, 0.0
        %v1003 = vmax.f32 %v754, 0.0
        %v1004 = vmax.f32 %v819, 0.0
        %v1005 = vmax.f32 %v884, 0.0
        %v1006 = vmax.f32 %v949, 0.0
        %v1007 = vmax.f32 %v757, 0.0
        %v1008 = vmax.f32 %v822, 0.0
        %v1009 = vmax.f32 %v887, 0.0
        %v1010 = vmax.f32 %v952, 0.0
        %v1011 = vmax.f32 %v760, 0.0
        %v1012 = vmax.f32 %v825, 0.0
        %v1013 = vmax.f32 %v890, 0.0
        %v1014 = vmax.f32 %v955, 0.0
        %v1015 = vmax.f32 %v763, 0.0
        %v1016 = vmax.f32 %v828, 0.0
        %v1017 = vmax.f32 %v893, 0.0
        %v1018 = vmax.f32 %v958, 0.0
        %v1019 = vmax.f32 %v766, 0.0
        %v1020 = vmax.f32 %v831, 0.0
        %v1021 = vmax.f32 %v896, 0.0
        %v1022 = vmax.f32 %v961, 0.0
        %v1023 = vmax.f32 %v769, 0.0
        %v1024 = vmax.f32 %v834, 0.0
        %v1025 = vmax.f32 %v899, 0.0
        %v1026 = vmax.f32 %v964, 0.0
        %v1027 = vmax.f32 %v772, 0.0
        %v1028 = vmax.f32 %v837, 0.0
        %v1029 = vmax.f32 %v902, 0.0
        %v1030 = vmax.f32 %v967, 0.0
        %v1031 = vmax.f32 %v775, 0.0
        %v1032 = vmax.f32 %v840, 0.0
        %v1033 = vmax.f32 %v905, 0.0
        %v1034 = vmax.f32 %v970, 0.0
        %v1035 = vmax.f32 %v778, 0.0
        %v1036 = vmax.f32 %v843, 0.0
        %v1037 = vmax.f32 %v908, 0.0
        %v1038 = vmax.f32 %v973, 0.0
        %v1039 = vmul.f32 %v975, %v975
        %v1040 = vmul.f32 %v979, %v979
        %v1041 = vmul.f32 %v983, %v983
        %v1042 = vmul.f32 %v987, %v987
        %v1043 = vmul.f32 %v991, %v991
        %v1044 = vmul.f32 %v995, %v995
        %v1045 = vmul.f32 %v999, %v999
        %v1046 = vmul.f32 %v1003, %v1003
        %v1047 = vmul.f32 %v1007, %v1007
        %v1048 = vmul.f32 %v1011, %v1011
        %v1049 = vmul.f32 %v1015, %v1015
        %v1050 = vmul.f32 %v1019, %v1019
        %v1051 = vmul.f32 %v1023, %v1023
        %v1052 = vmul.f32 %v1027, %v1027
        %v1053 = vmul.f32 %v1031, %v1031
        %v1054 = vmul.f32 %v1035, %v1035
        %1055 = vadd.xlane.f32.xlu0 %v1039
        %v1056 = vpop.xlane.xlu0 %1055
        %1057 = vadd.xlane.f32.xlu0 %v1040
        %v1058 = vpop.xlane.xlu0 %1057
        %1059 = vadd.xlane.f32.xlu0 %v1041
        %v1060 = vpop.xlane.xlu0 %1059
        %1061 = vadd.xlane.f32.xlu0 %v1042
        %v1062 = vpop.xlane.xlu0 %1061
        %1063 = vadd.xlane.f32.xlu0 %v1043
        %v1064 = vpop.xlane.xlu0 %1063
        %1065 = vadd.xlane.f32.xlu0 %v1044
        %v1066 = vpop.xlane.xlu0 %1065
        %1067 = vadd.xlane.f32.xlu0 %v1045
        %v1068 = vpop.xlane.xlu0 %1067
        %1069 = vadd.xlane.f32.xlu0 %v1046
        %v1070 = vpop.xlane.xlu0 %1069
        %1071 = vadd.xlane.f32.xlu0 %v1047
        %v1072 = vpop.xlane.xlu0 %1071
        %1073 = vadd.xlane.f32.xlu0 %v1048
        %v1074 = vpop.xlane.xlu0 %1073
        %1075 = vadd.xlane.f32.xlu0 %v1049
        %v1076 = vpop.xlane.xlu0 %1075
        %1077 = vadd.xlane.f32.xlu0 %v1050
        %v1078 = vpop.xlane.xlu0 %1077
        %1079 = vadd.xlane.f32.xlu0 %v1051
        %v1080 = vpop.xlane.xlu0 %1079
        %1081 = vadd.xlane.f32.xlu0 %v1052
        %v1082 = vpop.xlane.xlu0 %1081
        %1083 = vadd.xlane.f32.xlu0 %v1053
        %v1084 = vpop.xlane.xlu0 %1083
        %1085 = vadd.xlane.f32.xlu0 %v1054
        %v1086 = vpop.xlane.xlu0 %1085
        %v1087 = vadd.f32 %v1056, 1e-24
        %v1088 = vadd.f32 %v1058, 1e-24
        %v1089 = vadd.f32 %v1060, 1e-24
        %v1090 = vadd.f32 %v1062, 1e-24
        %v1091 = vadd.f32 %v1064, 1e-24
        %v1092 = vadd.f32 %v1066, 1e-24
        %v1093 = vadd.f32 %v1068, 1e-24
        %v1094 = vadd.f32 %v1070, 1e-24
        %v1095 = vadd.f32 %v1072, 1e-24
        %v1096 = vadd.f32 %v1074, 1e-24
        %v1097 = vadd.f32 %v1076, 1e-24
        %v1098 = vadd.f32 %v1078, 1e-24
        %v1099 = vadd.f32 %v1080, 1e-24
        %v1100 = vadd.f32 %v1082, 1e-24
        %v1101 = vadd.f32 %v1084, 1e-24
        %v1102 = vadd.f32 %v1086, 1e-24
        %v1103 = vrsqrt.pop %v1087
        %v1104 = vmul.f32 %v1103, %v1087
        %v1105 = vmul.f32 %v1104, %v1103
        %v1106 = vmul.f32 0.5, %v1105
        %v1107 = vsub.f32 1.5, %v1106
        %v1108 = vmul.f32 %v1103, %v1107
        %vm1109 = vweird.f32 %v1087
        %vm1110 = vweird.f32 %v1103
        %vm1111 = vmor %vm1109, %vm1110
        %v1112 = vsel %vm1111, %v1103, %v1108
        %v1113 = vrsqrt.pop %v1088
        %v1114 = vmul.f32 %v1113, %v1088
        %v1115 = vmul.f32 %v1114, %v1113
        %v1116 = vmul.f32 0.5, %v1115
        %v1117 = vsub.f32 1.5, %v1116
        %v1118 = vmul.f32 %v1113, %v1117
        %vm1119 = vweird.f32 %v1088
        %vm1120 = vweird.f32 %v1113
        %vm1121 = vmor %vm1119, %vm1120
        %v1122 = vsel %vm1121, %v1113, %v1118
        %v1123 = vrsqrt.pop %v1089
        %v1124 = vmul.f32 %v1123, %v1089
        %v1125 = vmul.f32 %v1124, %v1123
        %v1126 = vmul.f32 0.5, %v1125
        %v1127 = vsub.f32 1.5, %v1126
        %v1128 = vmul.f32 %v1123, %v1127
        %vm1129 = vweird.f32 %v1089
        %vm1130 = vweird.f32 %v1123
        %vm1131 = vmor %vm1129, %vm1130
        %v1132 = vsel %vm1131, %v1123, %v1128
        %v1133 = vrsqrt.pop %v1090
        %v1134 = vmul.f32 %v1133, %v1090
        %v1135 = vmul.f32 %v1134, %v1133
        %v1136 = vmul.f32 0.5, %v1135
        %v1137 = vsub.f32 1.5, %v1136
        %v1138 = vmul.f32 %v1133, %v1137
        %vm1139 = vweird.f32 %v1090
        %vm1140 = vweird.f32 %v1133
        %vm1141 = vmor %vm1139, %vm1140
        %v1142 = vsel %vm1141, %v1133, %v1138
        %v1143 = vrsqrt.pop %v1091
        %v1144 = vmul.f32 %v1143, %v1091
        %v1145 = vmul.f32 %v1144, %v1143
        %v1146 = vmul.f32 0.5, %v1145
        %v1147 = vsub.f32 1.5, %v1146
        %v1148 = vmul.f32 %v1143, %v1147
        %vm1149 = vweird.f32 %v1091
        %vm1150 = vweird.f32 %v1143
        %vm1151 = vmor %vm1149, %vm1150
        %v1152 = vsel %vm1151, %v1143, %v1148
        %v1153 = vrsqrt.pop %v1092
        %v1154 = vmul.f32 %v1153, %v1092
        %v1155 = vmul.f32 %v1154, %v1153
        %v1156 = vmul.f32 0.5, %v1155
        %v1157 = vsub.f32 1.5, %v1156
        %v1158 = vmul.f32 %v1153, %v1157
        %vm1159 = vweird.f32 %v1092
        %vm1160 = vweird.f32 %v1153
        %vm1161 = vmor %vm1159, %vm1160
        %v1162 = vsel %vm1161, %v1153, %v1158
        %v1163 = vrsqrt.pop %v1093
        %v1164 = vmul.f32 %v1163, %v1093
        %v1165 = vmul.f32 %v1164, %v1163
        %v1166 = vmul.f32 0.5, %v1165
        %v1167 = vsub.f32 1.5, %v1166
        %v1168 = vmul.f32 %v1163, %v1167
        %vm1169 = vweird.f32 %v1093
        %vm1170 = vweird.f32 %v1163
        %vm1171 = vmor %vm1169, %vm1170
        %v1172 = vsel %vm1171, %v1163, %v1168
        %v1173 = vrsqrt.pop %v1094
        %v1174 = vmul.f32 %v1173, %v1094
        %v1175 = vmul.f32 %v1174, %v1173
        %v1176 = vmul.f32 0.5, %v1175
        %v1177 = vsub.f32 1.5, %v1176
        %v1178 = vmul.f32 %v1173, %v1177
        %vm1179 = vweird.f32 %v1094
        %vm1180 = vweird.f32 %v1173
        %vm1181 = vmor %vm1179, %vm1180
        %v1182 = vsel %vm1181, %v1173, %v1178
        %v1183 = vrsqrt.pop %v1095
        %v1184 = vmul.f32 %v1183, %v1095
        %v1185 = vmul.f32 %v1184, %v1183
        %v1186 = vmul.f32 0.5, %v1185
        %v1187 = vsub.f32 1.5, %v1186
        %v1188 = vmul.f32 %v1183, %v1187
        %vm1189 = vweird.f32 %v1095
        %vm1190 = vweird.f32 %v1183
        %vm1191 = vmor %vm1189, %vm1190
        %v1192 = vsel %vm1191, %v1183, %v1188
        %v1193 = vrsqrt.pop %v1096
        %v1194 = vmul.f32 %v1193, %v1096
        %v1195 = vmul.f32 %v1194, %v1193
        %v1196 = vmul.f32 0.5, %v1195
        %v1197 = vsub.f32 1.5, %v1196
        %v1198 = vmul.f32 %v1193, %v1197
        %vm1199 = vweird.f32 %v1096
        %vm1200 = vweird.f32 %v1193
        %vm1201 = vmor %vm1199, %vm1200
        %v1202 = vsel %vm1201, %v1193, %v1198
        %v1203 = vrsqrt.pop %v1097
        %v1204 = vmul.f32 %v1203, %v1097
        %v1205 = vmul.f32 %v1204, %v1203
        %v1206 = vmul.f32 0.5, %v1205
        %v1207 = vsub.f32 1.5, %v1206
        %v1208 = vmul.f32 %v1203, %v1207
        %vm1209 = vweird.f32 %v1097
        %vm1210 = vweird.f32 %v1203
        %vm1211 = vmor %vm1209, %vm1210
        %v1212 = vsel %vm1211, %v1203, %v1208
        %v1213 = vrsqrt.pop %v1098
        %v1214 = vmul.f32 %v1213, %v1098
        %v1215 = vmul.f32 %v1214, %v1213
        %v1216 = vmul.f32 0.5, %v1215
        %v1217 = vsub.f32 1.5, %v1216
        %v1218 = vmul.f32 %v1213, %v1217
        %vm1219 = vweird.f32 %v1098
        %vm1220 = vweird.f32 %v1213
        %vm1221 = vmor %vm1219, %vm1220
        %v1222 = vsel %vm1221, %v1213, %v1218
        %v1223 = vrsqrt.pop %v1099
        %v1224 = vmul.f32 %v1223, %v1099
        %v1225 = vmul.f32 %v1224, %v1223
        %v1226 = vmul.f32 0.5, %v1225
        %v1227 = vsub.f32 1.5, %v1226
        %v1228 = vmul.f32 %v1223, %v1227
        %vm1229 = vweird.f32 %v1099
        %vm1230 = vweird.f32 %v1223
        %vm1231 = vmor %vm1229, %vm1230
        %v1232 = vsel %vm1231, %v1223, %v1228
        %v1233 = vrsqrt.pop %v1100
        %v1234 = vmul.f32 %v1233, %v1100
        %v1235 = vmul.f32 %v1234, %v1233
        %v1236 = vmul.f32 0.5, %v1235
        %v1237 = vsub.f32 1.5, %v1236
        %v1238 = vmul.f32 %v1233, %v1237
        %vm1239 = vweird.f32 %v1100
        %vm1240 = vweird.f32 %v1233
        %vm1241 = vmor %vm1239, %vm1240
        %v1242 = vsel %vm1241, %v1233, %v1238
        %v1243 = vrsqrt.pop %v1101
        %v1244 = vmul.f32 %v1243, %v1101
        %v1245 = vmul.f32 %v1244, %v1243
        %v1246 = vmul.f32 0.5, %v1245
        %v1247 = vsub.f32 1.5, %v1246
        %v1248 = vmul.f32 %v1243, %v1247
        %vm1249 = vweird.f32 %v1101
        %vm1250 = vweird.f32 %v1243
        %vm1251 = vmor %vm1249, %vm1250
        %v1252 = vsel %vm1251, %v1243, %v1248
        %v1253 = vrsqrt.pop %v1102
        %v1254 = vmul.f32 %v1253, %v1102
        %v1255 = vmul.f32 %v1254, %v1253
        %v1256 = vmul.f32 0.5, %v1255
        %v1257 = vsub.f32 1.5, %v1256
        %v1258 = vmul.f32 %v1253, %v1257
        %vm1259 = vweird.f32 %v1102
        %vm1260 = vweird.f32 %v1253
        %vm1261 = vmor %vm1259, %vm1260
        %v1262 = vsel %vm1261, %v1253, %v1258
        %v1263 = vmul.f32 %v975, %v1112
        %v1264 = vmul.f32 %v979, %v1122
        %v1265 = vmul.f32 %v983, %v1132
        %v1266 = vmul.f32 %v987, %v1142
        %v1267 = vmul.f32 %v991, %v1152
        %v1268 = vmul.f32 %v995, %v1162
        %v1269 = vmul.f32 %v999, %v1172
        %v1270 = vmul.f32 %v1003, %v1182
        %v1271 = vmul.f32 %v1007, %v1192
        %v1272 = vmul.f32 %v1011, %v1202
        %v1273 = vmul.f32 %v1015, %v1212
        %v1274 = vmul.f32 %v1019, %v1222
        %v1275 = vmul.f32 %v1023, %v1232
        %v1276 = vmul.f32 %v1027, %v1242
        %v1277 = vmul.f32 %v1031, %v1252
        %v1278 = vmul.f32 %v1035, %v1262
        %v1279 = vmul.f32 %v976, %v976
        %v1280 = vmul.f32 %v980, %v980
        %v1281 = vmul.f32 %v984, %v984
        %v1282 = vmul.f32 %v988, %v988
        %v1283 = vmul.f32 %v992, %v992
        %v1284 = vmul.f32 %v996, %v996
        %v1285 = vmul.f32 %v1000, %v1000
        %v1286 = vmul.f32 %v1004, %v1004
        %v1287 = vmul.f32 %v1008, %v1008
        %v1288 = vmul.f32 %v1012, %v1012
        %v1289 = vmul.f32 %v1016, %v1016
        %v1290 = vmul.f32 %v1020, %v1020
        %v1291 = vmul.f32 %v1024, %v1024
        %v1292 = vmul.f32 %v1028, %v1028
        %v1293 = vmul.f32 %v1032, %v1032
        %v1294 = vmul.f32 %v1036, %v1036
        %1295 = vadd.xlane.f32.xlu0 %v1279
        %v1296 = vpop.xlane.xlu0 %1295
        %1297 = vadd.xlane.f32.xlu0 %v1280
        %v1298 = vpop.xlane.xlu0 %1297
        %1299 = vadd.xlane.f32.xlu0 %v1281
        %v1300 = vpop.xlane.xlu0 %1299
        %1301 = vadd.xlane.f32.xlu0 %v1282
        %v1302 = vpop.xlane.xlu0 %1301
        %1303 = vadd.xlane.f32.xlu0 %v1283
        %v1304 = vpop.xlane.xlu0 %1303
        %1305 = vadd.xlane.f32.xlu0 %v1284
        %v1306 = vpop.xlane.xlu0 %1305
        %1307 = vadd.xlane.f32.xlu0 %v1285
        %v1308 = vpop.xlane.xlu0 %1307
        %1309 = vadd.xlane.f32.xlu0 %v1286
        %v1310 = vpop.xlane.xlu0 %1309
        %1311 = vadd.xlane.f32.xlu0 %v1287
        %v1312 = vpop.xlane.xlu0 %1311
        %1313 = vadd.xlane.f32.xlu0 %v1288
        %v1314 = vpop.xlane.xlu0 %1313
        %1315 = vadd.xlane.f32.xlu0 %v1289
        %v1316 = vpop.xlane.xlu0 %1315
        %1317 = vadd.xlane.f32.xlu0 %v1290
        %v1318 = vpop.xlane.xlu0 %1317
        %1319 = vadd.xlane.f32.xlu0 %v1291
        %v1320 = vpop.xlane.xlu0 %1319
        %1321 = vadd.xlane.f32.xlu0 %v1292
        %v1322 = vpop.xlane.xlu0 %1321
        %1323 = vadd.xlane.f32.xlu0 %v1293
        %v1324 = vpop.xlane.xlu0 %1323
        %1325 = vadd.xlane.f32.xlu0 %v1294
        %v1326 = vpop.xlane.xlu0 %1325
        %v1327 = vadd.f32 %v1296, 1e-24
        %v1328 = vadd.f32 %v1298, 1e-24
        %v1329 = vadd.f32 %v1300, 1e-24
        %v1330 = vadd.f32 %v1302, 1e-24
        %v1331 = vadd.f32 %v1304, 1e-24
        %v1332 = vadd.f32 %v1306, 1e-24
        %v1333 = vadd.f32 %v1308, 1e-24
        %v1334 = vadd.f32 %v1310, 1e-24
        %v1335 = vadd.f32 %v1312, 1e-24
        %v1336 = vadd.f32 %v1314, 1e-24
        %v1337 = vadd.f32 %v1316, 1e-24
        %v1338 = vadd.f32 %v1318, 1e-24
        %v1339 = vadd.f32 %v1320, 1e-24
        %v1340 = vadd.f32 %v1322, 1e-24
        %v1341 = vadd.f32 %v1324, 1e-24
        %v1342 = vadd.f32 %v1326, 1e-24
        %v1343 = vrsqrt.pop %v1327
        %v1344 = vmul.f32 %v1343, %v1327
        %v1345 = vmul.f32 %v1344, %v1343
        %v1346 = vmul.f32 0.5, %v1345
        %v1347 = vsub.f32 1.5, %v1346
        %v1348 = vmul.f32 %v1343, %v1347
        %vm1349 = vweird.f32 %v1327
        %vm1350 = vweird.f32 %v1343
        %vm1351 = vmor %vm1349, %vm1350
        %v1352 = vsel %vm1351, %v1343, %v1348
        %v1353 = vrsqrt.pop %v1328
        %v1354 = vmul.f32 %v1353, %v1328
        %v1355 = vmul.f32 %v1354, %v1353
        %v1356 = vmul.f32 0.5, %v1355
        %v1357 = vsub.f32 1.5, %v1356
        %v1358 = vmul.f32 %v1353, %v1357
        %vm1359 = vweird.f32 %v1328
        %vm1360 = vweird.f32 %v1353
        %vm1361 = vmor %vm1359, %vm1360
        %v1362 = vsel %vm1361, %v1353, %v1358
        %v1363 = vrsqrt.pop %v1329
        %v1364 = vmul.f32 %v1363, %v1329
        %v1365 = vmul.f32 %v1364, %v1363
        %v1366 = vmul.f32 0.5, %v1365
        %v1367 = vsub.f32 1.5, %v1366
        %v1368 = vmul.f32 %v1363, %v1367
        %vm1369 = vweird.f32 %v1329
        %vm1370 = vweird.f32 %v1363
        %vm1371 = vmor %vm1369, %vm1370
        %v1372 = vsel %vm1371, %v1363, %v1368
        %v1373 = vrsqrt.pop %v1330
        %v1374 = vmul.f32 %v1373, %v1330
        %v1375 = vmul.f32 %v1374, %v1373
        %v1376 = vmul.f32 0.5, %v1375
        %v1377 = vsub.f32 1.5, %v1376
        %v1378 = vmul.f32 %v1373, %v1377
        %vm1379 = vweird.f32 %v1330
        %vm1380 = vweird.f32 %v1373
        %vm1381 = vmor %vm1379, %vm1380
        %v1382 = vsel %vm1381, %v1373, %v1378
        %v1383 = vrsqrt.pop %v1331
        %v1384 = vmul.f32 %v1383, %v1331
        %v1385 = vmul.f32 %v1384, %v1383
        %v1386 = vmul.f32 0.5, %v1385
        %v1387 = vsub.f32 1.5, %v1386
        %v1388 = vmul.f32 %v1383, %v1387
        %vm1389 = vweird.f32 %v1331
        %vm1390 = vweird.f32 %v1383
        %vm1391 = vmor %vm1389, %vm1390
        %v1392 = vsel %vm1391, %v1383, %v1388
        %v1393 = vrsqrt.pop %v1332
        %v1394 = vmul.f32 %v1393, %v1332
        %v1395 = vmul.f32 %v1394, %v1393
        %v1396 = vmul.f32 0.5, %v1395
        %v1397 = vsub.f32 1.5, %v1396
        %v1398 = vmul.f32 %v1393, %v1397
        %vm1399 = vweird.f32 %v1332
        %vm1400 = vweird.f32 %v1393
        %vm1401 = vmor %vm1399, %vm1400
        %v1402 = vsel %vm1401, %v1393, %v1398
        %v1403 = vrsqrt.pop %v1333
        %v1404 = vmul.f32 %v1403, %v1333
        %v1405 = vmul.f32 %v1404, %v1403
        %v1406 = vmul.f32 0.5, %v1405
        %v1407 = vsub.f32 1.5, %v1406
        %v1408 = vmul.f32 %v1403, %v1407
        %vm1409 = vweird.f32 %v1333
        %vm1410 = vweird.f32 %v1403
        %vm1411 = vmor %vm1409, %vm1410
        %v1412 = vsel %vm1411, %v1403, %v1408
        %v1413 = vrsqrt.pop %v1334
        %v1414 = vmul.f32 %v1413, %v1334
        %v1415 = vmul.f32 %v1414, %v1413
        %v1416 = vmul.f32 0.5, %v1415
        %v1417 = vsub.f32 1.5, %v1416
        %v1418 = vmul.f32 %v1413, %v1417
        %vm1419 = vweird.f32 %v1334
        %vm1420 = vweird.f32 %v1413
        %vm1421 = vmor %vm1419, %vm1420
        %v1422 = vsel %vm1421, %v1413, %v1418
        %v1423 = vrsqrt.pop %v1335
        %v1424 = vmul.f32 %v1423, %v1335
        %v1425 = vmul.f32 %v1424, %v1423
        %v1426 = vmul.f32 0.5, %v1425
        %v1427 = vsub.f32 1.5, %v1426
        %v1428 = vmul.f32 %v1423, %v1427
        %vm1429 = vweird.f32 %v1335
        %vm1430 = vweird.f32 %v1423
        %vm1431 = vmor %vm1429, %vm1430
        %v1432 = vsel %vm1431, %v1423, %v1428
        %v1433 = vrsqrt.pop %v1336
        %v1434 = vmul.f32 %v1433, %v1336
        %v1435 = vmul.f32 %v1434, %v1433
        %v1436 = vmul.f32 0.5, %v1435
        %v1437 = vsub.f32 1.5, %v1436
        %v1438 = vmul.f32 %v1433, %v1437
        %vm1439 = vweird.f32 %v1336
        %vm1440 = vweird.f32 %v1433
        %vm1441 = vmor %vm1439, %vm1440
        %v1442 = vsel %vm1441, %v1433, %v1438
        %v1443 = vrsqrt.pop %v1337
        %v1444 = vmul.f32 %v1443, %v1337
        %v1445 = vmul.f32 %v1444, %v1443
        %v1446 = vmul.f32 0.5, %v1445
        %v1447 = vsub.f32 1.5, %v1446
        %v1448 = vmul.f32 %v1443, %v1447
        %vm1449 = vweird.f32 %v1337
        %vm1450 = vweird.f32 %v1443
        %vm1451 = vmor %vm1449, %vm1450
        %v1452 = vsel %vm1451, %v1443, %v1448
        %v1453 = vrsqrt.pop %v1338
        %v1454 = vmul.f32 %v1453, %v1338
        %v1455 = vmul.f32 %v1454, %v1453
        %v1456 = vmul.f32 0.5, %v1455
        %v1457 = vsub.f32 1.5, %v1456
        %v1458 = vmul.f32 %v1453, %v1457
        %vm1459 = vweird.f32 %v1338
        %vm1460 = vweird.f32 %v1453
        %vm1461 = vmor %vm1459, %vm1460
        %v1462 = vsel %vm1461, %v1453, %v1458
        %v1463 = vrsqrt.pop %v1339
        %v1464 = vmul.f32 %v1463, %v1339
        %v1465 = vmul.f32 %v1464, %v1463
        %v1466 = vmul.f32 0.5, %v1465
        %v1467 = vsub.f32 1.5, %v1466
        %v1468 = vmul.f32 %v1463, %v1467
        %vm1469 = vweird.f32 %v1339
        %vm1470 = vweird.f32 %v1463
        %vm1471 = vmor %vm1469, %vm1470
        %v1472 = vsel %vm1471, %v1463, %v1468
        %v1473 = vrsqrt.pop %v1340
        %v1474 = vmul.f32 %v1473, %v1340
        %v1475 = vmul.f32 %v1474, %v1473
        %v1476 = vmul.f32 0.5, %v1475
        %v1477 = vsub.f32 1.5, %v1476
        %v1478 = vmul.f32 %v1473, %v1477
        %vm1479 = vweird.f32 %v1340
        %vm1480 = vweird.f32 %v1473
        %vm1481 = vmor %vm1479, %vm1480
        %v1482 = vsel %vm1481, %v1473, %v1478
        %v1483 = vrsqrt.pop %v1341
        %v1484 = vmul.f32 %v1483, %v1341
        %v1485 = vmul.f32 %v1484, %v1483
        %v1486 = vmul.f32 0.5, %v1485
        %v1487 = vsub.f32 1.5, %v1486
        %v1488 = vmul.f32 %v1483, %v1487
        %vm1489 = vweird.f32 %v1341
        %vm1490 = vweird.f32 %v1483
        %vm1491 = vmor %vm1489, %vm1490
        %v1492 = vsel %vm1491, %v1483, %v1488
        %v1493 = vrsqrt.pop %v1342
        %v1494 = vmul.f32 %v1493, %v1342
        %v1495 = vmul.f32 %v1494, %v1493
        %v1496 = vmul.f32 0.5, %v1495
        %v1497 = vsub.f32 1.5, %v1496
        %v1498 = vmul.f32 %v1493, %v1497
        %vm1499 = vweird.f32 %v1342
        %vm1500 = vweird.f32 %v1493
        %vm1501 = vmor %vm1499, %vm1500
        %v1502 = vsel %vm1501, %v1493, %v1498
        %v1503 = vmul.f32 %v976, %v1352
        %v1504 = vmul.f32 %v980, %v1362
        %v1505 = vmul.f32 %v984, %v1372
        %v1506 = vmul.f32 %v988, %v1382
        %v1507 = vmul.f32 %v992, %v1392
        %v1508 = vmul.f32 %v996, %v1402
        %v1509 = vmul.f32 %v1000, %v1412
        %v1510 = vmul.f32 %v1004, %v1422
        %v1511 = vmul.f32 %v1008, %v1432
        %v1512 = vmul.f32 %v1012, %v1442
        %v1513 = vmul.f32 %v1016, %v1452
        %v1514 = vmul.f32 %v1020, %v1462
        %v1515 = vmul.f32 %v1024, %v1472
        %v1516 = vmul.f32 %v1028, %v1482
        %v1517 = vmul.f32 %v1032, %v1492
        %v1518 = vmul.f32 %v1036, %v1502
        %v1519 = vmul.f32 %v977, %v977
        %v1520 = vmul.f32 %v981, %v981
        %v1521 = vmul.f32 %v985, %v985
        %v1522 = vmul.f32 %v989, %v989
        %v1523 = vmul.f32 %v993, %v993
        %v1524 = vmul.f32 %v997, %v997
        %v1525 = vmul.f32 %v1001, %v1001
        %v1526 = vmul.f32 %v1005, %v1005
        %v1527 = vmul.f32 %v1009, %v1009
        %v1528 = vmul.f32 %v1013, %v1013
        %v1529 = vmul.f32 %v1017, %v1017
        %v1530 = vmul.f32 %v1021, %v1021
        %v1531 = vmul.f32 %v1025, %v1025
        %v1532 = vmul.f32 %v1029, %v1029
        %v1533 = vmul.f32 %v1033, %v1033
        %v1534 = vmul.f32 %v1037, %v1037
        %1535 = vadd.xlane.f32.xlu0 %v1519
        %v1536 = vpop.xlane.xlu0 %1535
        %1537 = vadd.xlane.f32.xlu0 %v1520
        %v1538 = vpop.xlane.xlu0 %1537
        %1539 = vadd.xlane.f32.xlu0 %v1521
        %v1540 = vpop.xlane.xlu0 %1539
        %1541 = vadd.xlane.f32.xlu0 %v1522
        %v1542 = vpop.xlane.xlu0 %1541
        %1543 = vadd.xlane.f32.xlu0 %v1523
        %v1544 = vpop.xlane.xlu0 %1543
        %1545 = vadd.xlane.f32.xlu0 %v1524
        %v1546 = vpop.xlane.xlu0 %1545
        %1547 = vadd.xlane.f32.xlu0 %v1525
        %v1548 = vpop.xlane.xlu0 %1547
        %1549 = vadd.xlane.f32.xlu0 %v1526
        %v1550 = vpop.xlane.xlu0 %1549
        %1551 = vadd.xlane.f32.xlu0 %v1527
        %v1552 = vpop.xlane.xlu0 %1551
        %1553 = vadd.xlane.f32.xlu0 %v1528
        %v1554 = vpop.xlane.xlu0 %1553
        %1555 = vadd.xlane.f32.xlu0 %v1529
        %v1556 = vpop.xlane.xlu0 %1555
        %1557 = vadd.xlane.f32.xlu0 %v1530
        %v1558 = vpop.xlane.xlu0 %1557
        %1559 = vadd.xlane.f32.xlu0 %v1531
        %v1560 = vpop.xlane.xlu0 %1559
        %1561 = vadd.xlane.f32.xlu0 %v1532
        %v1562 = vpop.xlane.xlu0 %1561
        %1563 = vadd.xlane.f32.xlu0 %v1533
        %v1564 = vpop.xlane.xlu0 %1563
        %1565 = vadd.xlane.f32.xlu0 %v1534
        %v1566 = vpop.xlane.xlu0 %1565
        %v1567 = vadd.f32 %v1536, 1e-24
        %v1568 = vadd.f32 %v1538, 1e-24
        %v1569 = vadd.f32 %v1540, 1e-24
        %v1570 = vadd.f32 %v1542, 1e-24
        %v1571 = vadd.f32 %v1544, 1e-24
        %v1572 = vadd.f32 %v1546, 1e-24
        %v1573 = vadd.f32 %v1548, 1e-24
        %v1574 = vadd.f32 %v1550, 1e-24
        %v1575 = vadd.f32 %v1552, 1e-24
        %v1576 = vadd.f32 %v1554, 1e-24
        %v1577 = vadd.f32 %v1556, 1e-24
        %v1578 = vadd.f32 %v1558, 1e-24
        %v1579 = vadd.f32 %v1560, 1e-24
        %v1580 = vadd.f32 %v1562, 1e-24
        %v1581 = vadd.f32 %v1564, 1e-24
        %v1582 = vadd.f32 %v1566, 1e-24
        %v1583 = vrsqrt.pop %v1567
        %v1584 = vmul.f32 %v1583, %v1567
        %v1585 = vmul.f32 %v1584, %v1583
        %v1586 = vmul.f32 0.5, %v1585
        %v1587 = vsub.f32 1.5, %v1586
        %v1588 = vmul.f32 %v1583, %v1587
        %vm1589 = vweird.f32 %v1567
        %vm1590 = vweird.f32 %v1583
        %vm1591 = vmor %vm1589, %vm1590
        %v1592 = vsel %vm1591, %v1583, %v1588
        %v1593 = vrsqrt.pop %v1568
        %v1594 = vmul.f32 %v1593, %v1568
        %v1595 = vmul.f32 %v1594, %v1593
        %v1596 = vmul.f32 0.5, %v1595
        %v1597 = vsub.f32 1.5, %v1596
        %v1598 = vmul.f32 %v1593, %v1597
        %vm1599 = vweird.f32 %v1568
        %vm1600 = vweird.f32 %v1593
        %vm1601 = vmor %vm1599, %vm1600
        %v1602 = vsel %vm1601, %v1593, %v1598
        %v1603 = vrsqrt.pop %v1569
        %v1604 = vmul.f32 %v1603, %v1569
        %v1605 = vmul.f32 %v1604, %v1603
        %v1606 = vmul.f32 0.5, %v1605
        %v1607 = vsub.f32 1.5, %v1606
        %v1608 = vmul.f32 %v1603, %v1607
        %vm1609 = vweird.f32 %v1569
        %vm1610 = vweird.f32 %v1603
        %vm1611 = vmor %vm1609, %vm1610
        %v1612 = vsel %vm1611, %v1603, %v1608
        %v1613 = vrsqrt.pop %v1570
        %v1614 = vmul.f32 %v1613, %v1570
        %v1615 = vmul.f32 %v1614, %v1613
        %v1616 = vmul.f32 0.5, %v1615
        %v1617 = vsub.f32 1.5, %v1616
        %v1618 = vmul.f32 %v1613, %v1617
        %vm1619 = vweird.f32 %v1570
        %vm1620 = vweird.f32 %v1613
        %vm1621 = vmor %vm1619, %vm1620
        %v1622 = vsel %vm1621, %v1613, %v1618
        %v1623 = vrsqrt.pop %v1571
        %v1624 = vmul.f32 %v1623, %v1571
        %v1625 = vmul.f32 %v1624, %v1623
        %v1626 = vmul.f32 0.5, %v1625
        %v1627 = vsub.f32 1.5, %v1626
        %v1628 = vmul.f32 %v1623, %v1627
        %vm1629 = vweird.f32 %v1571
        %vm1630 = vweird.f32 %v1623
        %vm1631 = vmor %vm1629, %vm1630
        %v1632 = vsel %vm1631, %v1623, %v1628
        %v1633 = vrsqrt.pop %v1572
        %v1634 = vmul.f32 %v1633, %v1572
        %v1635 = vmul.f32 %v1634, %v1633
        %v1636 = vmul.f32 0.5, %v1635
        %v1637 = vsub.f32 1.5, %v1636
        %v1638 = vmul.f32 %v1633, %v1637
        %vm1639 = vweird.f32 %v1572
        %vm1640 = vweird.f32 %v1633
        %vm1641 = vmor %vm1639, %vm1640
        %v1642 = vsel %vm1641, %v1633, %v1638
        %v1643 = vrsqrt.pop %v1573
        %v1644 = vmul.f32 %v1643, %v1573
        %v1645 = vmul.f32 %v1644, %v1643
        %v1646 = vmul.f32 0.5, %v1645
        %v1647 = vsub.f32 1.5, %v1646
        %v1648 = vmul.f32 %v1643, %v1647
        %vm1649 = vweird.f32 %v1573
        %vm1650 = vweird.f32 %v1643
        %vm1651 = vmor %vm1649, %vm1650
        %v1652 = vsel %vm1651, %v1643, %v1648
        %v1653 = vrsqrt.pop %v1574
        %v1654 = vmul.f32 %v1653, %v1574
        %v1655 = vmul.f32 %v1654, %v1653
        %v1656 = vmul.f32 0.5, %v1655
        %v1657 = vsub.f32 1.5, %v1656
        %v1658 = vmul.f32 %v1653, %v1657
        %vm1659 = vweird.f32 %v1574
        %vm1660 = vweird.f32 %v1653
        %vm1661 = vmor %vm1659, %vm1660
        %v1662 = vsel %vm1661, %v1653, %v1658
        %v1663 = vrsqrt.pop %v1575
        %v1664 = vmul.f32 %v1663, %v1575
        %v1665 = vmul.f32 %v1664, %v1663
        %v1666 = vmul.f32 0.5, %v1665
        %v1667 = vsub.f32 1.5, %v1666
        %v1668 = vmul.f32 %v1663, %v1667
        %vm1669 = vweird.f32 %v1575
        %vm1670 = vweird.f32 %v1663
        %vm1671 = vmor %vm1669, %vm1670
        %v1672 = vsel %vm1671, %v1663, %v1668
        %v1673 = vrsqrt.pop %v1576
        %v1674 = vmul.f32 %v1673, %v1576
        %v1675 = vmul.f32 %v1674, %v1673
        %v1676 = vmul.f32 0.5, %v1675
        %v1677 = vsub.f32 1.5, %v1676
        %v1678 = vmul.f32 %v1673, %v1677
        %vm1679 = vweird.f32 %v1576
        %vm1680 = vweird.f32 %v1673
        %vm1681 = vmor %vm1679, %vm1680
        %v1682 = vsel %vm1681, %v1673, %v1678
        %v1683 = vrsqrt.pop %v1577
        %v1684 = vmul.f32 %v1683, %v1577
        %v1685 = vmul.f32 %v1684, %v1683
        %v1686 = vmul.f32 0.5, %v1685
        %v1687 = vsub.f32 1.5, %v1686
        %v1688 = vmul.f32 %v1683, %v1687
        %vm1689 = vweird.f32 %v1577
        %vm1690 = vweird.f32 %v1683
        %vm1691 = vmor %vm1689, %vm1690
        %v1692 = vsel %vm1691, %v1683, %v1688
        %v1693 = vrsqrt.pop %v1578
        %v1694 = vmul.f32 %v1693, %v1578
        %v1695 = vmul.f32 %v1694, %v1693
        %v1696 = vmul.f32 0.5, %v1695
        %v1697 = vsub.f32 1.5, %v1696
        %v1698 = vmul.f32 %v1693, %v1697
        %vm1699 = vweird.f32 %v1578
        %vm1700 = vweird.f32 %v1693
        %vm1701 = vmor %vm1699, %vm1700
        %v1702 = vsel %vm1701, %v1693, %v1698
        %v1703 = vrsqrt.pop %v1579
        %v1704 = vmul.f32 %v1703, %v1579
        %v1705 = vmul.f32 %v1704, %v1703
        %v1706 = vmul.f32 0.5, %v1705
        %v1707 = vsub.f32 1.5, %v1706
        %v1708 = vmul.f32 %v1703, %v1707
        %vm1709 = vweird.f32 %v1579
        %vm1710 = vweird.f32 %v1703
        %vm1711 = vmor %vm1709, %vm1710
        %v1712 = vsel %vm1711, %v1703, %v1708
        %v1713 = vrsqrt.pop %v1580
        %v1714 = vmul.f32 %v1713, %v1580
        %v1715 = vmul.f32 %v1714, %v1713
        %v1716 = vmul.f32 0.5, %v1715
        %v1717 = vsub.f32 1.5, %v1716
        %v1718 = vmul.f32 %v1713, %v1717
        %vm1719 = vweird.f32 %v1580
        %vm1720 = vweird.f32 %v1713
        %vm1721 = vmor %vm1719, %vm1720
        %v1722 = vsel %vm1721, %v1713, %v1718
        %v1723 = vrsqrt.pop %v1581
        %v1724 = vmul.f32 %v1723, %v1581
        %v1725 = vmul.f32 %v1724, %v1723
        %v1726 = vmul.f32 0.5, %v1725
        %v1727 = vsub.f32 1.5, %v1726
        %v1728 = vmul.f32 %v1723, %v1727
        %vm1729 = vweird.f32 %v1581
        %vm1730 = vweird.f32 %v1723
        %vm1731 = vmor %vm1729, %vm1730
        %v1732 = vsel %vm1731, %v1723, %v1728
        %v1733 = vrsqrt.pop %v1582
        %v1734 = vmul.f32 %v1733, %v1582
        %v1735 = vmul.f32 %v1734, %v1733
        %v1736 = vmul.f32 0.5, %v1735
        %v1737 = vsub.f32 1.5, %v1736
        %v1738 = vmul.f32 %v1733, %v1737
        %vm1739 = vweird.f32 %v1582
        %vm1740 = vweird.f32 %v1733
        %vm1741 = vmor %vm1739, %vm1740
        %v1742 = vsel %vm1741, %v1733, %v1738
        %v1743 = vmul.f32 %v977, %v1592
        %v1744 = vmul.f32 %v981, %v1602
        %v1745 = vmul.f32 %v985, %v1612
        %v1746 = vmul.f32 %v989, %v1622
        %v1747 = vmul.f32 %v993, %v1632
        %v1748 = vmul.f32 %v997, %v1642
        %v1749 = vmul.f32 %v1001, %v1652
        %v1750 = vmul.f32 %v1005, %v1662
        %v1751 = vmul.f32 %v1009, %v1672
        %v1752 = vmul.f32 %v1013, %v1682
        %v1753 = vmul.f32 %v1017, %v1692
        %v1754 = vmul.f32 %v1021, %v1702
        %v1755 = vmul.f32 %v1025, %v1712
        %v1756 = vmul.f32 %v1029, %v1722
        %v1757 = vmul.f32 %v1033, %v1732
        %v1758 = vmul.f32 %v1037, %v1742
        %v1759 = vmul.f32 %v978, %v978
        %v1760 = vmul.f32 %v982, %v982
        %v1761 = vmul.f32 %v986, %v986
        %v1762 = vmul.f32 %v990, %v990
        %v1763 = vmul.f32 %v994, %v994
        %v1764 = vmul.f32 %v998, %v998
        %v1765 = vmul.f32 %v1002, %v1002
        %v1766 = vmul.f32 %v1006, %v1006
        %v1767 = vmul.f32 %v1010, %v1010
        %v1768 = vmul.f32 %v1014, %v1014
        %v1769 = vmul.f32 %v1018, %v1018
        %v1770 = vmul.f32 %v1022, %v1022
        %v1771 = vmul.f32 %v1026, %v1026
        %v1772 = vmul.f32 %v1030, %v1030
        %v1773 = vmul.f32 %v1034, %v1034
        %v1774 = vmul.f32 %v1038, %v1038
        %1775 = vadd.xlane.f32.xlu0 %v1759
        %v1776 = vpop.xlane.xlu0 %1775
        %1777 = vadd.xlane.f32.xlu0 %v1760
        %v1778 = vpop.xlane.xlu0 %1777
        %1779 = vadd.xlane.f32.xlu0 %v1761
        %v1780 = vpop.xlane.xlu0 %1779
        %1781 = vadd.xlane.f32.xlu0 %v1762
        %v1782 = vpop.xlane.xlu0 %1781
        %1783 = vadd.xlane.f32.xlu0 %v1763
        %v1784 = vpop.xlane.xlu0 %1783
        %1785 = vadd.xlane.f32.xlu0 %v1764
        %v1786 = vpop.xlane.xlu0 %1785
        %1787 = vadd.xlane.f32.xlu0 %v1765
        %v1788 = vpop.xlane.xlu0 %1787
        %1789 = vadd.xlane.f32.xlu0 %v1766
        %v1790 = vpop.xlane.xlu0 %1789
        %1791 = vadd.xlane.f32.xlu0 %v1767
        %v1792 = vpop.xlane.xlu0 %1791
        %1793 = vadd.xlane.f32.xlu0 %v1768
        %v1794 = vpop.xlane.xlu0 %1793
        %1795 = vadd.xlane.f32.xlu0 %v1769
        %v1796 = vpop.xlane.xlu0 %1795
        %1797 = vadd.xlane.f32.xlu0 %v1770
        %v1798 = vpop.xlane.xlu0 %1797
        %1799 = vadd.xlane.f32.xlu0 %v1771
        %v1800 = vpop.xlane.xlu0 %1799
        %1801 = vadd.xlane.f32.xlu0 %v1772
        %v1802 = vpop.xlane.xlu0 %1801
        %1803 = vadd.xlane.f32.xlu0 %v1773
        %v1804 = vpop.xlane.xlu0 %1803
        %1805 = vadd.xlane.f32.xlu0 %v1774
        %v1806 = vpop.xlane.xlu0 %1805
        %v1807 = vadd.f32 %v1776, 1e-24
        %v1808 = vadd.f32 %v1778, 1e-24
        %v1809 = vadd.f32 %v1780, 1e-24
        %v1810 = vadd.f32 %v1782, 1e-24
        %v1811 = vadd.f32 %v1784, 1e-24
        %v1812 = vadd.f32 %v1786, 1e-24
        %v1813 = vadd.f32 %v1788, 1e-24
        %v1814 = vadd.f32 %v1790, 1e-24
        %v1815 = vadd.f32 %v1792, 1e-24
        %v1816 = vadd.f32 %v1794, 1e-24
        %v1817 = vadd.f32 %v1796, 1e-24
        %v1818 = vadd.f32 %v1798, 1e-24
        %v1819 = vadd.f32 %v1800, 1e-24
        %v1820 = vadd.f32 %v1802, 1e-24
        %v1821 = vadd.f32 %v1804, 1e-24
        %v1822 = vadd.f32 %v1806, 1e-24
        %v1823 = vrsqrt.pop %v1807
        %v1824 = vmul.f32 %v1823, %v1807
        %v1825 = vmul.f32 %v1824, %v1823
        %v1826 = vmul.f32 0.5, %v1825
        %v1827 = vsub.f32 1.5, %v1826
        %v1828 = vmul.f32 %v1823, %v1827
        %vm1829 = vweird.f32 %v1807
        %vm1830 = vweird.f32 %v1823
        %vm1831 = vmor %vm1829, %vm1830
        %v1832 = vsel %vm1831, %v1823, %v1828
        %v1833 = vrsqrt.pop %v1808
        %v1834 = vmul.f32 %v1833, %v1808
        %v1835 = vmul.f32 %v1834, %v1833
        %v1836 = vmul.f32 0.5, %v1835
        %v1837 = vsub.f32 1.5, %v1836
        %v1838 = vmul.f32 %v1833, %v1837
        %vm1839 = vweird.f32 %v1808
        %vm1840 = vweird.f32 %v1833
        %vm1841 = vmor %vm1839, %vm1840
        %v1842 = vsel %vm1841, %v1833, %v1838
        %v1843 = vrsqrt.pop %v1809
        %v1844 = vmul.f32 %v1843, %v1809
        %v1845 = vmul.f32 %v1844, %v1843
        %v1846 = vmul.f32 0.5, %v1845
        %v1847 = vsub.f32 1.5, %v1846
        %v1848 = vmul.f32 %v1843, %v1847
        %vm1849 = vweird.f32 %v1809
        %vm1850 = vweird.f32 %v1843
        %vm1851 = vmor %vm1849, %vm1850
        %v1852 = vsel %vm1851, %v1843, %v1848
        %v1853 = vrsqrt.pop %v1810
        %v1854 = vmul.f32 %v1853, %v1810
        %v1855 = vmul.f32 %v1854, %v1853
        %v1856 = vmul.f32 0.5, %v1855
        %v1857 = vsub.f32 1.5, %v1856
        %v1858 = vmul.f32 %v1853, %v1857
        %vm1859 = vweird.f32 %v1810
        %vm1860 = vweird.f32 %v1853
        %vm1861 = vmor %vm1859, %vm1860
        %v1862 = vsel %vm1861, %v1853, %v1858
        %v1863 = vrsqrt.pop %v1811
        %v1864 = vmul.f32 %v1863, %v1811
        %v1865 = vmul.f32 %v1864, %v1863
        %v1866 = vmul.f32 0.5, %v1865
        %v1867 = vsub.f32 1.5, %v1866
        %v1868 = vmul.f32 %v1863, %v1867
        %vm1869 = vweird.f32 %v1811
        %vm1870 = vweird.f32 %v1863
        %vm1871 = vmor %vm1869, %vm1870
        %v1872 = vsel %vm1871, %v1863, %v1868
        %v1873 = vrsqrt.pop %v1812
        %v1874 = vmul.f32 %v1873, %v1812
        %v1875 = vmul.f32 %v1874, %v1873
        %v1876 = vmul.f32 0.5, %v1875
        %v1877 = vsub.f32 1.5, %v1876
        %v1878 = vmul.f32 %v1873, %v1877
        %vm1879 = vweird.f32 %v1812
        %vm1880 = vweird.f32 %v1873
        %vm1881 = vmor %vm1879, %vm1880
        %v1882 = vsel %vm1881, %v1873, %v1878
        %v1883 = vrsqrt.pop %v1813
        %v1884 = vmul.f32 %v1883, %v1813
        %v1885 = vmul.f32 %v1884, %v1883
        %v1886 = vmul.f32 0.5, %v1885
        %v1887 = vsub.f32 1.5, %v1886
        %v1888 = vmul.f32 %v1883, %v1887
        %vm1889 = vweird.f32 %v1813
        %vm1890 = vweird.f32 %v1883
        %vm1891 = vmor %vm1889, %vm1890
        %v1892 = vsel %vm1891, %v1883, %v1888
        %v1893 = vrsqrt.pop %v1814
        %v1894 = vmul.f32 %v1893, %v1814
        %v1895 = vmul.f32 %v1894, %v1893
        %v1896 = vmul.f32 0.5, %v1895
        %v1897 = vsub.f32 1.5, %v1896
        %v1898 = vmul.f32 %v1893, %v1897
        %vm1899 = vweird.f32 %v1814
        %vm1900 = vweird.f32 %v1893
        %vm1901 = vmor %vm1899, %vm1900
        %v1902 = vsel %vm1901, %v1893, %v1898
        %v1903 = vrsqrt.pop %v1815
        %v1904 = vmul.f32 %v1903, %v1815
        %v1905 = vmul.f32 %v1904, %v1903
        %v1906 = vmul.f32 0.5, %v1905
        %v1907 = vsub.f32 1.5, %v1906
        %v1908 = vmul.f32 %v1903, %v1907
        %vm1909 = vweird.f32 %v1815
        %vm1910 = vweird.f32 %v1903
        %vm1911 = vmor %vm1909, %vm1910
        %v1912 = vsel %vm1911, %v1903, %v1908
        %v1913 = vrsqrt.pop %v1816
        %v1914 = vmul.f32 %v1913, %v1816
        %v1915 = vmul.f32 %v1914, %v1913
        %v1916 = vmul.f32 0.5, %v1915
        %v1917 = vsub.f32 1.5, %v1916
        %v1918 = vmul.f32 %v1913, %v1917
        %vm1919 = vweird.f32 %v1816
        %vm1920 = vweird.f32 %v1913
        %vm1921 = vmor %vm1919, %vm1920
        %v1922 = vsel %vm1921, %v1913, %v1918
        %v1923 = vrsqrt.pop %v1817
        %v1924 = vmul.f32 %v1923, %v1817
        %v1925 = vmul.f32 %v1924, %v1923
        %v1926 = vmul.f32 0.5, %v1925
        %v1927 = vsub.f32 1.5, %v1926
        %v1928 = vmul.f32 %v1923, %v1927
        %vm1929 = vweird.f32 %v1817
        %vm1930 = vweird.f32 %v1923
        %vm1931 = vmor %vm1929, %vm1930
        %v1932 = vsel %vm1931, %v1923, %v1928
        %v1933 = vrsqrt.pop %v1818
        %v1934 = vmul.f32 %v1933, %v1818
        %v1935 = vmul.f32 %v1934, %v1933
        %v1936 = vmul.f32 0.5, %v1935
        %v1937 = vsub.f32 1.5, %v1936
        %v1938 = vmul.f32 %v1933, %v1937
        %vm1939 = vweird.f32 %v1818
        %vm1940 = vweird.f32 %v1933
        %vm1941 = vmor %vm1939, %vm1940
        %v1942 = vsel %vm1941, %v1933, %v1938
        %v1943 = vrsqrt.pop %v1819
        %v1944 = vmul.f32 %v1943, %v1819
        %v1945 = vmul.f32 %v1944, %v1943
        %v1946 = vmul.f32 0.5, %v1945
        %v1947 = vsub.f32 1.5, %v1946
        %v1948 = vmul.f32 %v1943, %v1947
        %vm1949 = vweird.f32 %v1819
        %vm1950 = vweird.f32 %v1943
        %vm1951 = vmor %vm1949, %vm1950
        %v1952 = vsel %vm1951, %v1943, %v1948
        %v1953 = vrsqrt.pop %v1820
        %v1954 = vmul.f32 %v1953, %v1820
        %v1955 = vmul.f32 %v1954, %v1953
        %v1956 = vmul.f32 0.5, %v1955
        %v1957 = vsub.f32 1.5, %v1956
        %v1958 = vmul.f32 %v1953, %v1957
        %vm1959 = vweird.f32 %v1820
        %vm1960 = vweird.f32 %v1953
        %vm1961 = vmor %vm1959, %vm1960
        %v1962 = vsel %vm1961, %v1953, %v1958
        %v1963 = vrsqrt.pop %v1821
        %v1964 = vmul.f32 %v1963, %v1821
        %v1965 = vmul.f32 %v1964, %v1963
        %v1966 = vmul.f32 0.5, %v1965
        %v1967 = vsub.f32 1.5, %v1966
        %v1968 = vmul.f32 %v1963, %v1967
        %vm1969 = vweird.f32 %v1821
        %vm1970 = vweird.f32 %v1963
        %vm1971 = vmor %vm1969, %vm1970
        %v1972 = vsel %vm1971, %v1963, %v1968
        %v1973 = vrsqrt.pop %v1822
        %v1974 = vmul.f32 %v1973, %v1822
        %v1975 = vmul.f32 %v1974, %v1973
        %v1976 = vmul.f32 0.5, %v1975
        %v1977 = vsub.f32 1.5, %v1976
        %v1978 = vmul.f32 %v1973, %v1977
        %vm1979 = vweird.f32 %v1822
        %vm1980 = vweird.f32 %v1973
        %vm1981 = vmor %vm1979, %vm1980
        %v1982 = vsel %vm1981, %v1973, %v1978
        %v1983 = vmul.f32 %v978, %v1832
        %v1984 = vmul.f32 %v982, %v1842
        %v1985 = vmul.f32 %v986, %v1852
        %v1986 = vmul.f32 %v990, %v1862
        %v1987 = vmul.f32 %v994, %v1872
        %v1988 = vmul.f32 %v998, %v1882
        %v1989 = vmul.f32 %v1002, %v1892
        %v1990 = vmul.f32 %v1006, %v1902
        %v1991 = vmul.f32 %v1010, %v1912
        %v1992 = vmul.f32 %v1014, %v1922
        %v1993 = vmul.f32 %v1018, %v1932
        %v1994 = vmul.f32 %v1022, %v1942
        %v1995 = vmul.f32 %v1026, %v1952
        %v1996 = vmul.f32 %v1030, %v1962
        %v1997 = vmul.f32 %v1034, %v1972
        %v1998 = vmul.f32 %v1038, %v1982
        %v1999 = vlaneseq
        %v2000 = vshrl.u32 %v1999, 7
        %v2001 = vadd.s32 %v2000, 8
        %v2002 = vadd.s32 %v2000, 16
        %v2003 = vadd.s32 %v2000, 24
        %v2004 = vadd.s32 %v2000, 32
        %v2005 = vadd.s32 %v2000, 40
        %v2006 = vadd.s32 %v2000, 48
        %v2007 = vadd.s32 %v2000, 56
        %v2008 = vadd.s32 %v2000, 64
        %v2009 = vadd.s32 %v2000, 72
        %v2010 = vadd.s32 %v2000, 80
        %v2011 = vadd.s32 %v2000, 88
        %v2012 = vadd.s32 %v2000, 96
        %v2013 = vadd.s32 %v2000, 104
        %v2014 = vadd.s32 %v2000, 112
        %v2015 = vadd.s32 %v2000, 120
        %vm2016 = vcmp.lt.s32.totalorder %v2000, 100
        %vm2017 = vcmp.lt.s32.totalorder %v2001, 100
        %vm2018 = vcmp.lt.s32.totalorder %v2002, 100
        %vm2019 = vcmp.lt.s32.totalorder %v2003, 100
        %vm2020 = vcmp.lt.s32.totalorder %v2004, 100
        %vm2021 = vcmp.lt.s32.totalorder %v2005, 100
        %vm2022 = vcmp.lt.s32.totalorder %v2006, 100
        %vm2023 = vcmp.lt.s32.totalorder %v2007, 100
        %vm2024 = vcmp.lt.s32.totalorder %v2008, 100
        %vm2025 = vcmp.lt.s32.totalorder %v2009, 100
        %vm2026 = vcmp.lt.s32.totalorder %v2010, 100
        %vm2027 = vcmp.lt.s32.totalorder %v2011, 100
        %vm2028 = vcmp.lt.s32.totalorder %v2012, 100
        %vm2029 = vcmp.lt.s32.totalorder %v2013, 100
        %vm2030 = vcmp.lt.s32.totalorder %v2014, 100
        %vm2031 = vcmp.lt.s32.totalorder %v2015, 100
        %v2032 = vlaneseq
        %v2033 = vand.u32 %v2032, 127
        %vm2034 = vcmp.lt.s32.totalorder %v2033, 100
        %v2035 = vld [vmem:[%s7] sm:$0x3]
        %2036 = vxpose.xlu0.b32.start [1/16] %v594, 128
        %2037 = vxpose.xlu0.b32.cont [2/16] %v597, 128
        %2038 = vxpose.xlu0.b32.cont [3/16] %v600, 128
        %2039 = vxpose.xlu0.b32.cont [4/16] %v603, 128
        %2040 = vxpose.xlu0.b32.cont [5/16] %v606, 128
        %2041 = vxpose.xlu0.b32.cont [6/16] %v609, 128
        %2042 = vxpose.xlu0.b32.cont [7/16] %v612, 128
        %2043 = vxpose.xlu0.b32.cont [8/16] %v615, 128
        %2044 = vxpose.xlu0.b32.cont [9/16] 0.0, 128
        %2045 = vxpose.xlu0.b32.cont [10/16] 0.0, 128
        %2046 = vxpose.xlu0.b32.cont [11/16] 0.0, 128
        %2047 = vxpose.xlu0.b32.cont [12/16] 0.0, 128
        %2048 = vxpose.xlu0.b32.cont [13/16] 0.0, 128
        %2049 = vxpose.xlu0.b32.cont [14/16] 0.0, 128
        %2050 = vxpose.xlu0.b32.cont [15/16] 0.0, 128
        %2051 = vxpose.xlu0.b32.end [16/16] 0.0, 128
        %v2052 = vpop.trf.xlu0
        %v2053 = vpop.trf.xlu0
        %v2054 = vpop.trf.xlu0
        %v2055 = vpop.trf.xlu0
        %v2056 = vpop.trf.xlu0
        %v2057 = vpop.trf.xlu0
        %v2058 = vpop.trf.xlu0
        %v2059 = vpop.trf.xlu0
        %v2060 = vpop.trf.xlu0
        %v2061 = vpop.trf.xlu0
        %v2062 = vpop.trf.xlu0
        %v2063 = vpop.trf.xlu0
        %v2064 = vpop.trf.xlu0
        %v2065 = vpop.trf.xlu0
        %v2066 = vpop.trf.xlu0
        %v2067 = vpop.trf.xlu0
        %vm2068 = vcmask 523264
        %v2070 = vsel %vm2068, %v2052, 0
        %v2073 = vsel %vm2068, %v2053, 0
        %2075 = vmatpush.msra.mxu0 0.0
        %2076 = vmatpush.msra.mxu0 0.0
        %2077 = vmatpush.msra.mxu0 0.0
        %2078 = vmatpush.msra.mxu0 0.0
        %2079 = vmatpush.msra.mxu0 0.0
        %2080 = vmatpush.msra.mxu0 0.0
        %2081 = vmatpush.msra.mxu0 0.0
        %2082 = vmatpush.msra.mxu0 0.0
        %2083 = vmatpush.msra.mxu0 %v1270
        %2084 = vmatpush.msra.mxu0 %v1269
        %2085 = vmatpush.msra.mxu0 %v1268
        %2086 = vmatpush.msra.mxu0 %v1267
        %2087 = vmatpush.msra.mxu0 %v1266
        %2088 = vmatpush.msra.mxu0 %v1265
        %2089 = vmatpush.msra.mxu0 %v1264
        %2090 = vmatpush.msra.mxu0 %v1263
        %2091 = vmatmul.f32.gmra.mxu0 %v2070
        %v2092 = vpop.f32.mrf.mxu0
        %v2093 = vadd.f32 0.0, %v2092
        %2094 = vmatmul.f32.gmra.mxu0 %v2073
        %v2095 = vpop.f32.mrf.mxu0
        %v2096 = vadd.f32 0.0, %v2095
        %2097 = vdwg.mxu0
        %2098 = vmatpush.msra.mxu0 0.0
        %2099 = vmatpush.msra.mxu0 0.0
        %2100 = vmatpush.msra.mxu0 0.0
        %2101 = vmatpush.msra.mxu0 0.0
        %2102 = vmatpush.msra.mxu0 0.0
        %2103 = vmatpush.msra.mxu0 0.0
        %2104 = vmatpush.msra.mxu0 0.0
        %2105 = vmatpush.msra.mxu0 0.0
        %2106 = vmatpush.msra.mxu0 %v1510
        %2107 = vmatpush.msra.mxu0 %v1509
        %2108 = vmatpush.msra.mxu0 %v1508
        %2109 = vmatpush.msra.mxu0 %v1507
        %2110 = vmatpush.msra.mxu0 %v1506
        %2111 = vmatpush.msra.mxu0 %v1505
        %2112 = vmatpush.msra.mxu0 %v1504
        %2113 = vmatpush.msra.mxu0 %v1503
        %2114 = vmatmul.f32.gmra.mxu0 %v2070
        %v2115 = vpop.f32.mrf.mxu0
        %v2116 = vadd.f32 0.0, %v2115
        %2117 = vmatmul.f32.gmra.mxu0 %v2073
        %v2118 = vpop.f32.mrf.mxu0
        %v2119 = vadd.f32 0.0, %v2118
        %2120 = vdwg.mxu0
        %v2121 = vmul.f32 %v2093, %v2093
        %v2122 = vmul.f32 %v2116, %v2116
        %v2123 = vmul.f32 %v2096, %v2096
        %v2124 = vmul.f32 %v2119, %v2119
        %v2125 = vadd.f32 %v2121, %v2123
        %v2126 = vrot.slane %v2125, 4
        %v2127 = vadd.f32 %v2125, %v2126
        %v2128 = vrot.slane %v2127, 2
        %v2129 = vadd.f32 %v2127, %v2128
        %v2130 = vrot.slane %v2129, 1
        %v2131 = vadd.f32 %v2129, %v2130
        %v2132 = vadd.f32 %v2122, %v2124
        %v2133 = vrot.slane %v2132, 4
        %v2134 = vadd.f32 %v2132, %v2133
        %v2135 = vrot.slane %v2134, 2
        %v2136 = vadd.f32 %v2134, %v2135
        %v2137 = vrot.slane %v2136, 1
        %v2138 = vadd.f32 %v2136, %v2137
        %v2139 = vadd.f32 %v2131, 1e-24
        %v2140 = vadd.f32 %v2138, 1e-24
        %v2141 = vrsqrt.pop %v2139
        %v2142 = vmul.f32 %v2141, %v2139
        %v2143 = vmul.f32 %v2142, %v2141
        %v2144 = vmul.f32 0.5, %v2143
        %v2145 = vsub.f32 1.5, %v2144
        %v2146 = vmul.f32 %v2141, %v2145
        %vm2147 = vweird.f32 %v2139
        %vm2148 = vweird.f32 %v2141
        %vm2149 = vmor %vm2147, %vm2148
        %v2150 = vsel %vm2149, %v2141, %v2146
        %v2151 = vrsqrt.pop %v2140
        %v2152 = vmul.f32 %v2151, %v2140
        %v2153 = vmul.f32 %v2152, %v2151
        %v2154 = vmul.f32 0.5, %v2153
        %v2155 = vsub.f32 1.5, %v2154
        %v2156 = vmul.f32 %v2151, %v2155
        %vm2157 = vweird.f32 %v2140
        %vm2158 = vweird.f32 %v2151
        %vm2159 = vmor %vm2157, %vm2158
        %v2160 = vsel %vm2159, %v2151, %v2156
        %v2161 = vmul.f32 %v2093, %v2150
        %v2162 = vmul.f32 %v2116, %v2160
        %v2163 = vmul.f32 %v2096, %v2150
        %v2164 = vmul.f32 %v2119, %v2160
        %2165 = vxpose.xlu0.b32.start [1/16] %v2161, 128
        %2166 = vxpose.xlu0.b32.cont [2/16] %v2163, 128
        %2167 = vxpose.xlu0.b32.cont [3/16] 0.0, 128
        %2168 = vxpose.xlu0.b32.cont [4/16] 0.0, 128
        %2169 = vxpose.xlu0.b32.cont [5/16] 0.0, 128
        %2170 = vxpose.xlu0.b32.cont [6/16] 0.0, 128
        %2171 = vxpose.xlu0.b32.cont [7/16] 0.0, 128
        %2172 = vxpose.xlu0.b32.cont [8/16] 0.0, 128
        %2173 = vxpose.xlu0.b32.cont [9/16] 0.0, 128
        %2174 = vxpose.xlu0.b32.cont [10/16] 0.0, 128
        %2175 = vxpose.xlu0.b32.cont [11/16] 0.0, 128
        %2176 = vxpose.xlu0.b32.cont [12/16] 0.0, 128
        %2177 = vxpose.xlu0.b32.cont [13/16] 0.0, 128
        %2178 = vxpose.xlu0.b32.cont [14/16] 0.0, 128
        %2179 = vxpose.xlu0.b32.cont [15/16] 0.0, 128
        %2180 = vxpose.xlu0.b32.end [16/16] 0.0, 128
        %v2181 = vpop.trf.xlu0
        %v2182 = vpop.trf.xlu0
        %v2183 = vpop.trf.xlu0
        %v2184 = vpop.trf.xlu0
        %v2185 = vpop.trf.xlu0
        %v2186 = vpop.trf.xlu0
        %v2187 = vpop.trf.xlu0
        %v2188 = vpop.trf.xlu0
        %v2189 = vpop.trf.xlu0
        %v2190 = vpop.trf.xlu0
        %v2191 = vpop.trf.xlu0
        %v2192 = vpop.trf.xlu0
        %v2193 = vpop.trf.xlu0
        %v2194 = vpop.trf.xlu0
        %v2195 = vpop.trf.xlu0
        %v2196 = vpop.trf.xlu0
        %vm2197 = vcmask 130048
        %v2199 = vsel %vm2197, %v2181, 0
        %v2202 = vsel %vm2197, %v2182, 0
        %v2205 = vsel %vm2197, %v2183, 0
        %v2208 = vsel %vm2197, %v2184, 0
        %v2211 = vsel %vm2197, %v2185, 0
        %v2214 = vsel %vm2197, %v2186, 0
        %v2217 = vsel %vm2197, %v2187, 0
        %v2220 = vsel %vm2197, %v2188, 0
        %v2223 = vsel %vm2197, %v2189, 0
        %v2226 = vsel %vm2197, %v2190, 0
        %v2229 = vsel %vm2197, %v2191, 0
        %v2232 = vsel %vm2197, %v2192, 0
        %v2235 = vsel %vm2197, %v2193, 0
        %v2238 = vsel %vm2197, %v2194, 0
        %v2241 = vsel %vm2197, %v2195, 0
        %v2244 = vsel %vm2197, %v2196, 0
        %2246 = vmatpush.msra.mxu0 0.0
        %2247 = vmatpush.msra.mxu0 0.0
        %2248 = vmatpush.msra.mxu0 0.0
        %2249 = vmatpush.msra.mxu0 0.0
        %2250 = vmatpush.msra.mxu0 0.0
        %2251 = vmatpush.msra.mxu0 0.0
        %2252 = vmatpush.msra.mxu0 0.0
        %2253 = vmatpush.msra.mxu0 0.0
        %2254 = vmatpush.msra.mxu0 0.0
        %2255 = vmatpush.msra.mxu0 0.0
        %2256 = vmatpush.msra.mxu0 0.0
        %2257 = vmatpush.msra.mxu0 0.0
        %2258 = vmatpush.msra.mxu0 0.0
        %2259 = vmatpush.msra.mxu0 0.0
        %2260 = vmatpush.msra.mxu0 %v2163
        %2261 = vmatpush.msra.mxu0 %v2161
        %2262 = vmatmul.f32.gmra.mxu0 %v2199
        %v2263 = vpop.f32.mrf.mxu0
        %v2264 = vadd.f32 0.0, %v2263
        %2265 = vmatmul.f32.gmra.mxu0 %v2202
        %v2266 = vpop.f32.mrf.mxu0
        %v2267 = vadd.f32 0.0, %v2266
        %2268 = vmatmul.f32.gmra.mxu0 %v2205
        %v2269 = vpop.f32.mrf.mxu0
        %v2270 = vadd.f32 0.0, %v2269
        %2271 = vmatmul.f32.gmra.mxu0 %v2208
        %v2272 = vpop.f32.mrf.mxu0
        %v2273 = vadd.f32 0.0, %v2272
        %2274 = vmatmul.f32.gmra.mxu0 %v2211
        %v2275 = vpop.f32.mrf.mxu0
        %v2276 = vadd.f32 0.0, %v2275
        %2277 = vmatmul.f32.gmra.mxu0 %v2214
        %v2278 = vpop.f32.mrf.mxu0
        %v2279 = vadd.f32 0.0, %v2278
        %2280 = vmatmul.f32.gmra.mxu0 %v2217
        %v2281 = vpop.f32.mrf.mxu0
        %v2282 = vadd.f32 0.0, %v2281
        %2283 = vmatmul.f32.gmra.mxu0 %v2220
        %v2284 = vpop.f32.mrf.mxu0
        %v2285 = vadd.f32 0.0, %v2284
        %2286 = vmatmul.f32.gmra.mxu0 %v2223
        %v2287 = vpop.f32.mrf.mxu0
        %v2288 = vadd.f32 0.0, %v2287
        %2289 = vmatmul.f32.gmra.mxu0 %v2226
        %v2290 = vpop.f32.mrf.mxu0
        %v2291 = vadd.f32 0.0, %v2290
        %2292 = vmatmul.f32.gmra.mxu0 %v2229
        %v2293 = vpop.f32.mrf.mxu0
        %v2294 = vadd.f32 0.0, %v2293
        %2295 = vmatmul.f32.gmra.mxu0 %v2232
        %v2296 = vpop.f32.mrf.mxu0
        %v2297 = vadd.f32 0.0, %v2296
        %2298 = vmatmul.f32.gmra.mxu0 %v2235
        %v2299 = vpop.f32.mrf.mxu0
        %v2300 = vadd.f32 0.0, %v2299
        %2301 = vmatmul.f32.gmra.mxu0 %v2238
        %v2302 = vpop.f32.mrf.mxu0
        %v2303 = vadd.f32 0.0, %v2302
        %2304 = vmatmul.f32.gmra.mxu0 %v2241
        %v2305 = vpop.f32.mrf.mxu0
        %v2306 = vadd.f32 0.0, %v2305
        %2307 = vmatmul.f32.gmra.mxu0 %v2244
        %v2308 = vpop.f32.mrf.mxu0
        %v2309 = vadd.f32 0.0, %v2308
        %2310 = vdwg.mxu0
        %v2311 = vsel %vm2016, %v2264, -1e+30
        %v2312 = vsel %vm2017, %v2267, -1e+30
        %v2313 = vsel %vm2018, %v2270, -1e+30
        %v2314 = vsel %vm2019, %v2273, -1e+30
        %v2315 = vsel %vm2020, %v2276, -1e+30
        %v2316 = vsel %vm2021, %v2279, -1e+30
        %v2317 = vsel %vm2022, %v2282, -1e+30
        %v2318 = vsel %vm2023, %v2285, -1e+30
        %v2319 = vsel %vm2024, %v2288, -1e+30
        %v2320 = vsel %vm2025, %v2291, -1e+30
        %v2321 = vsel %vm2026, %v2294, -1e+30
        %v2322 = vsel %vm2027, %v2297, -1e+30
        %v2323 = vsel %vm2028, %v2300, -1e+30
        %v2324 = vsel %vm2029, %v2303, -1e+30
        %v2325 = vsel %vm2030, %v2306, -1e+30
        %v2326 = vsel %vm2031, %v2309, -1e+30
        %v2327 = vmax.f32 %v2311, %v2315
        %v2328 = vmax.f32 %v2312, %v2316
        %v2329 = vmax.f32 %v2313, %v2317
        %v2330 = vmax.f32 %v2314, %v2318
        %v2331 = vmax.f32 %v2327, %v2319
        %v2332 = vmax.f32 %v2328, %v2320
        %v2333 = vmax.f32 %v2329, %v2321
        %v2334 = vmax.f32 %v2330, %v2322
        %v2335 = vmax.f32 %v2331, %v2323
        %v2336 = vmax.f32 %v2332, %v2324
        %v2337 = vmax.f32 %v2333, %v2325
        %v2338 = vmax.f32 %v2334, %v2326
        %v2339 = vmax.f32 %v2335, %v2336
        %v2340 = vmax.f32 %v2337, %v2338
        %v2341 = vmax.f32 %v2339, %v2340
        %v2342 = vrot.slane %v2341, 4
        %v2343 = vmax.f32 %v2341, %v2342
        %v2344 = vrot.slane %v2343, 2
        %v2345 = vmax.f32 %v2343, %v2344
        %v2346 = vrot.slane %v2345, 1
        %v2347 = vmax.f32 %v2345, %v2346
        %v2348 = vsub.f32 %v2311, %v2347
        %v2349 = vsub.f32 %v2312, %v2347
        %v2350 = vsub.f32 %v2313, %v2347
        %v2351 = vsub.f32 %v2314, %v2347
        %v2352 = vsub.f32 %v2315, %v2347
        %v2353 = vsub.f32 %v2316, %v2347
        %v2354 = vsub.f32 %v2317, %v2347
        %v2355 = vsub.f32 %v2318, %v2347
        %v2356 = vsub.f32 %v2319, %v2347
        %v2357 = vsub.f32 %v2320, %v2347
        %v2358 = vsub.f32 %v2321, %v2347
        %v2359 = vsub.f32 %v2322, %v2347
        %v2360 = vsub.f32 %v2323, %v2347
        %v2361 = vsub.f32 %v2324, %v2347
        %v2362 = vsub.f32 %v2325, %v2347
        %v2363 = vsub.f32 %v2326, %v2347
        %v2364 = vmul.f32 %v2348, 1.442695
        %v2365 = vpow.pop %v2364
        %v2366 = vmul.f32 %v2349, 1.442695
        %v2367 = vpow.pop %v2366
        %v2368 = vmul.f32 %v2350, 1.442695
        %v2369 = vpow.pop %v2368
        %v2370 = vmul.f32 %v2351, 1.442695
        %v2371 = vpow.pop %v2370
        %v2372 = vmul.f32 %v2352, 1.442695
        %v2373 = vpow.pop %v2372
        %v2374 = vmul.f32 %v2353, 1.442695
        %v2375 = vpow.pop %v2374
        %v2376 = vmul.f32 %v2354, 1.442695
        %v2377 = vpow.pop %v2376
        %v2378 = vmul.f32 %v2355, 1.442695
        %v2379 = vpow.pop %v2378
        %v2380 = vmul.f32 %v2356, 1.442695
        %v2381 = vpow.pop %v2380
        %v2382 = vmul.f32 %v2357, 1.442695
        %v2383 = vpow.pop %v2382
        %v2384 = vmul.f32 %v2358, 1.442695
        %v2385 = vpow.pop %v2384
        %v2386 = vmul.f32 %v2359, 1.442695
        %v2387 = vpow.pop %v2386
        %v2388 = vmul.f32 %v2360, 1.442695
        %v2389 = vpow.pop %v2388
        %v2390 = vmul.f32 %v2361, 1.442695
        %v2391 = vpow.pop %v2390
        %v2392 = vmul.f32 %v2362, 1.442695
        %v2393 = vpow.pop %v2392
        %v2394 = vmul.f32 %v2363, 1.442695
        %v2395 = vpow.pop %v2394
        %v2396 = vadd.f32 %v2365, %v2367
        %v2397 = vadd.f32 %v2396, %v2369
        %v2398 = vadd.f32 %v2397, %v2371
        %v2399 = vadd.f32 %v2398, %v2373
        %v2400 = vadd.f32 %v2399, %v2375
        %v2401 = vadd.f32 %v2400, %v2377
        %v2402 = vadd.f32 %v2401, %v2379
        %v2403 = vadd.f32 %v2402, %v2381
        %v2404 = vadd.f32 %v2403, %v2383
        %v2405 = vadd.f32 %v2404, %v2385
        %v2406 = vadd.f32 %v2405, %v2387
        %v2407 = vadd.f32 %v2406, %v2389
        %v2408 = vadd.f32 %v2407, %v2391
        %v2409 = vadd.f32 %v2408, %v2393
        %v2410 = vadd.f32 %v2409, %v2395
        %v2411 = vrot.slane %v2410, 4
        %v2412 = vadd.f32 %v2410, %v2411
        %v2413 = vrot.slane %v2412, 2
        %v2414 = vadd.f32 %v2412, %v2413
        %v2415 = vrot.slane %v2414, 1
        %v2416 = vadd.f32 %v2414, %v2415
        %v2417 = vrcp.pop %v2416
        %v2418 = vmul.f32 %v2365, %v2417
        %v2419 = vmul.f32 %v2367, %v2417
        %v2420 = vmul.f32 %v2369, %v2417
        %v2421 = vmul.f32 %v2371, %v2417
        %v2422 = vmul.f32 %v2373, %v2417
        %v2423 = vmul.f32 %v2375, %v2417
        %v2424 = vmul.f32 %v2377, %v2417
        %v2425 = vmul.f32 %v2379, %v2417
        %v2426 = vmul.f32 %v2381, %v2417
        %v2427 = vmul.f32 %v2383, %v2417
        %v2428 = vmul.f32 %v2385, %v2417
        %v2429 = vmul.f32 %v2387, %v2417
        %v2430 = vmul.f32 %v2389, %v2417
        %v2431 = vmul.f32 %v2391, %v2417
        %v2432 = vmul.f32 %v2393, %v2417
        %v2433 = vmul.f32 %v2395, %v2417
        %v2434 = vsel %vm2034, %v2418, 0.0
        %v2435 = vsel %vm2034, %v2419, 0.0
        %v2436 = vsel %vm2034, %v2420, 0.0
        %v2437 = vsel %vm2034, %v2421, 0.0
        %v2438 = vsel %vm2034, %v2422, 0.0
        %v2439 = vsel %vm2034, %v2423, 0.0
        %v2440 = vsel %vm2034, %v2424, 0.0
        %v2441 = vsel %vm2034, %v2425, 0.0
        %v2442 = vsel %vm2034, %v2426, 0.0
        %v2443 = vsel %vm2034, %v2427, 0.0
        %v2444 = vsel %vm2034, %v2428, 0.0
        %v2445 = vsel %vm2034, %v2429, 0.0
        %v2446 = vsel %vm2034, %v2430, 0.0
        %v2447 = vsel %vm2034, %v2431, 0.0
        %v2448 = vsel %vm2034, %v2432, 0.0
        %v2449 = vsel %vm2034, %v2433, 0.0
        %2450 = vmatpush.msra.mxu0 %v2449
        %2451 = vmatpush.msra.mxu0 %v2448
        %2452 = vmatpush.msra.mxu0 %v2447
        %2453 = vmatpush.msra.mxu0 %v2446
        %2454 = vmatpush.msra.mxu0 %v2445
        %2455 = vmatpush.msra.mxu0 %v2444
        %2456 = vmatpush.msra.mxu0 %v2443
        %2457 = vmatpush.msra.mxu0 %v2442
        %2458 = vmatpush.msra.mxu0 %v2441
        %2459 = vmatpush.msra.mxu0 %v2440
        %2460 = vmatpush.msra.mxu0 %v2439
        %2461 = vmatpush.msra.mxu0 %v2438
        %2462 = vmatpush.msra.mxu0 %v2437
        %2463 = vmatpush.msra.mxu0 %v2436
        %2464 = vmatpush.msra.mxu0 %v2435
        %2465 = vmatpush.msra.mxu0 %v2434
        %2466 = vmatmul.f32.gmra.mxu0 %v2093
        %v2467 = vpop.f32.mrf.mxu0
        %v2468 = vadd.f32 0.0, %v2467
        %2469 = vmatmul.f32.gmra.mxu0 %v2096
        %v2470 = vpop.f32.mrf.mxu0
        %v2471 = vadd.f32 0.0, %v2470
        %2472 = vdwg.mxu0
        %v2473 = vld [vmem:[%s6] sm:$0xff]
        %v2474 = vld [vmem:[%s6 + $0x8] sm:$0xff]
        %2475 = vxpose.xlu0.b32.start [1/16] %v2468, 128
        %2476 = vxpose.xlu0.b32.cont [2/16] %v2471, 128
        %2477 = vxpose.xlu0.b32.cont [3/16] 0.0, 128
        %2478 = vxpose.xlu0.b32.cont [4/16] 0.0, 128
        %2479 = vxpose.xlu0.b32.cont [5/16] 0.0, 128
        %2480 = vxpose.xlu0.b32.cont [6/16] 0.0, 128
        %2481 = vxpose.xlu0.b32.cont [7/16] 0.0, 128
        %2482 = vxpose.xlu0.b32.cont [8/16] 0.0, 128
        %2483 = vxpose.xlu0.b32.cont [9/16] 0.0, 128
        %2484 = vxpose.xlu0.b32.cont [10/16] 0.0, 128
        %2485 = vxpose.xlu0.b32.cont [11/16] 0.0, 128
        %2486 = vxpose.xlu0.b32.cont [12/16] 0.0, 128
        %2487 = vxpose.xlu0.b32.cont [13/16] 0.0, 128
        %2488 = vxpose.xlu0.b32.cont [14/16] 0.0, 128
        %2489 = vxpose.xlu0.b32.cont [15/16] 0.0, 128
        %2490 = vxpose.xlu0.b32.end [16/16] 0.0, 128
        %v2491 = vpop.trf.xlu0
        %v2492 = vpop.trf.xlu0
        %v2493 = vpop.trf.xlu0
        %v2494 = vpop.trf.xlu0
        %v2495 = vpop.trf.xlu0
        %v2496 = vpop.trf.xlu0
        %v2497 = vpop.trf.xlu0
        %v2498 = vpop.trf.xlu0
        %v2499 = vpop.trf.xlu0
        %v2500 = vpop.trf.xlu0
        %v2501 = vpop.trf.xlu0
        %v2502 = vpop.trf.xlu0
        %v2503 = vpop.trf.xlu0
        %v2504 = vpop.trf.xlu0
        %v2505 = vpop.trf.xlu0
        %v2506 = vpop.trf.xlu0
        %v2508 = vsel %vm2197, %v2491, 0
        %v2511 = vsel %vm2197, %v2492, 0
        %v2514 = vsel %vm2197, %v2493, 0
        %v2517 = vsel %vm2197, %v2494, 0
        %v2520 = vsel %vm2197, %v2495, 0
        %v2523 = vsel %vm2197, %v2496, 0
        %v2526 = vsel %vm2197, %v2497, 0
        %v2529 = vsel %vm2197, %v2498, 0
        %v2532 = vsel %vm2197, %v2499, 0
        %v2535 = vsel %vm2197, %v2500, 0
        %v2538 = vsel %vm2197, %v2501, 0
        %v2541 = vsel %vm2197, %v2502, 0
        %v2544 = vsel %vm2197, %v2503, 0
        %v2547 = vsel %vm2197, %v2504, 0
        %v2550 = vsel %vm2197, %v2505, 0
        %v2553 = vsel %vm2197, %v2506, 0
        %2555 = vmatpush.msra.mxu0 0.0
        %2556 = vmatpush.msra.mxu0 0.0
        %2557 = vmatpush.msra.mxu0 0.0
        %2558 = vmatpush.msra.mxu0 0.0
        %2559 = vmatpush.msra.mxu0 0.0
        %2560 = vmatpush.msra.mxu0 0.0
        %2561 = vmatpush.msra.mxu0 0.0
        %2562 = vmatpush.msra.mxu0 0.0
        %2563 = vmatpush.msra.mxu0 0.0
        %2564 = vmatpush.msra.mxu0 0.0
        %2565 = vmatpush.msra.mxu0 0.0
        %2566 = vmatpush.msra.mxu0 0.0
        %2567 = vmatpush.msra.mxu0 0.0
        %2568 = vmatpush.msra.mxu0 0.0
        %2569 = vmatpush.msra.mxu0 %v2474
        %2570 = vmatpush.msra.mxu0 %v2473
        %2571 = vmatmul.f32.gmra.mxu0 %v2508
        %v2572 = vpop.f32.mrf.mxu0
        %v2573 = vadd.f32 0.0, %v2572
        %2574 = vmatmul.f32.gmra.mxu0 %v2511
        %v2575 = vpop.f32.mrf.mxu0
        %v2576 = vadd.f32 0.0, %v2575
        %2577 = vmatmul.f32.gmra.mxu0 %v2514
        %v2578 = vpop.f32.mrf.mxu0
        %v2579 = vadd.f32 0.0, %v2578
        %2580 = vmatmul.f32.gmra.mxu0 %v2517
        %v2581 = vpop.f32.mrf.mxu0
        %v2582 = vadd.f32 0.0, %v2581
        %2583 = vmatmul.f32.gmra.mxu0 %v2520
        %v2584 = vpop.f32.mrf.mxu0
        %v2585 = vadd.f32 0.0, %v2584
        %2586 = vmatmul.f32.gmra.mxu0 %v2523
        %v2587 = vpop.f32.mrf.mxu0
        %v2588 = vadd.f32 0.0, %v2587
        %2589 = vmatmul.f32.gmra.mxu0 %v2526
        %v2590 = vpop.f32.mrf.mxu0
        %v2591 = vadd.f32 0.0, %v2590
        %2592 = vmatmul.f32.gmra.mxu0 %v2529
        %v2593 = vpop.f32.mrf.mxu0
        %v2594 = vadd.f32 0.0, %v2593
        %2595 = vmatmul.f32.gmra.mxu0 %v2532
        %v2596 = vpop.f32.mrf.mxu0
        %v2597 = vadd.f32 0.0, %v2596
        %2598 = vmatmul.f32.gmra.mxu0 %v2535
        %v2599 = vpop.f32.mrf.mxu0
        %v2600 = vadd.f32 0.0, %v2599
        %2601 = vmatmul.f32.gmra.mxu0 %v2538
        %v2602 = vpop.f32.mrf.mxu0
        %v2603 = vadd.f32 0.0, %v2602
        %2604 = vmatmul.f32.gmra.mxu0 %v2541
        %v2605 = vpop.f32.mrf.mxu0
        %v2606 = vadd.f32 0.0, %v2605
        %2607 = vmatmul.f32.gmra.mxu0 %v2544
        %v2608 = vpop.f32.mrf.mxu0
        %v2609 = vadd.f32 0.0, %v2608
        %2610 = vmatmul.f32.gmra.mxu0 %v2547
        %v2611 = vpop.f32.mrf.mxu0
        %v2612 = vadd.f32 0.0, %v2611
        %2613 = vmatmul.f32.gmra.mxu0 %v2550
        %v2614 = vpop.f32.mrf.mxu0
        %v2615 = vadd.f32 0.0, %v2614
        %2616 = vmatmul.f32.gmra.mxu0 %v2553
        %v2617 = vpop.f32.mrf.mxu0
        %v2618 = vadd.f32 0.0, %v2617
        %2619 = vdwg.mxu0
        %2620 = vxpose.xlu0.b32.start [1/16] %v2162, 128
        %2621 = vxpose.xlu0.b32.cont [2/16] %v2164, 128
        %2622 = vxpose.xlu0.b32.cont [3/16] 0.0, 128
        %2623 = vxpose.xlu0.b32.cont [4/16] 0.0, 128
        %2624 = vxpose.xlu0.b32.cont [5/16] 0.0, 128
        %2625 = vxpose.xlu0.b32.cont [6/16] 0.0, 128
        %2626 = vxpose.xlu0.b32.cont [7/16] 0.0, 128
        %2627 = vxpose.xlu0.b32.cont [8/16] 0.0, 128
        %2628 = vxpose.xlu0.b32.cont [9/16] 0.0, 128
        %2629 = vxpose.xlu0.b32.cont [10/16] 0.0, 128
        %2630 = vxpose.xlu0.b32.cont [11/16] 0.0, 128
        %2631 = vxpose.xlu0.b32.cont [12/16] 0.0, 128
        %2632 = vxpose.xlu0.b32.cont [13/16] 0.0, 128
        %2633 = vxpose.xlu0.b32.cont [14/16] 0.0, 128
        %2634 = vxpose.xlu0.b32.cont [15/16] 0.0, 128
        %2635 = vxpose.xlu0.b32.end [16/16] 0.0, 128
        %v2636 = vpop.trf.xlu0
        %v2637 = vpop.trf.xlu0
        %v2638 = vpop.trf.xlu0
        %v2639 = vpop.trf.xlu0
        %v2640 = vpop.trf.xlu0
        %v2641 = vpop.trf.xlu0
        %v2642 = vpop.trf.xlu0
        %v2643 = vpop.trf.xlu0
        %v2644 = vpop.trf.xlu0
        %v2645 = vpop.trf.xlu0
        %v2646 = vpop.trf.xlu0
        %v2647 = vpop.trf.xlu0
        %v2648 = vpop.trf.xlu0
        %v2649 = vpop.trf.xlu0
        %v2650 = vpop.trf.xlu0
        %v2651 = vpop.trf.xlu0
        %v2653 = vsel %vm2197, %v2636, 0
        %v2656 = vsel %vm2197, %v2637, 0
        %v2659 = vsel %vm2197, %v2638, 0
        %v2662 = vsel %vm2197, %v2639, 0
        %v2665 = vsel %vm2197, %v2640, 0
        %v2668 = vsel %vm2197, %v2641, 0
        %v2671 = vsel %vm2197, %v2642, 0
        %v2674 = vsel %vm2197, %v2643, 0
        %v2677 = vsel %vm2197, %v2644, 0
        %v2680 = vsel %vm2197, %v2645, 0
        %v2683 = vsel %vm2197, %v2646, 0
        %v2686 = vsel %vm2197, %v2647, 0
        %v2689 = vsel %vm2197, %v2648, 0
        %v2692 = vsel %vm2197, %v2649, 0
        %v2695 = vsel %vm2197, %v2650, 0
        %v2698 = vsel %vm2197, %v2651, 0
        %2700 = vmatpush.msra.mxu0 0.0
        %2701 = vmatpush.msra.mxu0 0.0
        %2702 = vmatpush.msra.mxu0 0.0
        %2703 = vmatpush.msra.mxu0 0.0
        %2704 = vmatpush.msra.mxu0 0.0
        %2705 = vmatpush.msra.mxu0 0.0
        %2706 = vmatpush.msra.mxu0 0.0
        %2707 = vmatpush.msra.mxu0 0.0
        %2708 = vmatpush.msra.mxu0 0.0
        %2709 = vmatpush.msra.mxu0 0.0
        %2710 = vmatpush.msra.mxu0 0.0
        %2711 = vmatpush.msra.mxu0 0.0
        %2712 = vmatpush.msra.mxu0 0.0
        %2713 = vmatpush.msra.mxu0 0.0
        %2714 = vmatpush.msra.mxu0 %v2164
        %2715 = vmatpush.msra.mxu0 %v2162
        %2716 = vmatmul.f32.gmra.mxu0 %v2653
        %v2717 = vpop.f32.mrf.mxu0
        %v2718 = vadd.f32 0.0, %v2717
        %2719 = vmatmul.f32.gmra.mxu0 %v2656
        %v2720 = vpop.f32.mrf.mxu0
        %v2721 = vadd.f32 0.0, %v2720
        %2722 = vmatmul.f32.gmra.mxu0 %v2659
        %v2723 = vpop.f32.mrf.mxu0
        %v2724 = vadd.f32 0.0, %v2723
        %2725 = vmatmul.f32.gmra.mxu0 %v2662
        %v2726 = vpop.f32.mrf.mxu0
        %v2727 = vadd.f32 0.0, %v2726
        %2728 = vmatmul.f32.gmra.mxu0 %v2665
        %v2729 = vpop.f32.mrf.mxu0
        %v2730 = vadd.f32 0.0, %v2729
        %2731 = vmatmul.f32.gmra.mxu0 %v2668
        %v2732 = vpop.f32.mrf.mxu0
        %v2733 = vadd.f32 0.0, %v2732
        %2734 = vmatmul.f32.gmra.mxu0 %v2671
        %v2735 = vpop.f32.mrf.mxu0
        %v2736 = vadd.f32 0.0, %v2735
        %2737 = vmatmul.f32.gmra.mxu0 %v2674
        %v2738 = vpop.f32.mrf.mxu0
        %v2739 = vadd.f32 0.0, %v2738
        %2740 = vmatmul.f32.gmra.mxu0 %v2677
        %v2741 = vpop.f32.mrf.mxu0
        %v2742 = vadd.f32 0.0, %v2741
        %2743 = vmatmul.f32.gmra.mxu0 %v2680
        %v2744 = vpop.f32.mrf.mxu0
        %v2745 = vadd.f32 0.0, %v2744
        %2746 = vmatmul.f32.gmra.mxu0 %v2683
        %v2747 = vpop.f32.mrf.mxu0
        %v2748 = vadd.f32 0.0, %v2747
        %2749 = vmatmul.f32.gmra.mxu0 %v2686
        %v2750 = vpop.f32.mrf.mxu0
        %v2751 = vadd.f32 0.0, %v2750
        %2752 = vmatmul.f32.gmra.mxu0 %v2689
        %v2753 = vpop.f32.mrf.mxu0
        %v2754 = vadd.f32 0.0, %v2753
        %2755 = vmatmul.f32.gmra.mxu0 %v2692
        %v2756 = vpop.f32.mrf.mxu0
        %v2757 = vadd.f32 0.0, %v2756
        %2758 = vmatmul.f32.gmra.mxu0 %v2695
        %v2759 = vpop.f32.mrf.mxu0
        %v2760 = vadd.f32 0.0, %v2759
        %2761 = vmatmul.f32.gmra.mxu0 %v2698
        %v2762 = vpop.f32.mrf.mxu0
        %v2763 = vadd.f32 0.0, %v2762
        %2764 = vdwg.mxu0
        %v2765 = vsel %vm2016, %v2718, -1e+30
        %v2766 = vsel %vm2017, %v2721, -1e+30
        %v2767 = vsel %vm2018, %v2724, -1e+30
        %v2768 = vsel %vm2019, %v2727, -1e+30
        %v2769 = vsel %vm2020, %v2730, -1e+30
        %v2770 = vsel %vm2021, %v2733, -1e+30
        %v2771 = vsel %vm2022, %v2736, -1e+30
        %v2772 = vsel %vm2023, %v2739, -1e+30
        %v2773 = vsel %vm2024, %v2742, -1e+30
        %v2774 = vsel %vm2025, %v2745, -1e+30
        %v2775 = vsel %vm2026, %v2748, -1e+30
        %v2776 = vsel %vm2027, %v2751, -1e+30
        %v2777 = vsel %vm2028, %v2754, -1e+30
        %v2778 = vsel %vm2029, %v2757, -1e+30
        %v2779 = vsel %vm2030, %v2760, -1e+30
        %v2780 = vsel %vm2031, %v2763, -1e+30
        %v2781 = vmax.f32 %v2765, %v2769
        %v2782 = vmax.f32 %v2766, %v2770
        %v2783 = vmax.f32 %v2767, %v2771
        %v2784 = vmax.f32 %v2768, %v2772
        %v2785 = vmax.f32 %v2781, %v2773
        %v2786 = vmax.f32 %v2782, %v2774
        %v2787 = vmax.f32 %v2783, %v2775
        %v2788 = vmax.f32 %v2784, %v2776
        %v2789 = vmax.f32 %v2785, %v2777
        %v2790 = vmax.f32 %v2786, %v2778
        %v2791 = vmax.f32 %v2787, %v2779
        %v2792 = vmax.f32 %v2788, %v2780
        %v2793 = vmax.f32 %v2789, %v2790
        %v2794 = vmax.f32 %v2791, %v2792
        %v2795 = vmax.f32 %v2793, %v2794
        %v2796 = vrot.slane %v2795, 4
        %v2797 = vmax.f32 %v2795, %v2796
        %v2798 = vrot.slane %v2797, 2
        %v2799 = vmax.f32 %v2797, %v2798
        %v2800 = vrot.slane %v2799, 1
        %v2801 = vmax.f32 %v2799, %v2800
        %v2802 = vsub.f32 %v2765, %v2801
        %v2803 = vsub.f32 %v2766, %v2801
        %v2804 = vsub.f32 %v2767, %v2801
        %v2805 = vsub.f32 %v2768, %v2801
        %v2806 = vsub.f32 %v2769, %v2801
        %v2807 = vsub.f32 %v2770, %v2801
        %v2808 = vsub.f32 %v2771, %v2801
        %v2809 = vsub.f32 %v2772, %v2801
        %v2810 = vsub.f32 %v2773, %v2801
        %v2811 = vsub.f32 %v2774, %v2801
        %v2812 = vsub.f32 %v2775, %v2801
        %v2813 = vsub.f32 %v2776, %v2801
        %v2814 = vsub.f32 %v2777, %v2801
        %v2815 = vsub.f32 %v2778, %v2801
        %v2816 = vsub.f32 %v2779, %v2801
        %v2817 = vsub.f32 %v2780, %v2801
        %v2818 = vmul.f32 %v2802, 1.442695
        %v2819 = vpow.pop %v2818
        %v2820 = vmul.f32 %v2803, 1.442695
        %v2821 = vpow.pop %v2820
        %v2822 = vmul.f32 %v2804, 1.442695
        %v2823 = vpow.pop %v2822
        %v2824 = vmul.f32 %v2805, 1.442695
        %v2825 = vpow.pop %v2824
        %v2826 = vmul.f32 %v2806, 1.442695
        %v2827 = vpow.pop %v2826
        %v2828 = vmul.f32 %v2807, 1.442695
        %v2829 = vpow.pop %v2828
        %v2830 = vmul.f32 %v2808, 1.442695
        %v2831 = vpow.pop %v2830
        %v2832 = vmul.f32 %v2809, 1.442695
        %v2833 = vpow.pop %v2832
        %v2834 = vmul.f32 %v2810, 1.442695
        %v2835 = vpow.pop %v2834
        %v2836 = vmul.f32 %v2811, 1.442695
        %v2837 = vpow.pop %v2836
        %v2838 = vmul.f32 %v2812, 1.442695
        %v2839 = vpow.pop %v2838
        %v2840 = vmul.f32 %v2813, 1.442695
        %v2841 = vpow.pop %v2840
        %v2842 = vmul.f32 %v2814, 1.442695
        %v2843 = vpow.pop %v2842
        %v2844 = vmul.f32 %v2815, 1.442695
        %v2845 = vpow.pop %v2844
        %v2846 = vmul.f32 %v2816, 1.442695
        %v2847 = vpow.pop %v2846
        %v2848 = vmul.f32 %v2817, 1.442695
        %v2849 = vpow.pop %v2848
        %v2850 = vadd.f32 %v2819, %v2821
        %v2851 = vadd.f32 %v2850, %v2823
        %v2852 = vadd.f32 %v2851, %v2825
        %v2853 = vadd.f32 %v2852, %v2827
        %v2854 = vadd.f32 %v2853, %v2829
        %v2855 = vadd.f32 %v2854, %v2831
        %v2856 = vadd.f32 %v2855, %v2833
        %v2857 = vadd.f32 %v2856, %v2835
        %v2858 = vadd.f32 %v2857, %v2837
        %v2859 = vadd.f32 %v2858, %v2839
        %v2860 = vadd.f32 %v2859, %v2841
        %v2861 = vadd.f32 %v2860, %v2843
        %v2862 = vadd.f32 %v2861, %v2845
        %v2863 = vadd.f32 %v2862, %v2847
        %v2864 = vadd.f32 %v2863, %v2849
        %v2865 = vrot.slane %v2864, 4
        %v2866 = vadd.f32 %v2864, %v2865
        %v2867 = vrot.slane %v2866, 2
        %v2868 = vadd.f32 %v2866, %v2867
        %v2869 = vrot.slane %v2868, 1
        %v2870 = vadd.f32 %v2868, %v2869
        %v2871 = vrcp.pop %v2870
        %v2872 = vmul.f32 %v2819, %v2871
        %v2873 = vmul.f32 %v2821, %v2871
        %v2874 = vmul.f32 %v2823, %v2871
        %v2875 = vmul.f32 %v2825, %v2871
        %v2876 = vmul.f32 %v2827, %v2871
        %v2877 = vmul.f32 %v2829, %v2871
        %v2878 = vmul.f32 %v2831, %v2871
        %v2879 = vmul.f32 %v2833, %v2871
        %v2880 = vmul.f32 %v2835, %v2871
        %v2881 = vmul.f32 %v2837, %v2871
        %v2882 = vmul.f32 %v2839, %v2871
        %v2883 = vmul.f32 %v2841, %v2871
        %v2884 = vmul.f32 %v2843, %v2871
        %v2885 = vmul.f32 %v2845, %v2871
        %v2886 = vmul.f32 %v2847, %v2871
        %v2887 = vmul.f32 %v2849, %v2871
        %v2888 = vsel %vm2034, %v2872, 0.0
        %v2889 = vsel %vm2034, %v2873, 0.0
        %v2890 = vsel %vm2034, %v2874, 0.0
        %v2891 = vsel %vm2034, %v2875, 0.0
        %v2892 = vsel %vm2034, %v2876, 0.0
        %v2893 = vsel %vm2034, %v2877, 0.0
        %v2894 = vsel %vm2034, %v2878, 0.0
        %v2895 = vsel %vm2034, %v2879, 0.0
        %v2896 = vsel %vm2034, %v2880, 0.0
        %v2897 = vsel %vm2034, %v2881, 0.0
        %v2898 = vsel %vm2034, %v2882, 0.0
        %v2899 = vsel %vm2034, %v2883, 0.0
        %v2900 = vsel %vm2034, %v2884, 0.0
        %v2901 = vsel %vm2034, %v2885, 0.0
        %v2902 = vsel %vm2034, %v2886, 0.0
        %v2903 = vsel %vm2034, %v2887, 0.0
        %2904 = vmatpush.msra.mxu0 %v2903
        %2905 = vmatpush.msra.mxu0 %v2902
        %2906 = vmatpush.msra.mxu0 %v2901
        %2907 = vmatpush.msra.mxu0 %v2900
        %2908 = vmatpush.msra.mxu0 %v2899
        %2909 = vmatpush.msra.mxu0 %v2898
        %2910 = vmatpush.msra.mxu0 %v2897
        %2911 = vmatpush.msra.mxu0 %v2896
        %2912 = vmatpush.msra.mxu0 %v2895
        %2913 = vmatpush.msra.mxu0 %v2894
        %2914 = vmatpush.msra.mxu0 %v2893
        %2915 = vmatpush.msra.mxu0 %v2892
        %2916 = vmatpush.msra.mxu0 %v2891
        %2917 = vmatpush.msra.mxu0 %v2890
        %2918 = vmatpush.msra.mxu0 %v2889
        %2919 = vmatpush.msra.mxu0 %v2888
        %2920 = vmatmul.f32.gmra.mxu0 %v2116
        %v2921 = vpop.f32.mrf.mxu0
        %v2922 = vadd.f32 0.0, %v2921
        %2923 = vmatmul.f32.gmra.mxu0 %v2119
        %v2924 = vpop.f32.mrf.mxu0
        %v2925 = vadd.f32 0.0, %v2924
        %2926 = vdwg.mxu0
        %s2927 = scalar_lea.vmem %s6, 16
        %v2928 = vld [vmem:[%s2927] sm:$0xff]
        %v2929 = vld [vmem:[%s2927 + $0x8] sm:$0xff]
        %2930 = vxpose.xlu0.b32.start [1/16] %v2922, 128
        %2931 = vxpose.xlu0.b32.cont [2/16] %v2925, 128
        %2932 = vxpose.xlu0.b32.cont [3/16] 0.0, 128
        %2933 = vxpose.xlu0.b32.cont [4/16] 0.0, 128
        %2934 = vxpose.xlu0.b32.cont [5/16] 0.0, 128
        %2935 = vxpose.xlu0.b32.cont [6/16] 0.0, 128
        %2936 = vxpose.xlu0.b32.cont [7/16] 0.0, 128
        %2937 = vxpose.xlu0.b32.cont [8/16] 0.0, 128
        %2938 = vxpose.xlu0.b32.cont [9/16] 0.0, 128
        %2939 = vxpose.xlu0.b32.cont [10/16] 0.0, 128
        %2940 = vxpose.xlu0.b32.cont [11/16] 0.0, 128
        %2941 = vxpose.xlu0.b32.cont [12/16] 0.0, 128
        %2942 = vxpose.xlu0.b32.cont [13/16] 0.0, 128
        %2943 = vxpose.xlu0.b32.cont [14/16] 0.0, 128
        %2944 = vxpose.xlu0.b32.cont [15/16] 0.0, 128
        %2945 = vxpose.xlu0.b32.end [16/16] 0.0, 128
        %v2946 = vpop.trf.xlu0
        %v2947 = vpop.trf.xlu0
        %v2948 = vpop.trf.xlu0
        %v2949 = vpop.trf.xlu0
        %v2950 = vpop.trf.xlu0
        %v2951 = vpop.trf.xlu0
        %v2952 = vpop.trf.xlu0
        %v2953 = vpop.trf.xlu0
        %v2954 = vpop.trf.xlu0
        %v2955 = vpop.trf.xlu0
        %v2956 = vpop.trf.xlu0
        %v2957 = vpop.trf.xlu0
        %v2958 = vpop.trf.xlu0
        %v2959 = vpop.trf.xlu0
        %v2960 = vpop.trf.xlu0
        %v2961 = vpop.trf.xlu0
        %v2963 = vsel %vm2197, %v2946, 0
        %v2966 = vsel %vm2197, %v2947, 0
        %v2969 = vsel %vm2197, %v2948, 0
        %v2972 = vsel %vm2197, %v2949, 0
        %v2975 = vsel %vm2197, %v2950, 0
        %v2978 = vsel %vm2197, %v2951, 0
        %v2981 = vsel %vm2197, %v2952, 0
        %v2984 = vsel %vm2197, %v2953, 0
        %v2987 = vsel %vm2197, %v2954, 0
        %v2990 = vsel %vm2197, %v2955, 0
        %v2993 = vsel %vm2197, %v2956, 0
        %v2996 = vsel %vm2197, %v2957, 0
        %v2999 = vsel %vm2197, %v2958, 0
        %v3002 = vsel %vm2197, %v2959, 0
        %v3005 = vsel %vm2197, %v2960, 0
        %v3008 = vsel %vm2197, %v2961, 0
        %3010 = vmatpush.msra.mxu0 0.0
        %3011 = vmatpush.msra.mxu0 0.0
        %3012 = vmatpush.msra.mxu0 0.0
        %3013 = vmatpush.msra.mxu0 0.0
        %3014 = vmatpush.msra.mxu0 0.0
        %3015 = vmatpush.msra.mxu0 0.0
        %3016 = vmatpush.msra.mxu0 0.0
        %3017 = vmatpush.msra.mxu0 0.0
        %3018 = vmatpush.msra.mxu0 0.0
        %3019 = vmatpush.msra.mxu0 0.0
        %3020 = vmatpush.msra.mxu0 0.0
        %3021 = vmatpush.msra.mxu0 0.0
        %3022 = vmatpush.msra.mxu0 0.0
        %3023 = vmatpush.msra.mxu0 0.0
        %3024 = vmatpush.msra.mxu0 %v2929
        %3025 = vmatpush.msra.mxu0 %v2928
        %3026 = vmatmul.f32.gmra.mxu0 %v2963
        %v3027 = vpop.f32.mrf.mxu0
        %v3028 = vadd.f32 0.0, %v3027
        %3029 = vmatmul.f32.gmra.mxu0 %v2966
        %v3030 = vpop.f32.mrf.mxu0
        %v3031 = vadd.f32 0.0, %v3030
        %3032 = vmatmul.f32.gmra.mxu0 %v2969
        %v3033 = vpop.f32.mrf.mxu0
        %v3034 = vadd.f32 0.0, %v3033
        %3035 = vmatmul.f32.gmra.mxu0 %v2972
        %v3036 = vpop.f32.mrf.mxu0
        %v3037 = vadd.f32 0.0, %v3036
        %3038 = vmatmul.f32.gmra.mxu0 %v2975
        %v3039 = vpop.f32.mrf.mxu0
        %v3040 = vadd.f32 0.0, %v3039
        %3041 = vmatmul.f32.gmra.mxu0 %v2978
        %v3042 = vpop.f32.mrf.mxu0
        %v3043 = vadd.f32 0.0, %v3042
        %3044 = vmatmul.f32.gmra.mxu0 %v2981
        %v3045 = vpop.f32.mrf.mxu0
        %v3046 = vadd.f32 0.0, %v3045
        %3047 = vmatmul.f32.gmra.mxu0 %v2984
        %v3048 = vpop.f32.mrf.mxu0
        %v3049 = vadd.f32 0.0, %v3048
        %3050 = vmatmul.f32.gmra.mxu0 %v2987
        %v3051 = vpop.f32.mrf.mxu0
        %v3052 = vadd.f32 0.0, %v3051
        %3053 = vmatmul.f32.gmra.mxu0 %v2990
        %v3054 = vpop.f32.mrf.mxu0
        %v3055 = vadd.f32 0.0, %v3054
        %3056 = vmatmul.f32.gmra.mxu0 %v2993
        %v3057 = vpop.f32.mrf.mxu0
        %v3058 = vadd.f32 0.0, %v3057
        %3059 = vmatmul.f32.gmra.mxu0 %v2996
        %v3060 = vpop.f32.mrf.mxu0
        %v3061 = vadd.f32 0.0, %v3060
        %3062 = vmatmul.f32.gmra.mxu0 %v2999
        %v3063 = vpop.f32.mrf.mxu0
        %v3064 = vadd.f32 0.0, %v3063
        %3065 = vmatmul.f32.gmra.mxu0 %v3002
        %v3066 = vpop.f32.mrf.mxu0
        %v3067 = vadd.f32 0.0, %v3066
        %3068 = vmatmul.f32.gmra.mxu0 %v3005
        %v3069 = vpop.f32.mrf.mxu0
        %v3070 = vadd.f32 0.0, %v3069
        %3071 = vmatmul.f32.gmra.mxu0 %v3008
        %v3072 = vpop.f32.mrf.mxu0
        %v3073 = vadd.f32 0.0, %v3072
        %3074 = vdwg.mxu0
        %3075 = vmatpush.msra.mxu0 %v2618
        %3076 = vmatpush.msra.mxu0 %v2615
        %3077 = vmatpush.msra.mxu0 %v2612
        %3078 = vmatpush.msra.mxu0 %v2609
        %3079 = vmatpush.msra.mxu0 %v2606
        %3080 = vmatpush.msra.mxu0 %v2603
        %3081 = vmatpush.msra.mxu0 %v2600
        %3082 = vmatpush.msra.mxu0 %v2597
        %3083 = vmatpush.msra.mxu0 %v2594
        %3084 = vmatpush.msra.mxu0 %v2591
        %3085 = vmatpush.msra.mxu0 %v2588
        %3086 = vmatpush.msra.mxu0 %v2585
        %3087 = vmatpush.msra.mxu0 %v2582
        %3088 = vmatpush.msra.mxu0 %v2579
        %3089 = vmatpush.msra.mxu0 %v2576
        %3090 = vmatpush.msra.mxu0 %v2573
        %3091 = vmatmul.f32.gmra.mxu0 %v1743
        %v3092 = vpop.f32.mrf.mxu0
        %v3093 = vadd.f32 0.0, %v3092
        %3094 = vmatmul.f32.gmra.mxu0 %v1744
        %v3095 = vpop.f32.mrf.mxu0
        %v3096 = vadd.f32 0.0, %v3095
        %3097 = vmatmul.f32.gmra.mxu0 %v1745
        %v3098 = vpop.f32.mrf.mxu0
        %v3099 = vadd.f32 0.0, %v3098
        %3100 = vmatmul.f32.gmra.mxu0 %v1746
        %v3101 = vpop.f32.mrf.mxu0
        %v3102 = vadd.f32 0.0, %v3101
        %3103 = vmatmul.f32.gmra.mxu0 %v1747
        %v3104 = vpop.f32.mrf.mxu0
        %v3105 = vadd.f32 0.0, %v3104
        %3106 = vmatmul.f32.gmra.mxu0 %v1748
        %v3107 = vpop.f32.mrf.mxu0
        %v3108 = vadd.f32 0.0, %v3107
        %3109 = vmatmul.f32.gmra.mxu0 %v1749
        %v3110 = vpop.f32.mrf.mxu0
        %v3111 = vadd.f32 0.0, %v3110
        %3112 = vmatmul.f32.gmra.mxu0 %v1750
        %v3113 = vpop.f32.mrf.mxu0
        %v3114 = vadd.f32 0.0, %v3113
        %3115 = vdwg.mxu0
        %3116 = vmatpush.msra.mxu0 %v3073
        %3117 = vmatpush.msra.mxu0 %v3070
        %3118 = vmatpush.msra.mxu0 %v3067
        %3119 = vmatpush.msra.mxu0 %v3064
        %3120 = vmatpush.msra.mxu0 %v3061
        %3121 = vmatpush.msra.mxu0 %v3058
        %3122 = vmatpush.msra.mxu0 %v3055
        %3123 = vmatpush.msra.mxu0 %v3052
        %3124 = vmatpush.msra.mxu0 %v3049
        %3125 = vmatpush.msra.mxu0 %v3046
        %3126 = vmatpush.msra.mxu0 %v3043
        %3127 = vmatpush.msra.mxu0 %v3040
        %3128 = vmatpush.msra.mxu0 %v3037
        %3129 = vmatpush.msra.mxu0 %v3034
        %3130 = vmatpush.msra.mxu0 %v3031
        %3131 = vmatpush.msra.mxu0 %v3028
        %3132 = vmatmul.f32.gmra.mxu0 %v1983
        %v3133 = vpop.f32.mrf.mxu0
        %v3134 = vadd.f32 %v3093, %v3133
        %3135 = vmatmul.f32.gmra.mxu0 %v1984
        %v3136 = vpop.f32.mrf.mxu0
        %v3137 = vadd.f32 %v3096, %v3136
        %3138 = vmatmul.f32.gmra.mxu0 %v1985
        %v3139 = vpop.f32.mrf.mxu0
        %v3140 = vadd.f32 %v3099, %v3139
        %3141 = vmatmul.f32.gmra.mxu0 %v1986
        %v3142 = vpop.f32.mrf.mxu0
        %v3143 = vadd.f32 %v3102, %v3142
        %3144 = vmatmul.f32.gmra.mxu0 %v1987
        %v3145 = vpop.f32.mrf.mxu0
        %v3146 = vadd.f32 %v3105, %v3145
        %3147 = vmatmul.f32.gmra.mxu0 %v1988
        %v3148 = vpop.f32.mrf.mxu0
        %v3149 = vadd.f32 %v3108, %v3148
        %3150 = vmatmul.f32.gmra.mxu0 %v1989
        %v3151 = vpop.f32.mrf.mxu0
        %v3152 = vadd.f32 %v3111, %v3151
        %3153 = vmatmul.f32.gmra.mxu0 %v1990
        %v3154 = vpop.f32.mrf.mxu0
        %v3155 = vadd.f32 %v3114, %v3154
        %3156 = vdwg.mxu0
        %v3157 = vperm.slane %v2035, 0
        %v3158 = vmul.f32 %v3134, %v3157
        %v3159 = vmul.f32 %v3137, %v3157
        %v3160 = vmul.f32 %v3140, %v3157
        %v3161 = vmul.f32 %v3143, %v3157
        %v3162 = vmul.f32 %v3146, %v3157
        %v3163 = vmul.f32 %v3149, %v3157
        %v3164 = vmul.f32 %v3152, %v3157
        %v3165 = vmul.f32 %v3155, %v3157
        %v3166 = vadd.f32 %v509, %v3158
        %v3167 = vadd.f32 %v512, %v3159
        %v3168 = vadd.f32 %v515, %v3160
        %v3169 = vadd.f32 %v518, %v3161
        %v3170 = vadd.f32 %v521, %v3162
        %v3171 = vadd.f32 %v524, %v3163
        %v3172 = vadd.f32 %v527, %v3164
        %v3173 = vadd.f32 %v530, %v3165
        %v3174 = vperm.slane %v2035, 1
        %v3175 = vadd.f32 %v3166, %v3174
        %v3176 = vadd.f32 %v3167, %v3174
        %v3177 = vadd.f32 %v3168, %v3174
        %v3178 = vadd.f32 %v3169, %v3174
        %v3179 = vadd.f32 %v3170, %v3174
        %v3180 = vadd.f32 %v3171, %v3174
        %v3181 = vadd.f32 %v3172, %v3174
        %v3182 = vadd.f32 %v3173, %v3174
        %3183 = vst [vmem:[%s359] sm:$0xff] %v3175
        %3184 = vst [vmem:[%s359 + $0x8] sm:$0xff] %v3176
        %3185 = vst [vmem:[%s359 + $0x10] sm:$0xff] %v3177
        %3186 = vst [vmem:[%s359 + $0x18] sm:$0xff] %v3178
        %3187 = vst [vmem:[%s359 + $0x20] sm:$0xff] %v3179
        %3188 = vst [vmem:[%s359 + $0x28] sm:$0xff] %v3180
        %3189 = vst [vmem:[%s359 + $0x30] sm:$0xff] %v3181
        %3190 = vst [vmem:[%s359 + $0x38] sm:$0xff] %v3182
        %3191 = vxpose.xlu0.b32.start [1/16] %v618, 128
        %3192 = vxpose.xlu0.b32.cont [2/16] %v621, 128
        %3193 = vxpose.xlu0.b32.cont [3/16] %v624, 128
        %3194 = vxpose.xlu0.b32.cont [4/16] %v627, 128
        %3195 = vxpose.xlu0.b32.cont [5/16] %v630, 128
        %3196 = vxpose.xlu0.b32.cont [6/16] %v633, 128
        %3197 = vxpose.xlu0.b32.cont [7/16] %v636, 128
        %3198 = vxpose.xlu0.b32.cont [8/16] %v639, 128
        %3199 = vxpose.xlu0.b32.cont [9/16] 0.0, 128
        %3200 = vxpose.xlu0.b32.cont [10/16] 0.0, 128
        %3201 = vxpose.xlu0.b32.cont [11/16] 0.0, 128
        %3202 = vxpose.xlu0.b32.cont [12/16] 0.0, 128
        %3203 = vxpose.xlu0.b32.cont [13/16] 0.0, 128
        %3204 = vxpose.xlu0.b32.cont [14/16] 0.0, 128
        %3205 = vxpose.xlu0.b32.cont [15/16] 0.0, 128
        %3206 = vxpose.xlu0.b32.end [16/16] 0.0, 128
        %v3207 = vpop.trf.xlu0
        %v3208 = vpop.trf.xlu0
        %v3209 = vpop.trf.xlu0
        %v3210 = vpop.trf.xlu0
        %v3211 = vpop.trf.xlu0
        %v3212 = vpop.trf.xlu0
        %v3213 = vpop.trf.xlu0
        %v3214 = vpop.trf.xlu0
        %v3215 = vpop.trf.xlu0
        %v3216 = vpop.trf.xlu0
        %v3217 = vpop.trf.xlu0
        %v3218 = vpop.trf.xlu0
        %v3219 = vpop.trf.xlu0
        %v3220 = vpop.trf.xlu0
        %v3221 = vpop.trf.xlu0
        %v3222 = vpop.trf.xlu0
        %v3224 = vsel %vm2068, %v3207, 0
        %v3227 = vsel %vm2068, %v3208, 0
        %3229 = vmatpush.msra.mxu0 0.0
        %3230 = vmatpush.msra.mxu0 0.0
        %3231 = vmatpush.msra.mxu0 0.0
        %3232 = vmatpush.msra.mxu0 0.0
        %3233 = vmatpush.msra.mxu0 0.0
        %3234 = vmatpush.msra.mxu0 0.0
        %3235 = vmatpush.msra.mxu0 0.0
        %3236 = vmatpush.msra.mxu0 0.0
        %3237 = vmatpush.msra.mxu0 %v1278
        %3238 = vmatpush.msra.mxu0 %v1277
        %3239 = vmatpush.msra.mxu0 %v1276
        %3240 = vmatpush.msra.mxu0 %v1275
        %3241 = vmatpush.msra.mxu0 %v1274
        %3242 = vmatpush.msra.mxu0 %v1273
        %3243 = vmatpush.msra.mxu0 %v1272
        %3244 = vmatpush.msra.mxu0 %v1271
        %3245 = vmatmul.f32.gmra.mxu0 %v3224
        %v3246 = vpop.f32.mrf.mxu0
        %v3247 = vadd.f32 0.0, %v3246
        %3248 = vmatmul.f32.gmra.mxu0 %v3227
        %v3249 = vpop.f32.mrf.mxu0
        %v3250 = vadd.f32 0.0, %v3249
        %3251 = vdwg.mxu0
        %3252 = vmatpush.msra.mxu0 0.0
        %3253 = vmatpush.msra.mxu0 0.0
        %3254 = vmatpush.msra.mxu0 0.0
        %3255 = vmatpush.msra.mxu0 0.0
        %3256 = vmatpush.msra.mxu0 0.0
        %3257 = vmatpush.msra.mxu0 0.0
        %3258 = vmatpush.msra.mxu0 0.0
        %3259 = vmatpush.msra.mxu0 0.0
        %3260 = vmatpush.msra.mxu0 %v1518
        %3261 = vmatpush.msra.mxu0 %v1517
        %3262 = vmatpush.msra.mxu0 %v1516
        %3263 = vmatpush.msra.mxu0 %v1515
        %3264 = vmatpush.msra.mxu0 %v1514
        %3265 = vmatpush.msra.mxu0 %v1513
        %3266 = vmatpush.msra.mxu0 %v1512
        %3267 = vmatpush.msra.mxu0 %v1511
        %3268 = vmatmul.f32.gmra.mxu0 %v3224
        %v3269 = vpop.f32.mrf.mxu0
        %v3270 = vadd.f32 0.0, %v3269
        %3271 = vmatmul.f32.gmra.mxu0 %v3227
        %v3272 = vpop.f32.mrf.mxu0
        %v3273 = vadd.f32 0.0, %v3272
        %3274 = vdwg.mxu0
        %v3275 = vmul.f32 %v3247, %v3247
        %v3276 = vmul.f32 %v3270, %v3270
        %v3277 = vmul.f32 %v3250, %v3250
        %v3278 = vmul.f32 %v3273, %v3273
        %v3279 = vadd.f32 %v3275, %v3277
        %v3280 = vrot.slane %v3279, 4
        %v3281 = vadd.f32 %v3279, %v3280
        %v3282 = vrot.slane %v3281, 2
        %v3283 = vadd.f32 %v3281, %v3282
        %v3284 = vrot.slane %v3283, 1
        %v3285 = vadd.f32 %v3283, %v3284
        %v3286 = vadd.f32 %v3276, %v3278
        %v3287 = vrot.slane %v3286, 4
        %v3288 = vadd.f32 %v3286, %v3287
        %v3289 = vrot.slane %v3288, 2
        %v3290 = vadd.f32 %v3288, %v3289
        %v3291 = vrot.slane %v3290, 1
        %v3292 = vadd.f32 %v3290, %v3291
        %v3293 = vadd.f32 %v3285, 1e-24
        %v3294 = vadd.f32 %v3292, 1e-24
        %v3295 = vrsqrt.pop %v3293
        %v3296 = vmul.f32 %v3295, %v3293
        %v3297 = vmul.f32 %v3296, %v3295
        %v3298 = vmul.f32 0.5, %v3297
        %v3299 = vsub.f32 1.5, %v3298
        %v3300 = vmul.f32 %v3295, %v3299
        %vm3301 = vweird.f32 %v3293
        %vm3302 = vweird.f32 %v3295
        %vm3303 = vmor %vm3301, %vm3302
        %v3304 = vsel %vm3303, %v3295, %v3300
        %v3305 = vrsqrt.pop %v3294
        %v3306 = vmul.f32 %v3305, %v3294
        %v3307 = vmul.f32 %v3306, %v3305
        %v3308 = vmul.f32 0.5, %v3307
        %v3309 = vsub.f32 1.5, %v3308
        %v3310 = vmul.f32 %v3305, %v3309
        %vm3311 = vweird.f32 %v3294
        %vm3312 = vweird.f32 %v3305
        %vm3313 = vmor %vm3311, %vm3312
        %v3314 = vsel %vm3313, %v3305, %v3310
        %v3315 = vmul.f32 %v3247, %v3304
        %v3316 = vmul.f32 %v3270, %v3314
        %v3317 = vmul.f32 %v3250, %v3304
        %v3318 = vmul.f32 %v3273, %v3314
        %3319 = vxpose.xlu0.b32.start [1/16] %v3315, 128
        %3320 = vxpose.xlu0.b32.cont [2/16] %v3317, 128
        %3321 = vxpose.xlu0.b32.cont [3/16] 0.0, 128
        %3322 = vxpose.xlu0.b32.cont [4/16] 0.0, 128
        %3323 = vxpose.xlu0.b32.cont [5/16] 0.0, 128
        %3324 = vxpose.xlu0.b32.cont [6/16] 0.0, 128
        %3325 = vxpose.xlu0.b32.cont [7/16] 0.0, 128
        %3326 = vxpose.xlu0.b32.cont [8/16] 0.0, 128
        %3327 = vxpose.xlu0.b32.cont [9/16] 0.0, 128
        %3328 = vxpose.xlu0.b32.cont [10/16] 0.0, 128
        %3329 = vxpose.xlu0.b32.cont [11/16] 0.0, 128
        %3330 = vxpose.xlu0.b32.cont [12/16] 0.0, 128
        %3331 = vxpose.xlu0.b32.cont [13/16] 0.0, 128
        %3332 = vxpose.xlu0.b32.cont [14/16] 0.0, 128
        %3333 = vxpose.xlu0.b32.cont [15/16] 0.0, 128
        %3334 = vxpose.xlu0.b32.end [16/16] 0.0, 128
        %v3335 = vpop.trf.xlu0
        %v3336 = vpop.trf.xlu0
        %v3337 = vpop.trf.xlu0
        %v3338 = vpop.trf.xlu0
        %v3339 = vpop.trf.xlu0
        %v3340 = vpop.trf.xlu0
        %v3341 = vpop.trf.xlu0
        %v3342 = vpop.trf.xlu0
        %v3343 = vpop.trf.xlu0
        %v3344 = vpop.trf.xlu0
        %v3345 = vpop.trf.xlu0
        %v3346 = vpop.trf.xlu0
        %v3347 = vpop.trf.xlu0
        %v3348 = vpop.trf.xlu0
        %v3349 = vpop.trf.xlu0
        %v3350 = vpop.trf.xlu0
        %v3352 = vsel %vm2197, %v3335, 0
        %v3355 = vsel %vm2197, %v3336, 0
        %v3358 = vsel %vm2197, %v3337, 0
        %v3361 = vsel %vm2197, %v3338, 0
        %v3364 = vsel %vm2197, %v3339, 0
        %v3367 = vsel %vm2197, %v3340, 0
        %v3370 = vsel %vm2197, %v3341, 0
        %v3373 = vsel %vm2197, %v3342, 0
        %v3376 = vsel %vm2197, %v3343, 0
        %v3379 = vsel %vm2197, %v3344, 0
        %v3382 = vsel %vm2197, %v3345, 0
        %v3385 = vsel %vm2197, %v3346, 0
        %v3388 = vsel %vm2197, %v3347, 0
        %v3391 = vsel %vm2197, %v3348, 0
        %v3394 = vsel %vm2197, %v3349, 0
        %v3397 = vsel %vm2197, %v3350, 0
        %3399 = vmatpush.msra.mxu0 0.0
        %3400 = vmatpush.msra.mxu0 0.0
        %3401 = vmatpush.msra.mxu0 0.0
        %3402 = vmatpush.msra.mxu0 0.0
        %3403 = vmatpush.msra.mxu0 0.0
        %3404 = vmatpush.msra.mxu0 0.0
        %3405 = vmatpush.msra.mxu0 0.0
        %3406 = vmatpush.msra.mxu0 0.0
        %3407 = vmatpush.msra.mxu0 0.0
        %3408 = vmatpush.msra.mxu0 0.0
        %3409 = vmatpush.msra.mxu0 0.0
        %3410 = vmatpush.msra.mxu0 0.0
        %3411 = vmatpush.msra.mxu0 0.0
        %3412 = vmatpush.msra.mxu0 0.0
        %3413 = vmatpush.msra.mxu0 %v3317
        %3414 = vmatpush.msra.mxu0 %v3315
        %3415 = vmatmul.f32.gmra.mxu0 %v3352
        %v3416 = vpop.f32.mrf.mxu0
        %v3417 = vadd.f32 0.0, %v3416
        %3418 = vmatmul.f32.gmra.mxu0 %v3355
        %v3419 = vpop.f32.mrf.mxu0
        %v3420 = vadd.f32 0.0, %v3419
        %3421 = vmatmul.f32.gmra.mxu0 %v3358
        %v3422 = vpop.f32.mrf.mxu0
        %v3423 = vadd.f32 0.0, %v3422
        %3424 = vmatmul.f32.gmra.mxu0 %v3361
        %v3425 = vpop.f32.mrf.mxu0
        %v3426 = vadd.f32 0.0, %v3425
        %3427 = vmatmul.f32.gmra.mxu0 %v3364
        %v3428 = vpop.f32.mrf.mxu0
        %v3429 = vadd.f32 0.0, %v3428
        %3430 = vmatmul.f32.gmra.mxu0 %v3367
        %v3431 = vpop.f32.mrf.mxu0
        %v3432 = vadd.f32 0.0, %v3431
        %3433 = vmatmul.f32.gmra.mxu0 %v3370
        %v3434 = vpop.f32.mrf.mxu0
        %v3435 = vadd.f32 0.0, %v3434
        %3436 = vmatmul.f32.gmra.mxu0 %v3373
        %v3437 = vpop.f32.mrf.mxu0
        %v3438 = vadd.f32 0.0, %v3437
        %3439 = vmatmul.f32.gmra.mxu0 %v3376
        %v3440 = vpop.f32.mrf.mxu0
        %v3441 = vadd.f32 0.0, %v3440
        %3442 = vmatmul.f32.gmra.mxu0 %v3379
        %v3443 = vpop.f32.mrf.mxu0
        %v3444 = vadd.f32 0.0, %v3443
        %3445 = vmatmul.f32.gmra.mxu0 %v3382
        %v3446 = vpop.f32.mrf.mxu0
        %v3447 = vadd.f32 0.0, %v3446
        %3448 = vmatmul.f32.gmra.mxu0 %v3385
        %v3449 = vpop.f32.mrf.mxu0
        %v3450 = vadd.f32 0.0, %v3449
        %3451 = vmatmul.f32.gmra.mxu0 %v3388
        %v3452 = vpop.f32.mrf.mxu0
        %v3453 = vadd.f32 0.0, %v3452
        %3454 = vmatmul.f32.gmra.mxu0 %v3391
        %v3455 = vpop.f32.mrf.mxu0
        %v3456 = vadd.f32 0.0, %v3455
        %3457 = vmatmul.f32.gmra.mxu0 %v3394
        %v3458 = vpop.f32.mrf.mxu0
        %v3459 = vadd.f32 0.0, %v3458
        %3460 = vmatmul.f32.gmra.mxu0 %v3397
        %v3461 = vpop.f32.mrf.mxu0
        %v3462 = vadd.f32 0.0, %v3461
        %3463 = vdwg.mxu0
        %v3464 = vsel %vm2016, %v3417, -1e+30
        %v3465 = vsel %vm2017, %v3420, -1e+30
        %v3466 = vsel %vm2018, %v3423, -1e+30
        %v3467 = vsel %vm2019, %v3426, -1e+30
        %v3468 = vsel %vm2020, %v3429, -1e+30
        %v3469 = vsel %vm2021, %v3432, -1e+30
        %v3470 = vsel %vm2022, %v3435, -1e+30
        %v3471 = vsel %vm2023, %v3438, -1e+30
        %v3472 = vsel %vm2024, %v3441, -1e+30
        %v3473 = vsel %vm2025, %v3444, -1e+30
        %v3474 = vsel %vm2026, %v3447, -1e+30
        %v3475 = vsel %vm2027, %v3450, -1e+30
        %v3476 = vsel %vm2028, %v3453, -1e+30
        %v3477 = vsel %vm2029, %v3456, -1e+30
        %v3478 = vsel %vm2030, %v3459, -1e+30
        %v3479 = vsel %vm2031, %v3462, -1e+30
        %v3480 = vmax.f32 %v3464, %v3468
        %v3481 = vmax.f32 %v3465, %v3469
        %v3482 = vmax.f32 %v3466, %v3470
        %v3483 = vmax.f32 %v3467, %v3471
        %v3484 = vmax.f32 %v3480, %v3472
        %v3485 = vmax.f32 %v3481, %v3473
        %v3486 = vmax.f32 %v3482, %v3474
        %v3487 = vmax.f32 %v3483, %v3475
        %v3488 = vmax.f32 %v3484, %v3476
        %v3489 = vmax.f32 %v3485, %v3477
        %v3490 = vmax.f32 %v3486, %v3478
        %v3491 = vmax.f32 %v3487, %v3479
        %v3492 = vmax.f32 %v3488, %v3489
        %v3493 = vmax.f32 %v3490, %v3491
        %v3494 = vmax.f32 %v3492, %v3493
        %v3495 = vrot.slane %v3494, 4
        %v3496 = vmax.f32 %v3494, %v3495
        %v3497 = vrot.slane %v3496, 2
        %v3498 = vmax.f32 %v3496, %v3497
        %v3499 = vrot.slane %v3498, 1
        %v3500 = vmax.f32 %v3498, %v3499
        %v3501 = vsub.f32 %v3464, %v3500
        %v3502 = vsub.f32 %v3465, %v3500
        %v3503 = vsub.f32 %v3466, %v3500
        %v3504 = vsub.f32 %v3467, %v3500
        %v3505 = vsub.f32 %v3468, %v3500
        %v3506 = vsub.f32 %v3469, %v3500
        %v3507 = vsub.f32 %v3470, %v3500
        %v3508 = vsub.f32 %v3471, %v3500
        %v3509 = vsub.f32 %v3472, %v3500
        %v3510 = vsub.f32 %v3473, %v3500
        %v3511 = vsub.f32 %v3474, %v3500
        %v3512 = vsub.f32 %v3475, %v3500
        %v3513 = vsub.f32 %v3476, %v3500
        %v3514 = vsub.f32 %v3477, %v3500
        %v3515 = vsub.f32 %v3478, %v3500
        %v3516 = vsub.f32 %v3479, %v3500
        %v3517 = vmul.f32 %v3501, 1.442695
        %v3518 = vpow.pop %v3517
        %v3519 = vmul.f32 %v3502, 1.442695
        %v3520 = vpow.pop %v3519
        %v3521 = vmul.f32 %v3503, 1.442695
        %v3522 = vpow.pop %v3521
        %v3523 = vmul.f32 %v3504, 1.442695
        %v3524 = vpow.pop %v3523
        %v3525 = vmul.f32 %v3505, 1.442695
        %v3526 = vpow.pop %v3525
        %v3527 = vmul.f32 %v3506, 1.442695
        %v3528 = vpow.pop %v3527
        %v3529 = vmul.f32 %v3507, 1.442695
        %v3530 = vpow.pop %v3529
        %v3531 = vmul.f32 %v3508, 1.442695
        %v3532 = vpow.pop %v3531
        %v3533 = vmul.f32 %v3509, 1.442695
        %v3534 = vpow.pop %v3533
        %v3535 = vmul.f32 %v3510, 1.442695
        %v3536 = vpow.pop %v3535
        %v3537 = vmul.f32 %v3511, 1.442695
        %v3538 = vpow.pop %v3537
        %v3539 = vmul.f32 %v3512, 1.442695
        %v3540 = vpow.pop %v3539
        %v3541 = vmul.f32 %v3513, 1.442695
        %v3542 = vpow.pop %v3541
        %v3543 = vmul.f32 %v3514, 1.442695
        %v3544 = vpow.pop %v3543
        %v3545 = vmul.f32 %v3515, 1.442695
        %v3546 = vpow.pop %v3545
        %v3547 = vmul.f32 %v3516, 1.442695
        %v3548 = vpow.pop %v3547
        %v3549 = vadd.f32 %v3518, %v3520
        %v3550 = vadd.f32 %v3549, %v3522
        %v3551 = vadd.f32 %v3550, %v3524
        %v3552 = vadd.f32 %v3551, %v3526
        %v3553 = vadd.f32 %v3552, %v3528
        %v3554 = vadd.f32 %v3553, %v3530
        %v3555 = vadd.f32 %v3554, %v3532
        %v3556 = vadd.f32 %v3555, %v3534
        %v3557 = vadd.f32 %v3556, %v3536
        %v3558 = vadd.f32 %v3557, %v3538
        %v3559 = vadd.f32 %v3558, %v3540
        %v3560 = vadd.f32 %v3559, %v3542
        %v3561 = vadd.f32 %v3560, %v3544
        %v3562 = vadd.f32 %v3561, %v3546
        %v3563 = vadd.f32 %v3562, %v3548
        %v3564 = vrot.slane %v3563, 4
        %v3565 = vadd.f32 %v3563, %v3564
        %v3566 = vrot.slane %v3565, 2
        %v3567 = vadd.f32 %v3565, %v3566
        %v3568 = vrot.slane %v3567, 1
        %v3569 = vadd.f32 %v3567, %v3568
        %v3570 = vrcp.pop %v3569
        %v3571 = vmul.f32 %v3518, %v3570
        %v3572 = vmul.f32 %v3520, %v3570
        %v3573 = vmul.f32 %v3522, %v3570
        %v3574 = vmul.f32 %v3524, %v3570
        %v3575 = vmul.f32 %v3526, %v3570
        %v3576 = vmul.f32 %v3528, %v3570
        %v3577 = vmul.f32 %v3530, %v3570
        %v3578 = vmul.f32 %v3532, %v3570
        %v3579 = vmul.f32 %v3534, %v3570
        %v3580 = vmul.f32 %v3536, %v3570
        %v3581 = vmul.f32 %v3538, %v3570
        %v3582 = vmul.f32 %v3540, %v3570
        %v3583 = vmul.f32 %v3542, %v3570
        %v3584 = vmul.f32 %v3544, %v3570
        %v3585 = vmul.f32 %v3546, %v3570
        %v3586 = vmul.f32 %v3548, %v3570
        %v3587 = vsel %vm2034, %v3571, 0.0
        %v3588 = vsel %vm2034, %v3572, 0.0
        %v3589 = vsel %vm2034, %v3573, 0.0
        %v3590 = vsel %vm2034, %v3574, 0.0
        %v3591 = vsel %vm2034, %v3575, 0.0
        %v3592 = vsel %vm2034, %v3576, 0.0
        %v3593 = vsel %vm2034, %v3577, 0.0
        %v3594 = vsel %vm2034, %v3578, 0.0
        %v3595 = vsel %vm2034, %v3579, 0.0
        %v3596 = vsel %vm2034, %v3580, 0.0
        %v3597 = vsel %vm2034, %v3581, 0.0
        %v3598 = vsel %vm2034, %v3582, 0.0
        %v3599 = vsel %vm2034, %v3583, 0.0
        %v3600 = vsel %vm2034, %v3584, 0.0
        %v3601 = vsel %vm2034, %v3585, 0.0
        %v3602 = vsel %vm2034, %v3586, 0.0
        %3603 = vmatpush.msra.mxu0 %v3602
        %3604 = vmatpush.msra.mxu0 %v3601
        %3605 = vmatpush.msra.mxu0 %v3600
        %3606 = vmatpush.msra.mxu0 %v3599
        %3607 = vmatpush.msra.mxu0 %v3598
        %3608 = vmatpush.msra.mxu0 %v3597
        %3609 = vmatpush.msra.mxu0 %v3596
        %3610 = vmatpush.msra.mxu0 %v3595
        %3611 = vmatpush.msra.mxu0 %v3594
        %3612 = vmatpush.msra.mxu0 %v3593
        %3613 = vmatpush.msra.mxu0 %v3592
        %3614 = vmatpush.msra.mxu0 %v3591
        %3615 = vmatpush.msra.mxu0 %v3590
        %3616 = vmatpush.msra.mxu0 %v3589
        %3617 = vmatpush.msra.mxu0 %v3588
        %3618 = vmatpush.msra.mxu0 %v3587
        %3619 = vmatmul.f32.gmra.mxu0 %v3247
        %v3620 = vpop.f32.mrf.mxu0
        %v3621 = vadd.f32 0.0, %v3620
        %3622 = vmatmul.f32.gmra.mxu0 %v3250
        %v3623 = vpop.f32.mrf.mxu0
        %v3624 = vadd.f32 0.0, %v3623
        %3625 = vdwg.mxu0
        %v3626 = vld [vmem:[%s6] sm:$0xff]
        %v3627 = vld [vmem:[%s6 + $0x8] sm:$0xff]
        %3628 = vxpose.xlu0.b32.start [1/16] %v3621, 128
        %3629 = vxpose.xlu0.b32.cont [2/16] %v3624, 128
        %3630 = vxpose.xlu0.b32.cont [3/16] 0.0, 128
        %3631 = vxpose.xlu0.b32.cont [4/16] 0.0, 128
        %3632 = vxpose.xlu0.b32.cont [5/16] 0.0, 128
        %3633 = vxpose.xlu0.b32.cont [6/16] 0.0, 128
        %3634 = vxpose.xlu0.b32.cont [7/16] 0.0, 128
        %3635 = vxpose.xlu0.b32.cont [8/16] 0.0, 128
        %3636 = vxpose.xlu0.b32.cont [9/16] 0.0, 128
        %3637 = vxpose.xlu0.b32.cont [10/16] 0.0, 128
        %3638 = vxpose.xlu0.b32.cont [11/16] 0.0, 128
        %3639 = vxpose.xlu0.b32.cont [12/16] 0.0, 128
        %3640 = vxpose.xlu0.b32.cont [13/16] 0.0, 128
        %3641 = vxpose.xlu0.b32.cont [14/16] 0.0, 128
        %3642 = vxpose.xlu0.b32.cont [15/16] 0.0, 128
        %3643 = vxpose.xlu0.b32.end [16/16] 0.0, 128
        %v3644 = vpop.trf.xlu0
        %v3645 = vpop.trf.xlu0
        %v3646 = vpop.trf.xlu0
        %v3647 = vpop.trf.xlu0
        %v3648 = vpop.trf.xlu0
        %v3649 = vpop.trf.xlu0
        %v3650 = vpop.trf.xlu0
        %v3651 = vpop.trf.xlu0
        %v3652 = vpop.trf.xlu0
        %v3653 = vpop.trf.xlu0
        %v3654 = vpop.trf.xlu0
        %v3655 = vpop.trf.xlu0
        %v3656 = vpop.trf.xlu0
        %v3657 = vpop.trf.xlu0
        %v3658 = vpop.trf.xlu0
        %v3659 = vpop.trf.xlu0
        %v3661 = vsel %vm2197, %v3644, 0
        %v3664 = vsel %vm2197, %v3645, 0
        %v3667 = vsel %vm2197, %v3646, 0
        %v3670 = vsel %vm2197, %v3647, 0
        %v3673 = vsel %vm2197, %v3648, 0
        %v3676 = vsel %vm2197, %v3649, 0
        %v3679 = vsel %vm2197, %v3650, 0
        %v3682 = vsel %vm2197, %v3651, 0
        %v3685 = vsel %vm2197, %v3652, 0
        %v3688 = vsel %vm2197, %v3653, 0
        %v3691 = vsel %vm2197, %v3654, 0
        %v3694 = vsel %vm2197, %v3655, 0
        %v3697 = vsel %vm2197, %v3656, 0
        %v3700 = vsel %vm2197, %v3657, 0
        %v3703 = vsel %vm2197, %v3658, 0
        %v3706 = vsel %vm2197, %v3659, 0
        %3708 = vmatpush.msra.mxu0 0.0
        %3709 = vmatpush.msra.mxu0 0.0
        %3710 = vmatpush.msra.mxu0 0.0
        %3711 = vmatpush.msra.mxu0 0.0
        %3712 = vmatpush.msra.mxu0 0.0
        %3713 = vmatpush.msra.mxu0 0.0
        %3714 = vmatpush.msra.mxu0 0.0
        %3715 = vmatpush.msra.mxu0 0.0
        %3716 = vmatpush.msra.mxu0 0.0
        %3717 = vmatpush.msra.mxu0 0.0
        %3718 = vmatpush.msra.mxu0 0.0
        %3719 = vmatpush.msra.mxu0 0.0
        %3720 = vmatpush.msra.mxu0 0.0
        %3721 = vmatpush.msra.mxu0 0.0
        %3722 = vmatpush.msra.mxu0 %v3627
        %3723 = vmatpush.msra.mxu0 %v3626
        %3724 = vmatmul.f32.gmra.mxu0 %v3661
        %v3725 = vpop.f32.mrf.mxu0
        %v3726 = vadd.f32 0.0, %v3725
        %3727 = vmatmul.f32.gmra.mxu0 %v3664
        %v3728 = vpop.f32.mrf.mxu0
        %v3729 = vadd.f32 0.0, %v3728
        %3730 = vmatmul.f32.gmra.mxu0 %v3667
        %v3731 = vpop.f32.mrf.mxu0
        %v3732 = vadd.f32 0.0, %v3731
        %3733 = vmatmul.f32.gmra.mxu0 %v3670
        %v3734 = vpop.f32.mrf.mxu0
        %v3735 = vadd.f32 0.0, %v3734
        %3736 = vmatmul.f32.gmra.mxu0 %v3673
        %v3737 = vpop.f32.mrf.mxu0
        %v3738 = vadd.f32 0.0, %v3737
        %3739 = vmatmul.f32.gmra.mxu0 %v3676
        %v3740 = vpop.f32.mrf.mxu0
        %v3741 = vadd.f32 0.0, %v3740
        %3742 = vmatmul.f32.gmra.mxu0 %v3679
        %v3743 = vpop.f32.mrf.mxu0
        %v3744 = vadd.f32 0.0, %v3743
        %3745 = vmatmul.f32.gmra.mxu0 %v3682
        %v3746 = vpop.f32.mrf.mxu0
        %v3747 = vadd.f32 0.0, %v3746
        %3748 = vmatmul.f32.gmra.mxu0 %v3685
        %v3749 = vpop.f32.mrf.mxu0
        %v3750 = vadd.f32 0.0, %v3749
        %3751 = vmatmul.f32.gmra.mxu0 %v3688
        %v3752 = vpop.f32.mrf.mxu0
        %v3753 = vadd.f32 0.0, %v3752
        %3754 = vmatmul.f32.gmra.mxu0 %v3691
        %v3755 = vpop.f32.mrf.mxu0
        %v3756 = vadd.f32 0.0, %v3755
        %3757 = vmatmul.f32.gmra.mxu0 %v3694
        %v3758 = vpop.f32.mrf.mxu0
        %v3759 = vadd.f32 0.0, %v3758
        %3760 = vmatmul.f32.gmra.mxu0 %v3697
        %v3761 = vpop.f32.mrf.mxu0
        %v3762 = vadd.f32 0.0, %v3761
        %3763 = vmatmul.f32.gmra.mxu0 %v3700
        %v3764 = vpop.f32.mrf.mxu0
        %v3765 = vadd.f32 0.0, %v3764
        %3766 = vmatmul.f32.gmra.mxu0 %v3703
        %v3767 = vpop.f32.mrf.mxu0
        %v3768 = vadd.f32 0.0, %v3767
        %3769 = vmatmul.f32.gmra.mxu0 %v3706
        %v3770 = vpop.f32.mrf.mxu0
        %v3771 = vadd.f32 0.0, %v3770
        %3772 = vdwg.mxu0
        %3773 = vxpose.xlu0.b32.start [1/16] %v3316, 128
        %3774 = vxpose.xlu0.b32.cont [2/16] %v3318, 128
        %3775 = vxpose.xlu0.b32.cont [3/16] 0.0, 128
        %3776 = vxpose.xlu0.b32.cont [4/16] 0.0, 128
        %3777 = vxpose.xlu0.b32.cont [5/16] 0.0, 128
        %3778 = vxpose.xlu0.b32.cont [6/16] 0.0, 128
        %3779 = vxpose.xlu0.b32.cont [7/16] 0.0, 128
        %3780 = vxpose.xlu0.b32.cont [8/16] 0.0, 128
        %3781 = vxpose.xlu0.b32.cont [9/16] 0.0, 128
        %3782 = vxpose.xlu0.b32.cont [10/16] 0.0, 128
        %3783 = vxpose.xlu0.b32.cont [11/16] 0.0, 128
        %3784 = vxpose.xlu0.b32.cont [12/16] 0.0, 128
        %3785 = vxpose.xlu0.b32.cont [13/16] 0.0, 128
        %3786 = vxpose.xlu0.b32.cont [14/16] 0.0, 128
        %3787 = vxpose.xlu0.b32.cont [15/16] 0.0, 128
        %3788 = vxpose.xlu0.b32.end [16/16] 0.0, 128
        %v3789 = vpop.trf.xlu0
        %v3790 = vpop.trf.xlu0
        %v3791 = vpop.trf.xlu0
        %v3792 = vpop.trf.xlu0
        %v3793 = vpop.trf.xlu0
        %v3794 = vpop.trf.xlu0
        %v3795 = vpop.trf.xlu0
        %v3796 = vpop.trf.xlu0
        %v3797 = vpop.trf.xlu0
        %v3798 = vpop.trf.xlu0
        %v3799 = vpop.trf.xlu0
        %v3800 = vpop.trf.xlu0
        %v3801 = vpop.trf.xlu0
        %v3802 = vpop.trf.xlu0
        %v3803 = vpop.trf.xlu0
        %v3804 = vpop.trf.xlu0
        %v3806 = vsel %vm2197, %v3789, 0
        %v3809 = vsel %vm2197, %v3790, 0
        %v3812 = vsel %vm2197, %v3791, 0
        %v3815 = vsel %vm2197, %v3792, 0
        %v3818 = vsel %vm2197, %v3793, 0
        %v3821 = vsel %vm2197, %v3794, 0
        %v3824 = vsel %vm2197, %v3795, 0
        %v3827 = vsel %vm2197, %v3796, 0
        %v3830 = vsel %vm2197, %v3797, 0
        %v3833 = vsel %vm2197, %v3798, 0
        %v3836 = vsel %vm2197, %v3799, 0
        %v3839 = vsel %vm2197, %v3800, 0
        %v3842 = vsel %vm2197, %v3801, 0
        %v3845 = vsel %vm2197, %v3802, 0
        %v3848 = vsel %vm2197, %v3803, 0
        %v3851 = vsel %vm2197, %v3804, 0
        %3853 = vmatpush.msra.mxu0 0.0
        %3854 = vmatpush.msra.mxu0 0.0
        %3855 = vmatpush.msra.mxu0 0.0
        %3856 = vmatpush.msra.mxu0 0.0
        %3857 = vmatpush.msra.mxu0 0.0
        %3858 = vmatpush.msra.mxu0 0.0
        %3859 = vmatpush.msra.mxu0 0.0
        %3860 = vmatpush.msra.mxu0 0.0
        %3861 = vmatpush.msra.mxu0 0.0
        %3862 = vmatpush.msra.mxu0 0.0
        %3863 = vmatpush.msra.mxu0 0.0
        %3864 = vmatpush.msra.mxu0 0.0
        %3865 = vmatpush.msra.mxu0 0.0
        %3866 = vmatpush.msra.mxu0 0.0
        %3867 = vmatpush.msra.mxu0 %v3318
        %3868 = vmatpush.msra.mxu0 %v3316
        %3869 = vmatmul.f32.gmra.mxu0 %v3806
        %v3870 = vpop.f32.mrf.mxu0
        %v3871 = vadd.f32 0.0, %v3870
        %3872 = vmatmul.f32.gmra.mxu0 %v3809
        %v3873 = vpop.f32.mrf.mxu0
        %v3874 = vadd.f32 0.0, %v3873
        %3875 = vmatmul.f32.gmra.mxu0 %v3812
        %v3876 = vpop.f32.mrf.mxu0
        %v3877 = vadd.f32 0.0, %v3876
        %3878 = vmatmul.f32.gmra.mxu0 %v3815
        %v3879 = vpop.f32.mrf.mxu0
        %v3880 = vadd.f32 0.0, %v3879
        %3881 = vmatmul.f32.gmra.mxu0 %v3818
        %v3882 = vpop.f32.mrf.mxu0
        %v3883 = vadd.f32 0.0, %v3882
        %3884 = vmatmul.f32.gmra.mxu0 %v3821
        %v3885 = vpop.f32.mrf.mxu0
        %v3886 = vadd.f32 0.0, %v3885
        %3887 = vmatmul.f32.gmra.mxu0 %v3824
        %v3888 = vpop.f32.mrf.mxu0
        %v3889 = vadd.f32 0.0, %v3888
        %3890 = vmatmul.f32.gmra.mxu0 %v3827
        %v3891 = vpop.f32.mrf.mxu0
        %v3892 = vadd.f32 0.0, %v3891
        %3893 = vmatmul.f32.gmra.mxu0 %v3830
        %v3894 = vpop.f32.mrf.mxu0
        %v3895 = vadd.f32 0.0, %v3894
        %3896 = vmatmul.f32.gmra.mxu0 %v3833
        %v3897 = vpop.f32.mrf.mxu0
        %v3898 = vadd.f32 0.0, %v3897
        %3899 = vmatmul.f32.gmra.mxu0 %v3836
        %v3900 = vpop.f32.mrf.mxu0
        %v3901 = vadd.f32 0.0, %v3900
        %3902 = vmatmul.f32.gmra.mxu0 %v3839
        %v3903 = vpop.f32.mrf.mxu0
        %v3904 = vadd.f32 0.0, %v3903
        %3905 = vmatmul.f32.gmra.mxu0 %v3842
        %v3906 = vpop.f32.mrf.mxu0
        %v3907 = vadd.f32 0.0, %v3906
        %3908 = vmatmul.f32.gmra.mxu0 %v3845
        %v3909 = vpop.f32.mrf.mxu0
        %v3910 = vadd.f32 0.0, %v3909
        %3911 = vmatmul.f32.gmra.mxu0 %v3848
        %v3912 = vpop.f32.mrf.mxu0
        %v3913 = vadd.f32 0.0, %v3912
        %3914 = vmatmul.f32.gmra.mxu0 %v3851
        %v3915 = vpop.f32.mrf.mxu0
        %v3916 = vadd.f32 0.0, %v3915
        %3917 = vdwg.mxu0
        %v3918 = vsel %vm2016, %v3871, -1e+30
        %v3919 = vsel %vm2017, %v3874, -1e+30
        %v3920 = vsel %vm2018, %v3877, -1e+30
        %v3921 = vsel %vm2019, %v3880, -1e+30
        %v3922 = vsel %vm2020, %v3883, -1e+30
        %v3923 = vsel %vm2021, %v3886, -1e+30
        %v3924 = vsel %vm2022, %v3889, -1e+30
        %v3925 = vsel %vm2023, %v3892, -1e+30
        %v3926 = vsel %vm2024, %v3895, -1e+30
        %v3927 = vsel %vm2025, %v3898, -1e+30
        %v3928 = vsel %vm2026, %v3901, -1e+30
        %v3929 = vsel %vm2027, %v3904, -1e+30
        %v3930 = vsel %vm2028, %v3907, -1e+30
        %v3931 = vsel %vm2029, %v3910, -1e+30
        %v3932 = vsel %vm2030, %v3913, -1e+30
        %v3933 = vsel %vm2031, %v3916, -1e+30
        %v3934 = vmax.f32 %v3918, %v3922
        %v3935 = vmax.f32 %v3919, %v3923
        %v3936 = vmax.f32 %v3920, %v3924
        %v3937 = vmax.f32 %v3921, %v3925
        %v3938 = vmax.f32 %v3934, %v3926
        %v3939 = vmax.f32 %v3935, %v3927
        %v3940 = vmax.f32 %v3936, %v3928
        %v3941 = vmax.f32 %v3937, %v3929
        %v3942 = vmax.f32 %v3938, %v3930
        %v3943 = vmax.f32 %v3939, %v3931
        %v3944 = vmax.f32 %v3940, %v3932
        %v3945 = vmax.f32 %v3941, %v3933
        %v3946 = vmax.f32 %v3942, %v3943
        %v3947 = vmax.f32 %v3944, %v3945
        %v3948 = vmax.f32 %v3946, %v3947
        %v3949 = vrot.slane %v3948, 4
        %v3950 = vmax.f32 %v3948, %v3949
        %v3951 = vrot.slane %v3950, 2
        %v3952 = vmax.f32 %v3950, %v3951
        %v3953 = vrot.slane %v3952, 1
        %v3954 = vmax.f32 %v3952, %v3953
        %v3955 = vsub.f32 %v3918, %v3954
        %v3956 = vsub.f32 %v3919, %v3954
        %v3957 = vsub.f32 %v3920, %v3954
        %v3958 = vsub.f32 %v3921, %v3954
        %v3959 = vsub.f32 %v3922, %v3954
        %v3960 = vsub.f32 %v3923, %v3954
        %v3961 = vsub.f32 %v3924, %v3954
        %v3962 = vsub.f32 %v3925, %v3954
        %v3963 = vsub.f32 %v3926, %v3954
        %v3964 = vsub.f32 %v3927, %v3954
        %v3965 = vsub.f32 %v3928, %v3954
        %v3966 = vsub.f32 %v3929, %v3954
        %v3967 = vsub.f32 %v3930, %v3954
        %v3968 = vsub.f32 %v3931, %v3954
        %v3969 = vsub.f32 %v3932, %v3954
        %v3970 = vsub.f32 %v3933, %v3954
        %v3971 = vmul.f32 %v3955, 1.442695
        %v3972 = vpow.pop %v3971
        %v3973 = vmul.f32 %v3956, 1.442695
        %v3974 = vpow.pop %v3973
        %v3975 = vmul.f32 %v3957, 1.442695
        %v3976 = vpow.pop %v3975
        %v3977 = vmul.f32 %v3958, 1.442695
        %v3978 = vpow.pop %v3977
        %v3979 = vmul.f32 %v3959, 1.442695
        %v3980 = vpow.pop %v3979
        %v3981 = vmul.f32 %v3960, 1.442695
        %v3982 = vpow.pop %v3981
        %v3983 = vmul.f32 %v3961, 1.442695
        %v3984 = vpow.pop %v3983
        %v3985 = vmul.f32 %v3962, 1.442695
        %v3986 = vpow.pop %v3985
        %v3987 = vmul.f32 %v3963, 1.442695
        %v3988 = vpow.pop %v3987
        %v3989 = vmul.f32 %v3964, 1.442695
        %v3990 = vpow.pop %v3989
        %v3991 = vmul.f32 %v3965, 1.442695
        %v3992 = vpow.pop %v3991
        %v3993 = vmul.f32 %v3966, 1.442695
        %v3994 = vpow.pop %v3993
        %v3995 = vmul.f32 %v3967, 1.442695
        %v3996 = vpow.pop %v3995
        %v3997 = vmul.f32 %v3968, 1.442695
        %v3998 = vpow.pop %v3997
        %v3999 = vmul.f32 %v3969, 1.442695
        %v4000 = vpow.pop %v3999
        %v4001 = vmul.f32 %v3970, 1.442695
        %v4002 = vpow.pop %v4001
        %v4003 = vadd.f32 %v3972, %v3974
        %v4004 = vadd.f32 %v4003, %v3976
        %v4005 = vadd.f32 %v4004, %v3978
        %v4006 = vadd.f32 %v4005, %v3980
        %v4007 = vadd.f32 %v4006, %v3982
        %v4008 = vadd.f32 %v4007, %v3984
        %v4009 = vadd.f32 %v4008, %v3986
        %v4010 = vadd.f32 %v4009, %v3988
        %v4011 = vadd.f32 %v4010, %v3990
        %v4012 = vadd.f32 %v4011, %v3992
        %v4013 = vadd.f32 %v4012, %v3994
        %v4014 = vadd.f32 %v4013, %v3996
        %v4015 = vadd.f32 %v4014, %v3998
        %v4016 = vadd.f32 %v4015, %v4000
        %v4017 = vadd.f32 %v4016, %v4002
        %v4018 = vrot.slane %v4017, 4
        %v4019 = vadd.f32 %v4017, %v4018
        %v4020 = vrot.slane %v4019, 2
        %v4021 = vadd.f32 %v4019, %v4020
        %v4022 = vrot.slane %v4021, 1
        %v4023 = vadd.f32 %v4021, %v4022
        %v4024 = vrcp.pop %v4023
        %v4025 = vmul.f32 %v3972, %v4024
        %v4026 = vmul.f32 %v3974, %v4024
        %v4027 = vmul.f32 %v3976, %v4024
        %v4028 = vmul.f32 %v3978, %v4024
        %v4029 = vmul.f32 %v3980, %v4024
        %v4030 = vmul.f32 %v3982, %v4024
        %v4031 = vmul.f32 %v3984, %v4024
        %v4032 = vmul.f32 %v3986, %v4024
        %v4033 = vmul.f32 %v3988, %v4024
        %v4034 = vmul.f32 %v3990, %v4024
        %v4035 = vmul.f32 %v3992, %v4024
        %v4036 = vmul.f32 %v3994, %v4024
        %v4037 = vmul.f32 %v3996, %v4024
        %v4038 = vmul.f32 %v3998, %v4024
        %v4039 = vmul.f32 %v4000, %v4024
        %v4040 = vmul.f32 %v4002, %v4024
        %v4041 = vsel %vm2034, %v4025, 0.0
        %v4042 = vsel %vm2034, %v4026, 0.0
        %v4043 = vsel %vm2034, %v4027, 0.0
        %v4044 = vsel %vm2034, %v4028, 0.0
        %v4045 = vsel %vm2034, %v4029, 0.0
        %v4046 = vsel %vm2034, %v4030, 0.0
        %v4047 = vsel %vm2034, %v4031, 0.0
        %v4048 = vsel %vm2034, %v4032, 0.0
        %v4049 = vsel %vm2034, %v4033, 0.0
        %v4050 = vsel %vm2034, %v4034, 0.0
        %v4051 = vsel %vm2034, %v4035, 0.0
        %v4052 = vsel %vm2034, %v4036, 0.0
        %v4053 = vsel %vm2034, %v4037, 0.0
        %v4054 = vsel %vm2034, %v4038, 0.0
        %v4055 = vsel %vm2034, %v4039, 0.0
        %v4056 = vsel %vm2034, %v4040, 0.0
        %4057 = vmatpush.msra.mxu0 %v4056
        %4058 = vmatpush.msra.mxu0 %v4055
        %4059 = vmatpush.msra.mxu0 %v4054
        %4060 = vmatpush.msra.mxu0 %v4053
        %4061 = vmatpush.msra.mxu0 %v4052
        %4062 = vmatpush.msra.mxu0 %v4051
        %4063 = vmatpush.msra.mxu0 %v4050
        %4064 = vmatpush.msra.mxu0 %v4049
        %4065 = vmatpush.msra.mxu0 %v4048
        %4066 = vmatpush.msra.mxu0 %v4047
        %4067 = vmatpush.msra.mxu0 %v4046
        %4068 = vmatpush.msra.mxu0 %v4045
        %4069 = vmatpush.msra.mxu0 %v4044
        %4070 = vmatpush.msra.mxu0 %v4043
        %4071 = vmatpush.msra.mxu0 %v4042
        %4072 = vmatpush.msra.mxu0 %v4041
        %4073 = vmatmul.f32.gmra.mxu0 %v3270
        %v4074 = vpop.f32.mrf.mxu0
        %v4075 = vadd.f32 0.0, %v4074
        %4076 = vmatmul.f32.gmra.mxu0 %v3273
        %v4077 = vpop.f32.mrf.mxu0
        %v4078 = vadd.f32 0.0, %v4077
        %4079 = vdwg.mxu0
        %v4080 = vld [vmem:[%s2927] sm:$0xff]
        %v4081 = vld [vmem:[%s2927 + $0x8] sm:$0xff]
        %4082 = vxpose.xlu0.b32.start [1/16] %v4075, 128
        %4083 = vxpose.xlu0.b32.cont [2/16] %v4078, 128
        %4084 = vxpose.xlu0.b32.cont [3/16] 0.0, 128
        %4085 = vxpose.xlu0.b32.cont [4/16] 0.0, 128
        %4086 = vxpose.xlu0.b32.cont [5/16] 0.0, 128
        %4087 = vxpose.xlu0.b32.cont [6/16] 0.0, 128
        %4088 = vxpose.xlu0.b32.cont [7/16] 0.0, 128
        %4089 = vxpose.xlu0.b32.cont [8/16] 0.0, 128
        %4090 = vxpose.xlu0.b32.cont [9/16] 0.0, 128
        %4091 = vxpose.xlu0.b32.cont [10/16] 0.0, 128
        %4092 = vxpose.xlu0.b32.cont [11/16] 0.0, 128
        %4093 = vxpose.xlu0.b32.cont [12/16] 0.0, 128
        %4094 = vxpose.xlu0.b32.cont [13/16] 0.0, 128
        %4095 = vxpose.xlu0.b32.cont [14/16] 0.0, 128
        %4096 = vxpose.xlu0.b32.cont [15/16] 0.0, 128
        %4097 = vxpose.xlu0.b32.end [16/16] 0.0, 128
        %v4098 = vpop.trf.xlu0
        %v4099 = vpop.trf.xlu0
        %v4100 = vpop.trf.xlu0
        %v4101 = vpop.trf.xlu0
        %v4102 = vpop.trf.xlu0
        %v4103 = vpop.trf.xlu0
        %v4104 = vpop.trf.xlu0
        %v4105 = vpop.trf.xlu0
        %v4106 = vpop.trf.xlu0
        %v4107 = vpop.trf.xlu0
        %v4108 = vpop.trf.xlu0
        %v4109 = vpop.trf.xlu0
        %v4110 = vpop.trf.xlu0
        %v4111 = vpop.trf.xlu0
        %v4112 = vpop.trf.xlu0
        %v4113 = vpop.trf.xlu0
        %v4115 = vsel %vm2197, %v4098, 0
        %v4118 = vsel %vm2197, %v4099, 0
        %v4121 = vsel %vm2197, %v4100, 0
        %v4124 = vsel %vm2197, %v4101, 0
        %v4127 = vsel %vm2197, %v4102, 0
        %v4130 = vsel %vm2197, %v4103, 0
        %v4133 = vsel %vm2197, %v4104, 0
        %v4136 = vsel %vm2197, %v4105, 0
        %v4139 = vsel %vm2197, %v4106, 0
        %v4142 = vsel %vm2197, %v4107, 0
        %v4145 = vsel %vm2197, %v4108, 0
        %v4148 = vsel %vm2197, %v4109, 0
        %v4151 = vsel %vm2197, %v4110, 0
        %v4154 = vsel %vm2197, %v4111, 0
        %v4157 = vsel %vm2197, %v4112, 0
        %v4160 = vsel %vm2197, %v4113, 0
        %4162 = vmatpush.msra.mxu0 0.0
        %4163 = vmatpush.msra.mxu0 0.0
        %4164 = vmatpush.msra.mxu0 0.0
        %4165 = vmatpush.msra.mxu0 0.0
        %4166 = vmatpush.msra.mxu0 0.0
        %4167 = vmatpush.msra.mxu0 0.0
        %4168 = vmatpush.msra.mxu0 0.0
        %4169 = vmatpush.msra.mxu0 0.0
        %4170 = vmatpush.msra.mxu0 0.0
        %4171 = vmatpush.msra.mxu0 0.0
        %4172 = vmatpush.msra.mxu0 0.0
        %4173 = vmatpush.msra.mxu0 0.0
        %4174 = vmatpush.msra.mxu0 0.0
        %4175 = vmatpush.msra.mxu0 0.0
        %4176 = vmatpush.msra.mxu0 %v4081
        %4177 = vmatpush.msra.mxu0 %v4080
        %4178 = vmatmul.f32.gmra.mxu0 %v4115
        %v4179 = vpop.f32.mrf.mxu0
        %v4180 = vadd.f32 0.0, %v4179
        %4181 = vmatmul.f32.gmra.mxu0 %v4118
        %v4182 = vpop.f32.mrf.mxu0
        %v4183 = vadd.f32 0.0, %v4182
        %4184 = vmatmul.f32.gmra.mxu0 %v4121
        %v4185 = vpop.f32.mrf.mxu0
        %v4186 = vadd.f32 0.0, %v4185
        %4187 = vmatmul.f32.gmra.mxu0 %v4124
        %v4188 = vpop.f32.mrf.mxu0
        %v4189 = vadd.f32 0.0, %v4188
        %4190 = vmatmul.f32.gmra.mxu0 %v4127
        %v4191 = vpop.f32.mrf.mxu0
        %v4192 = vadd.f32 0.0, %v4191
        %4193 = vmatmul.f32.gmra.mxu0 %v4130
        %v4194 = vpop.f32.mrf.mxu0
        %v4195 = vadd.f32 0.0, %v4194
        %4196 = vmatmul.f32.gmra.mxu0 %v4133
        %v4197 = vpop.f32.mrf.mxu0
        %v4198 = vadd.f32 0.0, %v4197
        %4199 = vmatmul.f32.gmra.mxu0 %v4136
        %v4200 = vpop.f32.mrf.mxu0
        %v4201 = vadd.f32 0.0, %v4200
        %4202 = vmatmul.f32.gmra.mxu0 %v4139
        %v4203 = vpop.f32.mrf.mxu0
        %v4204 = vadd.f32 0.0, %v4203
        %4205 = vmatmul.f32.gmra.mxu0 %v4142
        %v4206 = vpop.f32.mrf.mxu0
        %v4207 = vadd.f32 0.0, %v4206
        %4208 = vmatmul.f32.gmra.mxu0 %v4145
        %v4209 = vpop.f32.mrf.mxu0
        %v4210 = vadd.f32 0.0, %v4209
        %4211 = vmatmul.f32.gmra.mxu0 %v4148
        %v4212 = vpop.f32.mrf.mxu0
        %v4213 = vadd.f32 0.0, %v4212
        %4214 = vmatmul.f32.gmra.mxu0 %v4151
        %v4215 = vpop.f32.mrf.mxu0
        %v4216 = vadd.f32 0.0, %v4215
        %4217 = vmatmul.f32.gmra.mxu0 %v4154
        %v4218 = vpop.f32.mrf.mxu0
        %v4219 = vadd.f32 0.0, %v4218
        %4220 = vmatmul.f32.gmra.mxu0 %v4157
        %v4221 = vpop.f32.mrf.mxu0
        %v4222 = vadd.f32 0.0, %v4221
        %4223 = vmatmul.f32.gmra.mxu0 %v4160
        %v4224 = vpop.f32.mrf.mxu0
        %v4225 = vadd.f32 0.0, %v4224
        %4226 = vdwg.mxu0
        %4227 = vmatpush.msra.mxu0 %v3771
        %4228 = vmatpush.msra.mxu0 %v3768
        %4229 = vmatpush.msra.mxu0 %v3765
        %4230 = vmatpush.msra.mxu0 %v3762
        %4231 = vmatpush.msra.mxu0 %v3759
        %4232 = vmatpush.msra.mxu0 %v3756
        %4233 = vmatpush.msra.mxu0 %v3753
        %4234 = vmatpush.msra.mxu0 %v3750
        %4235 = vmatpush.msra.mxu0 %v3747
        %4236 = vmatpush.msra.mxu0 %v3744
        %4237 = vmatpush.msra.mxu0 %v3741
        %4238 = vmatpush.msra.mxu0 %v3738
        %4239 = vmatpush.msra.mxu0 %v3735
        %4240 = vmatpush.msra.mxu0 %v3732
        %4241 = vmatpush.msra.mxu0 %v3729
        %4242 = vmatpush.msra.mxu0 %v3726
        %4243 = vmatmul.f32.gmra.mxu0 %v1751
        %v4244 = vpop.f32.mrf.mxu0
        %v4245 = vadd.f32 0.0, %v4244
        %4246 = vmatmul.f32.gmra.mxu0 %v1752
        %v4247 = vpop.f32.mrf.mxu0
        %v4248 = vadd.f32 0.0, %v4247
        %4249 = vmatmul.f32.gmra.mxu0 %v1753
        %v4250 = vpop.f32.mrf.mxu0
        %v4251 = vadd.f32 0.0, %v4250
        %4252 = vmatmul.f32.gmra.mxu0 %v1754
        %v4253 = vpop.f32.mrf.mxu0
        %v4254 = vadd.f32 0.0, %v4253
        %4255 = vmatmul.f32.gmra.mxu0 %v1755
        %v4256 = vpop.f32.mrf.mxu0
        %v4257 = vadd.f32 0.0, %v4256
        %4258 = vmatmul.f32.gmra.mxu0 %v1756
        %v4259 = vpop.f32.mrf.mxu0
        %v4260 = vadd.f32 0.0, %v4259
        %4261 = vmatmul.f32.gmra.mxu0 %v1757
        %v4262 = vpop.f32.mrf.mxu0
        %v4263 = vadd.f32 0.0, %v4262
        %4264 = vmatmul.f32.gmra.mxu0 %v1758
        %v4265 = vpop.f32.mrf.mxu0
        %v4266 = vadd.f32 0.0, %v4265
        %4267 = vdwg.mxu0
        %4268 = vmatpush.msra.mxu0 %v4225
        %4269 = vmatpush.msra.mxu0 %v4222
        %4270 = vmatpush.msra.mxu0 %v4219
        %4271 = vmatpush.msra.mxu0 %v4216
        %4272 = vmatpush.msra.mxu0 %v4213
        %4273 = vmatpush.msra.mxu0 %v4210
        %4274 = vmatpush.msra.mxu0 %v4207
        %4275 = vmatpush.msra.mxu0 %v4204
        %4276 = vmatpush.msra.mxu0 %v4201
        %4277 = vmatpush.msra.mxu0 %v4198
        %4278 = vmatpush.msra.mxu0 %v4195
        %4279 = vmatpush.msra.mxu0 %v4192
        %4280 = vmatpush.msra.mxu0 %v4189
        %4281 = vmatpush.msra.mxu0 %v4186
        %4282 = vmatpush.msra.mxu0 %v4183
        %4283 = vmatpush.msra.mxu0 %v4180
        %4284 = vmatmul.f32.gmra.mxu0 %v1991
        %v4285 = vpop.f32.mrf.mxu0
        %v4286 = vadd.f32 %v4245, %v4285
        %4287 = vmatmul.f32.gmra.mxu0 %v1992
        %v4288 = vpop.f32.mrf.mxu0
        %v4289 = vadd.f32 %v4248, %v4288
        %4290 = vmatmul.f32.gmra.mxu0 %v1993
        %v4291 = vpop.f32.mrf.mxu0
        %v4292 = vadd.f32 %v4251, %v4291
        %4293 = vmatmul.f32.gmra.mxu0 %v1994
        %v4294 = vpop.f32.mrf.mxu0
        %v4295 = vadd.f32 %v4254, %v4294
        %4296 = vmatmul.f32.gmra.mxu0 %v1995
        %v4297 = vpop.f32.mrf.mxu0
        %v4298 = vadd.f32 %v4257, %v4297
        %4299 = vmatmul.f32.gmra.mxu0 %v1996
        %v4300 = vpop.f32.mrf.mxu0
        %v4301 = vadd.f32 %v4260, %v4300
        %4302 = vmatmul.f32.gmra.mxu0 %v1997
        %v4303 = vpop.f32.mrf.mxu0
        %v4304 = vadd.f32 %v4263, %v4303
        %4305 = vmatmul.f32.gmra.mxu0 %v1998
        %v4306 = vpop.f32.mrf.mxu0
        %v4307 = vadd.f32 %v4266, %v4306
        %4308 = vdwg.mxu0
        %v4309 = vmul.f32 %v4286, %v3157
        %v4310 = vmul.f32 %v4289, %v3157
        %v4311 = vmul.f32 %v4292, %v3157
        %v4312 = vmul.f32 %v4295, %v3157
        %v4313 = vmul.f32 %v4298, %v3157
        %v4314 = vmul.f32 %v4301, %v3157
        %v4315 = vmul.f32 %v4304, %v3157
        %v4316 = vmul.f32 %v4307, %v3157
        %v4317 = vadd.f32 %v533, %v4309
        %v4318 = vadd.f32 %v536, %v4310
        %v4319 = vadd.f32 %v539, %v4311
        %v4320 = vadd.f32 %v542, %v4312
        %v4321 = vadd.f32 %v545, %v4313
        %v4322 = vadd.f32 %v548, %v4314
        %v4323 = vadd.f32 %v551, %v4315
        %v4324 = vadd.f32 %v554, %v4316
        %v4325 = vadd.f32 %v4317, %v3174
        %v4326 = vadd.f32 %v4318, %v3174
        %v4327 = vadd.f32 %v4319, %v3174
        %v4328 = vadd.f32 %v4320, %v3174
        %v4329 = vadd.f32 %v4321, %v3174
        %v4330 = vadd.f32 %v4322, %v3174
        %v4331 = vadd.f32 %v4323, %v3174
        %v4332 = vadd.f32 %v4324, %v3174
        %s4333 = scalar_lea.vmem %s359, 64 [#allocation8]
        %4334 = vst [vmem:[%s4333] sm:$0xff] %v4325
        %4335 = vst [vmem:[%s4333 + $0x8] sm:$0xff] %v4326
        %4336 = vst [vmem:[%s4333 + $0x10] sm:$0xff] %v4327
        %4337 = vst [vmem:[%s4333 + $0x18] sm:$0xff] %v4328
        %4338 = vst [vmem:[%s4333 + $0x20] sm:$0xff] %v4329
        %4339 = vst [vmem:[%s4333 + $0x28] sm:$0xff] %v4330
        %4340 = vst [vmem:[%s4333 + $0x30] sm:$0xff] %v4331
        %4341 = vst [vmem:[%s4333 + $0x38] sm:$0xff] %v4332
        %s4342 = sand.u32 %s207, 1
        %s4343 = scalar_lea.sflag [#allocation4], %s4342
        %s4344 = sand.u32 %s207, 1
        %s4345 = smul.addr %s4344, 128
        %s4346 = scalar_lea.vmem [#allocation8], %s4345
        // Predicated region
        $region65: #{tpu_custom_call.1} parent=51 // pred_check
          %p4347 = pneg %p217
        $region66: #{tpu_custom_call.1} parent=51 // pred_check_branch
          %4349 = sbr.rel (%p4347) target = $region68
        $region67: #{tpu_custom_call.1} parent=51 // pred_region
          %s4350 = smul.u32 2, %s26
          %4352 = vsyncadd %s4343, 0
          %s4353 = smul.addr %s4350, 8
          %s4354 = smul.addr %s4353, 8
          %s4355 = scalar_lea.hbm %s8, %s4354
          %s4356 = sshll.u32 %s4346, 4
          %s4357 = int_to_ptr.vmem [resolvable:$true] %s4356
          %s4358 = sshll.u32 %s4355, 4
          %s4359 = int_to_ptr.hbm [resolvable:$true] %s4358
          %4364 = dma.vmem_to_hbm [thread:$0]  %s4357, 2048, %s4359, %s4343, 128, 128, 8
        $region68: #{tpu_custom_call.1} parent=51 // pred_fallthru
          _
      $region52: #{tpu_custom_call.1} parent=5 // pred_fallthru
        _
      %p4365 = scmp.le.s32.totalorder 2, %s21
      // Predicated region
      $region69: #{tpu_custom_call.1} parent=5 // pred_check
        %p4366 = pneg %p4365
      $region70: #{tpu_custom_call.1} parent=5 // pred_check_branch
        %4368 = sbr.rel (%p4366) target = $region72
      $region71: #{tpu_custom_call.1} parent=5 // pred_region
        %s4369 = ssub.s32 %s21, 2
        // Predicated region
        $region73: #{tpu_custom_call.1} parent=71 // pred_check
          %p4370 = pneg %p223
        $region74: #{tpu_custom_call.1} parent=71 // pred_check_branch
          %4372 = sbr.rel (%p4370) target = $region76
        $region75: #{tpu_custom_call.1} parent=71 // pred_region
          %s4373 = sand.u32 %s208, 1
          %s4374 = scalar_lea.sflag [#allocation4], %s4373
          %s4375 = sand.u32 %s208, 1
          %s4376 = smul.addr %s4375, 128
          %s4377 = scalar_lea.vmem [#allocation8], %s4376
          %4379 = dma.done %s4374, 2048
        $region76: #{tpu_custom_call.1} parent=71 // pred_fallthru
          _
      $region72: #{tpu_custom_call.1} parent=5 // pred_fallthru
        _
    $region6: #{tpu_custom_call.1} parent=1 // loop_footer
      %s25 = sadd.s32 1, %s21
    $region7: #{tpu_custom_call.1} parent=1 // loop_footer_branch
      %20 = sbr.rel target = $region3
    $region8: #{tpu_custom_call.1} parent=1 // loop_exit
      _
    %4380 = vsyncpa [#allocation3], 1
    %s4381 = scalar_lea.sflag [#allocation3], 1
    %4382 = vsyncpa %s4381, 1
    %4383 = vsyncpa [#allocation6], 1
    %4384 = vsyncpa [#allocation4], 1
    %s4385 = scalar_lea.sflag [#allocation4], 1
    %4386 = vsyncpa %s4385, 1

</llo_original>
